<compile_context>
chip_gen: v5e
topology: v5e:2x2
jax: 0.10.0
libtpu: 0.0.40
codegen_flags: <defaults>
</compile_context>

<pallas_src>
import numpy as np
import jax
import jax.numpy as jnp
from jax import lax
from jax.experimental import pallas as pl
from jax.experimental.pallas import tpu as pltpu

LANE = 128


def _silu(x):
    return x * jax.nn.sigmoid(x)


def _pool1d_same(a, r, axis):
    """Stride-1 max pool, window 2r+1, 'same' output via -inf padding.

    Shift-and-max: one -inf padded slab, 2r+1 static slices, running maximum.
    Working set stays O(prod(a.shape)).
    """
    n = a.shape[axis]
    pad_shape = list(a.shape)
    pad_shape[axis] = r
    neg = jnp.full(tuple(pad_shape), -jnp.inf, a.dtype)
    ap = jnp.concatenate([neg, a, neg], axis=axis)        # n + 2r along `axis`
    out = lax.slice_in_dim(ap, 0, n, axis=axis)
    for d in range(1, 2 * r + 1):
        out = jnp.maximum(out, lax.slice_in_dim(ap, d, d + n, axis=axis))
    return out


def _pool5_same(a):
    """5x5 max pool, stride 1, padding 2 (== nn.MaxPool2d(5, 1, 2)) on (H, W, C)."""
    a = _pool1d_same(a, 2, axis=0)   # H axis: vreg-row shifts (cheap)
    a = _pool1d_same(a, 2, axis=1)   # W axis: sublane shifts (XLU slot)
    return a


def spp_kernel(x_ref, w1_ref, b1_ref, w2_ref, b2_ref, o_ref):
    H, W, Cin = x_ref.shape
    Ch = w1_ref.shape[1]
    Cout = o_ref.shape[-1]
    cdt = x_ref.dtype              # compute dtype for pooling / MXU inputs

    x = x_ref[...].reshape(H * W, Cin)

    # conv1 (1x1) + folded BN + SiLU (f32 accumulation, SiLU in f32).
    h32 = jnp.dot(x, w1_ref[...], preferred_element_type=jnp.float32) + b1_ref[...]
    h = _silu(h32).astype(cdt)                              # (H*W, Ch)

    # conv2 partial matmul for the identity branch (static Ref slice = view).
    y = jnp.dot(h, w2_ref[pl.ds(0, Ch), :], preferred_element_type=jnp.float32)

    # SPPF cascade: pool5 -> pool9 -> pool13; accumulate conv2 partials as each
    # pooled branch becomes available (keeps only h/p/y live simultaneously).
    p = h.reshape(H, W, Ch)
    for k in range(1, 4):
        p = _pool5_same(p)
        y = y + jnp.dot(p.reshape(H * W, Ch),
                        w2_ref[pl.ds(k * Ch, Ch), :],
                        preferred_element_type=jnp.float32)

    y = _silu(y + b2_ref[...])
    o_ref[...] = y.reshape(H, W, Cout).astype(o_ref.dtype)


def _round_up(n, m):
    return ((n + m - 1) // m) * m


def spp_bottleneck(x_nhwc, w1_eff, b1, w2_eff, b2):
    """SPPBottleneck forward (eval-mode BN folded into the 1x1 conv weights).

    x_nhwc: (B, H, W, Cin); w1_eff: (Cin, Ch); b1: (1, Ch);
    w2_eff: (4*Ch, Cout) with branch order [id, pool5, pool9, pool13]; b2: (1, Cout).
    For v6e/v7x production use, pass bf16 x / weights (accumulation stays f32).
    """
    B, H, W, Cin = x_nhwc.shape
    Ch = w1_eff.shape[1]
    Cout = w2_eff.shape[1]
    assert w2_eff.shape[0] == 4 * Ch

    # Lane-dense channel padding (no-op for real YOLOX channel counts >= 128).
    Cin_p, Ch_p, Cout_p = (_round_up(c, LANE) for c in (Cin, Ch, Cout))
    xp = jnp.pad(x_nhwc, ((0, 0), (0, 0), (0, 0), (0, Cin_p - Cin)))
    w1p = jnp.pad(w1_eff, ((0, Cin_p - Cin), (0, Ch_p - Ch)))
    b1p = jnp.pad(b1, ((0, 0), (0, Ch_p - Ch)))
    w2p = jnp.pad(w2_eff.reshape(4, Ch, Cout),
                  ((0, 0), (0, Ch_p - Ch), (0, Cout_p - Cout))).reshape(4 * Ch_p, Cout_p)
    b2p = jnp.pad(b2, ((0, 0), (0, Cout_p - Cout)))

    # Per-step VMEM estimate: double-buffered blocks/weights + live f32
    # intermediates (h, p, y, pooling slab).  Clamp to a range safe on all gens
    # (v7x physical VMEM is 64 MiB, so never request more than 48 MiB).
    isz = jnp.dtype(x_nhwc.dtype).itemsize
    blocks = H * W * (Cin_p + Cout_p) * isz
    weights = (Cin_p * Ch_p + 4 * Ch_p * Cout_p + Ch_p + Cout_p) * isz
    inter = 6 * H * W * Ch_p * 4
    vmem_limit = int(min(48 * 1024 * 1024,
                         max(16 * 1024 * 1024, 2 * (blocks + weights) + inter)))

    out_p = pl.pallas_call(
        spp_kernel,
        out_shape=jax.ShapeDtypeStruct((B, H, W, Cout_p), x_nhwc.dtype),
        grid_spec=pltpu.PrefetchScalarGridSpec(
            num_scalar_prefetch=0,
            grid=(B,),
            in_specs=[
                pl.BlockSpec((None, H, W, Cin_p), lambda b: (b, 0, 0, 0)),
                pl.BlockSpec((Cin_p, Ch_p), lambda b: (0, 0)),
                pl.BlockSpec((1, Ch_p), lambda b: (0, 0)),
                pl.BlockSpec((4 * Ch_p, Cout_p), lambda b: (0, 0)),
                pl.BlockSpec((1, Cout_p), lambda b: (0, 0)),
            ],
            out_specs=pl.BlockSpec((None, H, W, Cout_p), lambda b: (b, 0, 0, 0)),
        ),
        compiler_params=pltpu.CompilerParams(
            dimension_semantics=("parallel",),
            vmem_limit_bytes=vmem_limit,
        ),
    )(xp, w1p, b1p, w2p, b2p)

    # TODO(synk): for v7x at production spatial sizes, add an H-tile grid axis
    # with a 6-row halo (manual make_async_copy) to bound VMEM and feed both TCs.
    return out_p[..., :Cout]


def reference(x_nhwc, w1_eff, b1, w2_eff, b2):
    h = _silu(jnp.einsum('bhwc,cd->bhwd', x_nhwc, w1_eff) + b1)

    def mp(a, k):
        r = k // 2
        return lax.reduce_window(a, -jnp.inf, lax.max,
                                 (1, k, k, 1), (1, 1, 1, 1),
                                 ((0, 0), (r, r), (r, r), (0, 0)))

    cat = jnp.concatenate([h, mp(h, 5), mp(h, 9), mp(h, 13)], axis=-1)
    return _silu(jnp.einsum('bhwc,cd->bhwd', cat, w2_eff) + b2)


if __name__ == "__main__":
    B, Cin, H, W = 2, 4, 16, 16
    Cout = 4
    Ch = Cin // 2                  # hidden_channels
    C2in = Ch * 4                  # conv2 in-channels (concat of 4 branches)
    eps = 1e-3                     # BatchNorm eps of BaseConv

    key = jax.random.PRNGKey(0)
    ks = jax.random.split(key, 11)

    # conv1 / bn1 params (deterministic synthetic init)
    W1 = 0.5 * jax.random.normal(ks[0], (Cin, Ch), jnp.float32)
    g1 = 1.0 + 0.1 * jax.random.normal(ks[1], (Ch,), jnp.float32)
    be1 = 0.1 * jax.random.normal(ks[2], (Ch,), jnp.float32)
    mu1 = 0.1 * jax.random.normal(ks[3], (Ch,), jnp.float32)
    var1 = jnp.abs(jax.random.normal(ks[4], (Ch,), jnp.float32)) + 0.5

    # conv2 / bn2 params
    W2 = 0.5 * jax.random.normal(ks[5], (C2in, Cout), jnp.float32)
    g2 = 1.0 + 0.1 * jax.random.normal(ks[6], (Cout,), jnp.float32)
    be2 = 0.1 * jax.random.normal(ks[7], (Cout,), jnp.float32)
    mu2 = 0.1 * jax.random.normal(ks[8], (Cout,), jnp.float32)
    var2 = jnp.abs(jax.random.normal(ks[9], (Cout,), jnp.float32)) + 0.5

    # fold BN (eval mode) into 1x1 conv weight + bias
    s1 = g1 / jnp.sqrt(var1 + eps)
    w1_eff = W1 * s1[None, :]
    b1 = (be1 - mu1 * s1)[None, :]          # (1, Ch)
    s2 = g2 / jnp.sqrt(var2 + eps)
    w2_eff = W2 * s2[None, :]
    b2 = (be2 - mu2 * s2)[None, :]          # (1, Cout)

    # input, PyTorch-style NCHW -> NHWC for the kernel
    x_nchw = jax.random.normal(ks[10], (B, Cin, H, W), jnp.float32)
    x_nhwc = jnp.transpose(x_nchw, (0, 2, 3, 1))

    out_nhwc = spp_bottleneck(x_nhwc, w1_eff, b1, w2_eff, b2)
    out_nhwc = jax.block_until_ready(out_nhwc)
    out_nchw = jnp.transpose(out_nhwc, (0, 3, 1, 2))   # back to PyTorch layout

    ref_nhwc = reference(x_nhwc, w1_eff, b1, w2_eff, b2)
    if not np.allclose(np.asarray(out_nhwc), np.asarray(ref_nhwc),
                       atol=1e-2, rtol=1e-2):
        raise AssertionError("Pallas SPPBottleneck does not match reference")

    print("KERNEL_OK")
</pallas_src>

<mosaic_0001>
module attributes {stable_mosaic.version = 11 : i64} {
  func.func @spp_kernel(%arg0: i32, %arg1: memref<1x16x16x128xf32, #tpu.memory_space<vmem>>, %arg2: memref<128x128xf32, #tpu.memory_space<vmem>>, %arg3: memref<1x128xf32, #tpu.memory_space<vmem>>, %arg4: memref<512x128xf32, #tpu.memory_space<vmem>>, %arg5: memref<1x128xf32, #tpu.memory_space<vmem>>, %arg6: memref<1x16x16x128xf32, #tpu.memory_space<vmem>>) attributes {dimension_semantics = [#tpu.dimension_semantics<parallel>], iteration_bounds = array<i64: 2>, scalar_prefetch = 0 : i64, scratch_operands = 0 : i64, tpu.core_type = #tpu.core_type<tc>, window_params = [{transform_indices = @transform_0, window_bounds = array<i64: 1, 16, 16, 128>}, {pipeline_mode = #tpu.pipeline_mode<synchronous>, transform_indices = @transform_1, window_bounds = array<i64: 128, 128>}, {pipeline_mode = #tpu.pipeline_mode<synchronous>, transform_indices = @transform_2, window_bounds = array<i64: 1, 128>}, {pipeline_mode = #tpu.pipeline_mode<synchronous>, transform_indices = @transform_3, window_bounds = array<i64: 512, 128>}, {pipeline_mode = #tpu.pipeline_mode<synchronous>, transform_indices = @transform_4, window_bounds = array<i64: 1, 128>}, {transform_indices = @transform_5, window_bounds = array<i64: 1, 16, 16, 128>}]} {
    %c0 = arith.constant 0 : index
    %c0_0 = arith.constant 0 : index
    %c0_1 = arith.constant 0 : index
    %c0_2 = arith.constant 0 : index
    %0 = vector.load %arg1[%c0, %c0_0, %c0_1, %c0_2] : memref<1x16x16x128xf32, #tpu.memory_space<vmem>>, vector<1x16x16x128xf32>
    %1 = vector.shape_cast %0 : vector<1x16x16x128xf32> to vector<16x16x128xf32>
    %2 = vector.shape_cast %1 : vector<16x16x128xf32> to vector<256x128xf32>
    %c0_3 = arith.constant 0 : index
    %c0_4 = arith.constant 0 : index
    %3 = vector.load %arg2[%c0_3, %c0_4] : memref<128x128xf32, #tpu.memory_space<vmem>>, vector<128x128xf32>
    %cst = arith.constant dense<0.000000e+00> : vector<256x128xf32>
    %4 = tpu.matmul %2, %3, %cst {dimension_numbers = #tpu.dot_dimension_numbers<[1], [0], [0], [1], [0, 0, 1, 1], [], []>} : vector<256x128xf32>, vector<128x128xf32>, vector<256x128xf32> -> vector<256x128xf32>
    %c0_5 = arith.constant 0 : index
    %c0_6 = arith.constant 0 : index
    %5 = vector.load %arg3[%c0_5, %c0_6] : memref<1x128xf32, #tpu.memory_space<vmem>>, vector<1x128xf32>
    %6 = vector.broadcast %5 : vector<1x128xf32> to vector<256x128xf32>
    %7 = arith.addf %4, %6 : vector<256x128xf32>
    %8 = arith.negf %7 : vector<256x128xf32>
    %9 = math.exp %8 : vector<256x128xf32>
    %cst_7 = arith.constant 1.000000e+00 : f32
    %10 = vector.broadcast %cst_7 : f32 to vector<256x128xf32>
    %11 = arith.addf %10, %9 : vector<256x128xf32>
    %12 = arith.divf %10, %11 : vector<256x128xf32>
    %13 = arith.mulf %7, %12 : vector<256x128xf32>
    %c0_8 = arith.constant 0 : index
    %c0_9 = arith.constant 0 : index
    %14 = vector.load %arg4[%c0_8, %c0_9] : memref<512x128xf32, #tpu.memory_space<vmem>>, vector<128x128xf32>
    %cst_10 = arith.constant dense<0.000000e+00> : vector<256x128xf32>
    %15 = tpu.matmul %13, %14, %cst_10 {dimension_numbers = #tpu.dot_dimension_numbers<[1], [0], [0], [1], [0, 0, 1, 1], [], []>} : vector<256x128xf32>, vector<128x128xf32>, vector<256x128xf32> -> vector<256x128xf32>
    %16 = vector.shape_cast %13 : vector<256x128xf32> to vector<16x16x128xf32>
    %cst_11 = arith.constant 0xFF800000 : f32
    %17 = vector.broadcast %cst_11 : f32 to vector<2x16x128xf32>
    %18 = tpu.concatenate %17, %16, %17 in 0 : vector<2x16x128xf32>, vector<16x16x128xf32>, vector<2x16x128xf32> -> vector<20x16x128xf32>
    %19 = vector.extract_strided_slice %18 {offsets = [0, 0, 0], sizes = [16, 16, 128], strides = [1, 1, 1]} : vector<20x16x128xf32> to vector<16x16x128xf32>
    %20 = vector.extract_strided_slice %18 {offsets = [1, 0, 0], sizes = [16, 16, 128], strides = [1, 1, 1]} : vector<20x16x128xf32> to vector<16x16x128xf32>
    %21 = arith.maximumf %19, %20 : vector<16x16x128xf32>
    %22 = vector.extract_strided_slice %18 {offsets = [2, 0, 0], sizes = [16, 16, 128], strides = [1, 1, 1]} : vector<20x16x128xf32> to vector<16x16x128xf32>
    %23 = arith.maximumf %21, %22 : vector<16x16x128xf32>
    %24 = vector.extract_strided_slice %18 {offsets = [3, 0, 0], sizes = [16, 16, 128], strides = [1, 1, 1]} : vector<20x16x128xf32> to vector<16x16x128xf32>
    %25 = arith.maximumf %23, %24 : vector<16x16x128xf32>
    %26 = vector.extract_strided_slice %18 {offsets = [4, 0, 0], sizes = [16, 16, 128], strides = [1, 1, 1]} : vector<20x16x128xf32> to vector<16x16x128xf32>
    %27 = arith.maximumf %25, %26 : vector<16x16x128xf32>
    %cst_12 = arith.constant 0xFF800000 : f32
    %28 = vector.broadcast %cst_12 : f32 to vector<16x2x128xf32>
    %29 = tpu.concatenate %28, %27, %28 in 1 : vector<16x2x128xf32>, vector<16x16x128xf32>, vector<16x2x128xf32> -> vector<16x20x128xf32>
    %30 = vector.extract_strided_slice %29 {offsets = [0, 0, 0], sizes = [16, 16, 128], strides = [1, 1, 1]} : vector<16x20x128xf32> to vector<16x16x128xf32>
    %31 = vector.extract_strided_slice %29 {offsets = [0, 1, 0], sizes = [16, 16, 128], strides = [1, 1, 1]} : vector<16x20x128xf32> to vector<16x16x128xf32>
    %32 = arith.maximumf %30, %31 : vector<16x16x128xf32>
    %33 = vector.extract_strided_slice %29 {offsets = [0, 2, 0], sizes = [16, 16, 128], strides = [1, 1, 1]} : vector<16x20x128xf32> to vector<16x16x128xf32>
    %34 = arith.maximumf %32, %33 : vector<16x16x128xf32>
    %35 = vector.extract_strided_slice %29 {offsets = [0, 3, 0], sizes = [16, 16, 128], strides = [1, 1, 1]} : vector<16x20x128xf32> to vector<16x16x128xf32>
    %36 = arith.maximumf %34, %35 : vector<16x16x128xf32>
    %37 = vector.extract_strided_slice %29 {offsets = [0, 4, 0], sizes = [16, 16, 128], strides = [1, 1, 1]} : vector<16x20x128xf32> to vector<16x16x128xf32>
    %38 = arith.maximumf %36, %37 : vector<16x16x128xf32>
    %39 = vector.shape_cast %38 : vector<16x16x128xf32> to vector<256x128xf32>
    %c128 = arith.constant 128 : index
    %c0_13 = arith.constant 0 : index
    %40 = vector.load %arg4[%c128, %c0_13] : memref<512x128xf32, #tpu.memory_space<vmem>>, vector<128x128xf32>
    %cst_14 = arith.constant dense<0.000000e+00> : vector<256x128xf32>
    %41 = tpu.matmul %39, %40, %cst_14 {dimension_numbers = #tpu.dot_dimension_numbers<[1], [0], [0], [1], [0, 0, 1, 1], [], []>} : vector<256x128xf32>, vector<128x128xf32>, vector<256x128xf32> -> vector<256x128xf32>
    %42 = arith.addf %15, %41 : vector<256x128xf32>
    %cst_15 = arith.constant 0xFF800000 : f32
    %43 = vector.broadcast %cst_15 : f32 to vector<2x16x128xf32>
    %44 = tpu.concatenate %43, %38, %43 in 0 : vector<2x16x128xf32>, vector<16x16x128xf32>, vector<2x16x128xf32> -> vector<20x16x128xf32>
    %45 = vector.extract_strided_slice %44 {offsets = [0, 0, 0], sizes = [16, 16, 128], strides = [1, 1, 1]} : vector<20x16x128xf32> to vector<16x16x128xf32>
    %46 = vector.extract_strided_slice %44 {offsets = [1, 0, 0], sizes = [16, 16, 128], strides = [1, 1, 1]} : vector<20x16x128xf32> to vector<16x16x128xf32>
    %47 = arith.maximumf %45, %46 : vector<16x16x128xf32>
    %48 = vector.extract_strided_slice %44 {offsets = [2, 0, 0], sizes = [16, 16, 128], strides = [1, 1, 1]} : vector<20x16x128xf32> to vector<16x16x128xf32>
    %49 = arith.maximumf %47, %48 : vector<16x16x128xf32>
    %50 = vector.extract_strided_slice %44 {offsets = [3, 0, 0], sizes = [16, 16, 128], strides = [1, 1, 1]} : vector<20x16x128xf32> to vector<16x16x128xf32>
    %51 = arith.maximumf %49, %50 : vector<16x16x128xf32>
    %52 = vector.extract_strided_slice %44 {offsets = [4, 0, 0], sizes = [16, 16, 128], strides = [1, 1, 1]} : vector<20x16x128xf32> to vector<16x16x128xf32>
    %53 = arith.maximumf %51, %52 : vector<16x16x128xf32>
    %cst_16 = arith.constant 0xFF800000 : f32
    %54 = vector.broadcast %cst_16 : f32 to vector<16x2x128xf32>
    %55 = tpu.concatenate %54, %53, %54 in 1 : vector<16x2x128xf32>, vector<16x16x128xf32>, vector<16x2x128xf32> -> vector<16x20x128xf32>
    %56 = vector.extract_strided_slice %55 {offsets = [0, 0, 0], sizes = [16, 16, 128], strides = [1, 1, 1]} : vector<16x20x128xf32> to vector<16x16x128xf32>
    %57 = vector.extract_strided_slice %55 {offsets = [0, 1, 0], sizes = [16, 16, 128], strides = [1, 1, 1]} : vector<16x20x128xf32> to vector<16x16x128xf32>
    %58 = arith.maximumf %56, %57 : vector<16x16x128xf32>
    %59 = vector.extract_strided_slice %55 {offsets = [0, 2, 0], sizes = [16, 16, 128], strides = [1, 1, 1]} : vector<16x20x128xf32> to vector<16x16x128xf32>
    %60 = arith.maximumf %58, %59 : vector<16x16x128xf32>
    %61 = vector.extract_strided_slice %55 {offsets = [0, 3, 0], sizes = [16, 16, 128], strides = [1, 1, 1]} : vector<16x20x128xf32> to vector<16x16x128xf32>
    %62 = arith.maximumf %60, %61 : vector<16x16x128xf32>
    %63 = vector.extract_strided_slice %55 {offsets = [0, 4, 0], sizes = [16, 16, 128], strides = [1, 1, 1]} : vector<16x20x128xf32> to vector<16x16x128xf32>
    %64 = arith.maximumf %62, %63 : vector<16x16x128xf32>
    %65 = vector.shape_cast %64 : vector<16x16x128xf32> to vector<256x128xf32>
    %c256 = arith.constant 256 : index
    %c0_17 = arith.constant 0 : index
    %66 = vector.load %arg4[%c256, %c0_17] : memref<512x128xf32, #tpu.memory_space<vmem>>, vector<128x128xf32>
    %cst_18 = arith.constant dense<0.000000e+00> : vector<256x128xf32>
    %67 = tpu.matmul %65, %66, %cst_18 {dimension_numbers = #tpu.dot_dimension_numbers<[1], [0], [0], [1], [0, 0, 1, 1], [], []>} : vector<256x128xf32>, vector<128x128xf32>, vector<256x128xf32> -> vector<256x128xf32>
    %68 = arith.addf %42, %67 : vector<256x128xf32>
    %cst_19 = arith.constant 0xFF800000 : f32
    %69 = vector.broadcast %cst_19 : f32 to vector<2x16x128xf32>
    %70 = tpu.concatenate %69, %64, %69 in 0 : vector<2x16x128xf32>, vector<16x16x128xf32>, vector<2x16x128xf32> -> vector<20x16x128xf32>
    %71 = vector.extract_strided_slice %70 {offsets = [0, 0, 0], sizes = [16, 16, 128], strides = [1, 1, 1]} : vector<20x16x128xf32> to vector<16x16x128xf32>
    %72 = vector.extract_strided_slice %70 {offsets = [1, 0, 0], sizes = [16, 16, 128], strides = [1, 1, 1]} : vector<20x16x128xf32> to vector<16x16x128xf32>
    %73 = arith.maximumf %71, %72 : vector<16x16x128xf32>
    %74 = vector.extract_strided_slice %70 {offsets = [2, 0, 0], sizes = [16, 16, 128], strides = [1, 1, 1]} : vector<20x16x128xf32> to vector<16x16x128xf32>
    %75 = arith.maximumf %73, %74 : vector<16x16x128xf32>
    %76 = vector.extract_strided_slice %70 {offsets = [3, 0, 0], sizes = [16, 16, 128], strides = [1, 1, 1]} : vector<20x16x128xf32> to vector<16x16x128xf32>
    %77 = arith.maximumf %75, %76 : vector<16x16x128xf32>
    %78 = vector.extract_strided_slice %70 {offsets = [4, 0, 0], sizes = [16, 16, 128], strides = [1, 1, 1]} : vector<20x16x128xf32> to vector<16x16x128xf32>
    %79 = arith.maximumf %77, %78 : vector<16x16x128xf32>
    %cst_20 = arith.constant 0xFF800000 : f32
    %80 = vector.broadcast %cst_20 : f32 to vector<16x2x128xf32>
    %81 = tpu.concatenate %80, %79, %80 in 1 : vector<16x2x128xf32>, vector<16x16x128xf32>, vector<16x2x128xf32> -> vector<16x20x128xf32>
    %82 = vector.extract_strided_slice %81 {offsets = [0, 0, 0], sizes = [16, 16, 128], strides = [1, 1, 1]} : vector<16x20x128xf32> to vector<16x16x128xf32>
    %83 = vector.extract_strided_slice %81 {offsets = [0, 1, 0], sizes = [16, 16, 128], strides = [1, 1, 1]} : vector<16x20x128xf32> to vector<16x16x128xf32>
    %84 = arith.maximumf %82, %83 : vector<16x16x128xf32>
    %85 = vector.extract_strided_slice %81 {offsets = [0, 2, 0], sizes = [16, 16, 128], strides = [1, 1, 1]} : vector<16x20x128xf32> to vector<16x16x128xf32>
    %86 = arith.maximumf %84, %85 : vector<16x16x128xf32>
    %87 = vector.extract_strided_slice %81 {offsets = [0, 3, 0], sizes = [16, 16, 128], strides = [1, 1, 1]} : vector<16x20x128xf32> to vector<16x16x128xf32>
    %88 = arith.maximumf %86, %87 : vector<16x16x128xf32>
    %89 = vector.extract_strided_slice %81 {offsets = [0, 4, 0], sizes = [16, 16, 128], strides = [1, 1, 1]} : vector<16x20x128xf32> to vector<16x16x128xf32>
    %90 = arith.maximumf %88, %89 : vector<16x16x128xf32>
    %91 = vector.shape_cast %90 : vector<16x16x128xf32> to vector<256x128xf32>
    %c384 = arith.constant 384 : index
    %c0_21 = arith.constant 0 : index
    %92 = vector.load %arg4[%c384, %c0_21] : memref<512x128xf32, #tpu.memory_space<vmem>>, vector<128x128xf32>
    %cst_22 = arith.constant dense<0.000000e+00> : vector<256x128xf32>
    %93 = tpu.matmul %91, %92, %cst_22 {dimension_numbers = #tpu.dot_dimension_numbers<[1], [0], [0], [1], [0, 0, 1, 1], [], []>} : vector<256x128xf32>, vector<128x128xf32>, vector<256x128xf32> -> vector<256x128xf32>
    %94 = arith.addf %68, %93 : vector<256x128xf32>
    %c0_23 = arith.constant 0 : index
    %c0_24 = arith.constant 0 : index
    %95 = vector.load %arg5[%c0_23, %c0_24] : memref<1x128xf32, #tpu.memory_space<vmem>>, vector<1x128xf32>
    %96 = vector.broadcast %95 : vector<1x128xf32> to vector<256x128xf32>
    %97 = arith.addf %94, %96 : vector<256x128xf32>
    %98 = arith.negf %97 : vector<256x128xf32>
    %99 = math.exp %98 : vector<256x128xf32>
    %cst_25 = arith.constant 1.000000e+00 : f32
    %100 = vector.broadcast %cst_25 : f32 to vector<256x128xf32>
    %101 = arith.addf %100, %99 : vector<256x128xf32>
    %102 = arith.divf %100, %101 : vector<256x128xf32>
    %103 = arith.mulf %97, %102 : vector<256x128xf32>
    %104 = vector.shape_cast %103 : vector<256x128xf32> to vector<16x16x128xf32>
    %c0_26 = arith.constant 0 : index
    %c0_27 = arith.constant 0 : index
    %c0_28 = arith.constant 0 : index
    %c0_29 = arith.constant 0 : index
    %105 = vector.load %arg6[%c0_26, %c0_27, %c0_28, %c0_29] : memref<1x16x16x128xf32, #tpu.memory_space<vmem>>, vector<1x16x16x128xf32>
    %106 = vector.shape_cast %105 : vector<1x16x16x128xf32> to vector<16x16x128xf32>
    %107 = vector.shape_cast %104 : vector<16x16x128xf32> to vector<1x16x16x128xf32>
    tpu.vector_store %arg6[%c0_26, %c0_27, %c0_28, %c0_29], %107 {strides = array<i32>} : memref<1x16x16x128xf32, #tpu.memory_space<vmem>>, vector<1x16x16x128xf32>,
    return
  }
  func.func @transform_0(%arg0: i32) -> (i32, i32, i32, i32) {
    %c0_i32 = arith.constant 0 : i32
    %c0_i32_0 = arith.constant 0 : i32
    %c0_i32_1 = arith.constant 0 : i32
    %c0_i32_2 = arith.constant 0 : i32
    return %arg0, %c0_i32, %c0_i32_0, %c0_i32_1 : i32, i32, i32, i32
  }
  func.func @transform_1(%arg0: i32) -> (i32, i32) {
    %c0_i32 = arith.constant 0 : i32
    %c0_i32_0 = arith.constant 0 : i32
    %c0_i32_1 = arith.constant 0 : i32
    return %c0_i32, %c0_i32_0 : i32, i32
  }
  func.func @transform_2(%arg0: i32) -> (i32, i32) {
    %c0_i32 = arith.constant 0 : i32
    %c0_i32_0 = arith.constant 0 : i32
    %c0_i32_1 = arith.constant 0 : i32
    return %c0_i32, %c0_i32_0 : i32, i32
  }
  func.func @transform_3(%arg0: i32) -> (i32, i32) {
    %c0_i32 = arith.constant 0 : i32
    %c0_i32_0 = arith.constant 0 : i32
    %c0_i32_1 = arith.constant 0 : i32
    return %c0_i32, %c0_i32_0 : i32, i32
  }
  func.func @transform_4(%arg0: i32) -> (i32, i32) {
    %c0_i32 = arith.constant 0 : i32
    %c0_i32_0 = arith.constant 0 : i32
    %c0_i32_1 = arith.constant 0 : i32
    return %c0_i32, %c0_i32_0 : i32, i32
  }
  func.func @transform_5(%arg0: i32) -> (i32, i32, i32, i32) {
    %c0_i32 = arith.constant 0 : i32
    %c0_i32_0 = arith.constant 0 : i32
    %c0_i32_1 = arith.constant 0 : i32
    %c0_i32_2 = arith.constant 0 : i32
    return %arg0, %c0_i32, %c0_i32_0, %c0_i32_1 : i32, i32, i32, i32
  }
}

</mosaic_0001>

<llo_original>
// kernel: tpu_custom_call.1
$region0: #{tpu_custom_call.1}
  #allocation0 [shape = 'u32[]', space=smem, size = 0x4, offset = 0x4, fixed_abs, tag = 'smem constant byte address 0x4 - core index']
  #allocation1 [shape = 'u32[72,128]{1,0:T(1,128)}', space=vmem, size = 0x9000, scoped, tag = 'internal scratch']
  %s0 = inlined_call_operand.hbm [shape: f32[2,16,16,128], index: 0, kind: input, shape index: {}]
  %s1 = inlined_call_operand.hbm [shape: f32[128,128], index: 1, kind: input, shape index: {}]
  %s2 = inlined_call_operand.vmem [shape: f32[1,128], index: 2, kind: input, shape index: {}]
  %s3 = inlined_call_operand.hbm [shape: f32[512,128], index: 3, kind: input, shape index: {}]
  %s4 = inlined_call_operand.vmem [shape: f32[1,128], index: 4, kind: input, shape index: {}]
  %s5 = inlined_call_operand.hbm [shape: f32[2,16,16,128], index: 5, kind: output, shape index: {}]
  %s6 = sld [smem:[#allocation0]]
  $region65: #{tpu_custom_call.1} parent=0
    _
  %s8 = ssub.s32 1, %s6
  %s9 = scalar_select 0, %s8, %s6
  $region1: #{tpu_custom_call.1} parent=0
    #allocation2 [shape = 'u8[262144]{0}', space=vmem, size = 0x40000, scoped, tag = 'input window, operand 0']
    #allocation3 [shape = 's32[2]{0}', space=sflag, size = 0x8, scoped, tag = 'scoped memory for tpu_custom_call.1']
    #allocation4 [shape = 's32[2]{0}', space=sflag, size = 0x8, scoped, tag = 'scoped memory for tpu_custom_call.1']
    #allocation5 [shape = 'u8[65536]{0}', space=vmem, size = 0x10000, scoped, tag = 'input window, operand 1, single buffered']
    #allocation6 [shape = 's32[1]{0}', space=sflag, size = 0x4, scoped, tag = 'scoped memory for tpu_custom_call.1']
    #allocation7 [shape = 'u8[262144]{0}', space=vmem, size = 0x40000, scoped, tag = 'input window, operand 3, single buffered']
    #allocation8 [shape = 'u8[262144]{0}', space=vmem, size = 0x40000, scoped, tag = 'output window, operand 0']
    %10 = vsyncpa [#allocation3], 0
    %s11 = scalar_lea.sflag [#allocation3], 1
    %12 = vsyncpa %s11, 0
    %13 = vsyncpa [#allocation6], 0
    %14 = vsyncpa [#allocation4], 0
    %s15 = scalar_lea.sflag [#allocation4], 1
    %16 = vsyncpa %s15, 0
    loop: start=0, step=1, limit=4
    $region2: #{tpu_custom_call.1} parent=1 // loop_pre_header
      _
    $region3: #{tpu_custom_call.1} parent=1 // loop_header
      %s18 = sphi 0, %s22
      %p19 = scmp.ge.s32.totalorder %s18, 4
      %s28 = sphi 0, %s30
      %s31 = sphi 0, %s28
      %s32 = sphi 0, %s31
      %s48 = sphi 0, %s32
      %s52 = sphi 0, %s52
      %s54 = sphi 0, %s52
      %s55 = sphi 0, %s54
      %s69 = sphi 0, %s55
      %s73 = sphi 0, %s73
      %s75 = sphi 0, %s73
      %s76 = sphi 0, %s75
      %s90 = sphi 0, %s76
      %s94 = sphi 0, %s94
      %s96 = sphi 0, %s94
      %s97 = sphi 0, %s96
      %s111 = sphi 0, %s97
      %s115 = sphi 0, %s115
      %s117 = sphi 0, %s115
      %s118 = sphi 0, %s117
      %s132 = sphi 0, %s118
      %s138 = sphi 0, %s140
      %s141 = sphi 0, %s138
      %s142 = sphi 0, %s141
      %s158 = sphi 0, %s142
    $region4: #{tpu_custom_call.1} parent=1 // loop_header_branch
      %21 = sbr.rel (%p19) target = $region8
    $region5: #{tpu_custom_call.1} parent=1 // loop_body
      %s23 = ssub.s32 %s18, 1
      %s24 = ssub.s32 %s18, 2
      %s25 = sadd.s32 %s18, 1
      %s26 = ssub.s32 %s18, %s25
      %p27 = scmp.eq.s32.totalorder %s26, 0
      %s29 = sadd.s32 %s28, 1
      %s30 = scalar_select %p27, %s28, %s29
      %p33 = pneg %p27
      %p34 = scmp.eq.s32.totalorder %s18, 1
      %p35 = por %p33, %p34
      %p36 = scmp.ne.s32.totalorder %s28, %s31
      %p37 = scmp.eq.s32.totalorder %s18, 0
      %p38 = por %p36, %p37
      %p39 = scmp.ne.s32.totalorder %s28, %s31
      %p40 = scmp.eq.s32.totalorder %s23, 1
      %p41 = por %p39, %p40
      %p42 = scmp.ne.s32.totalorder %s31, %s32
      %p43 = scmp.eq.s32.totalorder %s23, 0
      %p44 = por %p42, %p43
      %p45 = scmp.ne.s32.totalorder %s31, %s32
      %p46 = scmp.eq.s32.totalorder %s24, 1
      %p47 = por %p45, %p46
      %p49 = scmp.ne.s32.totalorder %s32, %s48
      %p50 = scmp.eq.s32.totalorder %s24, 0
      %p51 = por %p49, %p50
      %s53 = sadd.s32 %s52, 1
      %p56 = scmp.eq.s32.totalorder %s18, 1
      %p57 = scmp.ne.s32.totalorder %s52, %s54
      %p58 = scmp.eq.s32.totalorder %s18, 0
      %p59 = por %p57, %p58
      %p60 = scmp.ne.s32.totalorder %s52, %s54
      %p61 = scmp.eq.s32.totalorder %s23, 1
      %p62 = por %p60, %p61
      %p63 = scmp.ne.s32.totalorder %s54, %s55
      %p64 = scmp.eq.s32.totalorder %s23, 0
      %p65 = por %p63, %p64
      %p66 = scmp.ne.s32.totalorder %s54, %s55
      %p67 = scmp.eq.s32.totalorder %s24, 1
      %p68 = por %p66, %p67
      %p70 = scmp.ne.s32.totalorder %s55, %s69
      %p71 = scmp.eq.s32.totalorder %s24, 0
      %p72 = por %p70, %p71
      %s74 = sadd.s32 %s73, 1
      %p77 = scmp.eq.s32.totalorder %s18, 1
      %p78 = scmp.ne.s32.totalorder %s73, %s75
      %p79 = scmp.eq.s32.totalorder %s18, 0
      %p80 = por %p78, %p79
      %p81 = scmp.ne.s32.totalorder %s73, %s75
      %p82 = scmp.eq.s32.totalorder %s23, 1
      %p83 = por %p81, %p82
      %p84 = scmp.ne.s32.totalorder %s75, %s76
      %p85 = scmp.eq.s32.totalorder %s23, 0
      %p86 = por %p84, %p85
      %p87 = scmp.ne.s32.totalorder %s75, %s76
      %p88 = scmp.eq.s32.totalorder %s24, 1
      %p89 = por %p87, %p88
      %p91 = scmp.ne.s32.totalorder %s76, %s90
      %p92 = scmp.eq.s32.totalorder %s24, 0
      %p93 = por %p91, %p92
      %s95 = sadd.s32 %s94, 1
      %p98 = scmp.eq.s32.totalorder %s18, 1
      %p99 = scmp.ne.s32.totalorder %s94, %s96
      %p100 = scmp.eq.s32.totalorder %s18, 0
      %p101 = por %p99, %p100
      %p102 = scmp.ne.s32.totalorder %s94, %s96
      %p103 = scmp.eq.s32.totalorder %s23, 1
      %p104 = por %p102, %p103
      %p105 = scmp.ne.s32.totalorder %s96, %s97
      %p106 = scmp.eq.s32.totalorder %s23, 0
      %p107 = por %p105, %p106
      %p108 = scmp.ne.s32.totalorder %s96, %s97
      %p109 = scmp.eq.s32.totalorder %s24, 1
      %p110 = por %p108, %p109
      %p112 = scmp.ne.s32.totalorder %s97, %s111
      %p113 = scmp.eq.s32.totalorder %s24, 0
      %p114 = por %p112, %p113
      %s116 = sadd.s32 %s115, 1
      %p119 = scmp.eq.s32.totalorder %s18, 1
      %p120 = scmp.ne.s32.totalorder %s115, %s117
      %p121 = scmp.eq.s32.totalorder %s18, 0
      %p122 = por %p120, %p121
      %p123 = scmp.ne.s32.totalorder %s115, %s117
      %p124 = scmp.eq.s32.totalorder %s23, 1
      %p125 = por %p123, %p124
      %p126 = scmp.ne.s32.totalorder %s117, %s118
      %p127 = scmp.eq.s32.totalorder %s23, 0
      %p128 = por %p126, %p127
      %p129 = scmp.ne.s32.totalorder %s117, %s118
      %p130 = scmp.eq.s32.totalorder %s24, 1
      %p131 = por %p129, %p130
      %p133 = scmp.ne.s32.totalorder %s118, %s132
      %p134 = scmp.eq.s32.totalorder %s24, 0
      %p135 = por %p133, %p134
      %s136 = ssub.s32 %s18, %s25
      %p137 = scmp.eq.s32.totalorder %s136, 0
      %s139 = sadd.s32 %s138, 1
      %s140 = scalar_select %p137, %s138, %s139
      %p143 = pneg %p137
      %p144 = scmp.eq.s32.totalorder %s18, 1
      %p145 = por %p143, %p144
      %p146 = scmp.ne.s32.totalorder %s138, %s141
      %p147 = scmp.eq.s32.totalorder %s18, 0
      %p148 = por %p146, %p147
      %p149 = scmp.ne.s32.totalorder %s138, %s141
      %p150 = scmp.eq.s32.totalorder %s23, 1
      %p151 = por %p149, %p150
      %p152 = scmp.ne.s32.totalorder %s141, %s142
      %p153 = scmp.eq.s32.totalorder %s23, 0
      %p154 = por %p152, %p153
      %p155 = scmp.ne.s32.totalorder %s141, %s142
      %p156 = scmp.eq.s32.totalorder %s24, 1
      %p157 = por %p155, %p156
      %p159 = scmp.ne.s32.totalorder %s142, %s158
      %p160 = scmp.eq.s32.totalorder %s24, 0
      %p161 = por %p159, %p160
      %p162 = scmp.le.s32.totalorder 1, %s18
      %p163 = scmp.lt.s32.totalorder %s18, 3
      %p164 = pnand %p162, %p163
      %p165 = pneg %p164
      // Predicated region
      $region9: #{tpu_custom_call.1} parent=5 // pred_check
        _
      $region10: #{tpu_custom_call.1} parent=5 // pred_check_branch
        %167 = sbr.rel (%p164) target = $region12
      $region11: #{tpu_custom_call.1} parent=5 // pred_region
        %s168 = ssub.s32 %s18, 1
        // Predicated region
        $region13: #{tpu_custom_call.1} parent=11 // pred_check
          %p169 = pneg %p65
        $region14: #{tpu_custom_call.1} parent=11 // pred_check_branch
          %171 = sbr.rel (%p169) target = $region16
        $region15: #{tpu_custom_call.1} parent=11 // pred_region
          %173 = vsyncadd [#allocation6], 0
          %s174 = sshll.u32 %s1, 4
          %s175 = int_to_ptr.hbm [resolvable:$true] %s174
          %s176 = sshll.u32 [#allocation5], 4
          %s177 = int_to_ptr.vmem [resolvable:$true] %s176
          %182 = dma.hbm_to_vmem [thread:$0]  %s175, 2048, %s177, [#allocation6], 128, 128, 8
        $region16: #{tpu_custom_call.1} parent=11 // pred_fallthru
          _
        // Predicated region
        $region17: #{tpu_custom_call.1} parent=11 // pred_check
          %p183 = pneg %p86
        $region18: #{tpu_custom_call.1} parent=11 // pred_check_branch
          %185 = sbr.rel (%p183) target = $region20
        $region19: #{tpu_custom_call.1} parent=11 // pred_region
          _
        $region20: #{tpu_custom_call.1} parent=11 // pred_fallthru
          _
        // Predicated region
        $region21: #{tpu_custom_call.1} parent=11 // pred_check
          %p186 = pneg %p107
        $region22: #{tpu_custom_call.1} parent=11 // pred_check_branch
          %188 = sbr.rel (%p186) target = $region24
        $region23: #{tpu_custom_call.1} parent=11 // pred_region
          %190 = vsyncadd [#allocation6], 0
          %s191 = sshll.u32 %s3, 4
          %s192 = int_to_ptr.hbm [resolvable:$true] %s191
          %s193 = sshll.u32 [#allocation7], 4
          %s194 = int_to_ptr.vmem [resolvable:$true] %s193
          %199 = dma.hbm_to_vmem [thread:$0]  %s192, 8192, %s194, [#allocation6], 128, 128, 8
        $region24: #{tpu_custom_call.1} parent=11 // pred_fallthru
          _
        // Predicated region
        $region25: #{tpu_custom_call.1} parent=11 // pred_check
          %p200 = pneg %p128
        $region26: #{tpu_custom_call.1} parent=11 // pred_check_branch
          %202 = sbr.rel (%p200) target = $region28
        $region27: #{tpu_custom_call.1} parent=11 // pred_region
          _
        $region28: #{tpu_custom_call.1} parent=11 // pred_fallthru
          _
      $region12: #{tpu_custom_call.1} parent=5 // pred_fallthru
        _
      %p203 = scmp.lt.s32.totalorder %s18, 2
      // Predicated region
      $region29: #{tpu_custom_call.1} parent=5 // pred_check
        %p204 = pneg %p203
      $region30: #{tpu_custom_call.1} parent=5 // pred_check_branch
        %206 = sbr.rel (%p204) target = $region32
      $region31: #{tpu_custom_call.1} parent=5 // pred_region
        // Predicated region
        $region33: #{tpu_custom_call.1} parent=31 // pred_check
          %p207 = pneg %p38
        $region34: #{tpu_custom_call.1} parent=31 // pred_check_branch
          %209 = sbr.rel (%p207) target = $region36
        $region35: #{tpu_custom_call.1} parent=31 // pred_region
          %s210 = sand.u32 %s28, 1
          %s211 = scalar_lea.sflag [#allocation3], %s210
          %s212 = sand.u32 %s28, 1
          %s213 = smul.addr %s212, 256
          %s214 = scalar_lea.vmem [#allocation2], %s213
          %216 = vsyncadd %s211, 0
          %s217 = smul.addr %s18, 32
          %s218 = smul.addr %s217, 8
          %s219 = scalar_lea.hbm %s0, %s218
          %s220 = sshll.u32 %s219, 4
          %s221 = int_to_ptr.hbm [resolvable:$true] %s220
          %s222 = sshll.u32 %s214, 4
          %s223 = int_to_ptr.vmem [resolvable:$true] %s222
          %228 = dma.hbm_to_vmem [thread:$0]  %s221, 4096, %s223, %s211, 128, 128, 8
        $region36: #{tpu_custom_call.1} parent=31 // pred_fallthru
          _
      $region32: #{tpu_custom_call.1} parent=5 // pred_fallthru
        _
      %p229 = scmp.le.s32.totalorder 1, %s18
      %p230 = scmp.lt.s32.totalorder %s18, 3
      %p231 = pnand %p229, %p230
      %p232 = pneg %p231
      // Predicated region
      $region37: #{tpu_custom_call.1} parent=5 // pred_check
        _
      $region38: #{tpu_custom_call.1} parent=5 // pred_check_branch
        %234 = sbr.rel (%p231) target = $region40
      $region39: #{tpu_custom_call.1} parent=5 // pred_region
        %s235 = ssub.s32 %s18, 1
        %s236 = sand.u32 %s31, 1
        %s237 = scalar_lea.sflag [#allocation3], %s236
        %s238 = sand.u32 %s31, 1
        %s239 = smul.addr %s238, 256
        %s240 = scalar_lea.vmem [#allocation2], %s239
        // Predicated region
        $region41: #{tpu_custom_call.1} parent=39 // pred_check
          %p241 = pneg %p44
        $region42: #{tpu_custom_call.1} parent=39 // pred_check_branch
          %243 = sbr.rel (%p241) target = $region44
        $region43: #{tpu_custom_call.1} parent=39 // pred_region
          %245 = dma.done %s237, 4096
        $region44: #{tpu_custom_call.1} parent=39 // pred_fallthru
          _
        // Predicated region
        $region45: #{tpu_custom_call.1} parent=39 // pred_check
          %p246 = pneg %p65
        $region46: #{tpu_custom_call.1} parent=39 // pred_check_branch
          %248 = sbr.rel (%p246) target = $region48
        $region47: #{tpu_custom_call.1} parent=39 // pred_region
          %250 = dma.done [#allocation6], 2048
        $region48: #{tpu_custom_call.1} parent=39 // pred_fallthru
          _
        // Predicated region
        $region49: #{tpu_custom_call.1} parent=39 // pred_check
          %p251 = pneg %p107
        $region50: #{tpu_custom_call.1} parent=39 // pred_check_branch
          %253 = sbr.rel (%p251) target = $region52
        $region51: #{tpu_custom_call.1} parent=39 // pred_region
          %255 = dma.done [#allocation6], 8192
        $region52: #{tpu_custom_call.1} parent=39 // pred_fallthru
          _
        %s256 = sand.u32 %s31, 1
        %s257 = scalar_lea.sflag [#allocation3], %s256
        %s258 = sand.u32 %s31, 1
        %s259 = smul.addr %s258, 256
        %s260 = scalar_lea.vmem [#allocation2], %s259
        %p261 = pneg %p44
        %p262 = pneg %p41
        %p263 = pneg %p65
        %p264 = pneg %p62
        %p265 = pneg %p86
        %p266 = pneg %p83
        %p267 = pneg %p107
        %p268 = pneg %p104
        %p269 = pneg %p128
        %p270 = pneg %p125
        %p271 = pneg %p154
        %p272 = pneg %p151
        %s273 = sand.u32 %s141, 1
        %s274 = scalar_lea.sflag [#allocation4], %s273
        %s275 = sand.u32 %s141, 1
        %s276 = smul.addr %s275, 256
        %s277 = scalar_lea.vmem [#allocation8], %s276
        %v278 = vld [vmem:[%s240] sm:$0xff]
        %v279 = vld [vmem:[%s240 + $0x8] sm:$0xff]
        %v280 = vld [vmem:[%s240 + $0x10] sm:$0xff]
        %v281 = vld [vmem:[%s240 + $0x18] sm:$0xff]
        %v282 = vld [vmem:[%s240 + $0x20] sm:$0xff]
        %v283 = vld [vmem:[%s240 + $0x28] sm:$0xff]
        %v284 = vld [vmem:[%s240 + $0x30] sm:$0xff]
        %v285 = vld [vmem:[%s240 + $0x38] sm:$0xff]
        %v286 = vld [vmem:[%s240 + $0x40] sm:$0xff]
        %v287 = vld [vmem:[%s240 + $0x48] sm:$0xff]
        %v288 = vld [vmem:[%s240 + $0x50] sm:$0xff]
        %v289 = vld [vmem:[%s240 + $0x58] sm:$0xff]
        %v290 = vld [vmem:[%s240 + $0x60] sm:$0xff]
        %v291 = vld [vmem:[%s240 + $0x68] sm:$0xff]
        %v292 = vld [vmem:[%s240 + $0x70] sm:$0xff]
        %v293 = vld [vmem:[%s240 + $0x78] sm:$0xff]
        %v294 = vld [vmem:[%s240 + $0x80] sm:$0xff]
        %v295 = vld [vmem:[%s240 + $0x88] sm:$0xff]
        %v296 = vld [vmem:[%s240 + $0x90] sm:$0xff]
        %v297 = vld [vmem:[%s240 + $0x98] sm:$0xff]
        %v298 = vld [vmem:[%s240 + $0xa0] sm:$0xff]
        %v299 = vld [vmem:[%s240 + $0xa8] sm:$0xff]
        %v300 = vld [vmem:[%s240 + $0xb0] sm:$0xff]
        %v301 = vld [vmem:[%s240 + $0xb8] sm:$0xff]
        %v302 = vld [vmem:[%s240 + $0xc0] sm:$0xff]
        %v303 = vld [vmem:[%s240 + $0xc8] sm:$0xff]
        %v304 = vld [vmem:[%s240 + $0xd0] sm:$0xff]
        %v305 = vld [vmem:[%s240 + $0xd8] sm:$0xff]
        %v306 = vld [vmem:[%s240 + $0xe0] sm:$0xff]
        %v307 = vld [vmem:[%s240 + $0xe8] sm:$0xff]
        %v308 = vld [vmem:[%s240 + $0xf0] sm:$0xff]
        %v309 = vld [vmem:[%s240 + $0xf8] sm:$0xff]
        %v310 = vld [vmem:[#allocation5] sm:$0xff]
        %v311 = vld [vmem:[#allocation5 + $0x8] sm:$0xff]
        %v312 = vld [vmem:[#allocation5 + $0x10] sm:$0xff]
        %v313 = vld [vmem:[#allocation5 + $0x18] sm:$0xff]
        %v314 = vld [vmem:[#allocation5 + $0x20] sm:$0xff]
        %v315 = vld [vmem:[#allocation5 + $0x28] sm:$0xff]
        %v316 = vld [vmem:[#allocation5 + $0x30] sm:$0xff]
        %v317 = vld [vmem:[#allocation5 + $0x38] sm:$0xff]
        %v318 = vld [vmem:[#allocation5 + $0x40] sm:$0xff]
        %v319 = vld [vmem:[#allocation5 + $0x48] sm:$0xff]
        %v320 = vld [vmem:[#allocation5 + $0x50] sm:$0xff]
        %v321 = vld [vmem:[#allocation5 + $0x58] sm:$0xff]
        %v322 = vld [vmem:[#allocation5 + $0x60] sm:$0xff]
        %v323 = vld [vmem:[#allocation5 + $0x68] sm:$0xff]
        %v324 = vld [vmem:[#allocation5 + $0x70] sm:$0xff]
        %v325 = vld [vmem:[#allocation5 + $0x78] sm:$0xff]
        %v326 = vld [vmem:[%s2] sm:$0x1]
        %v328 = vperm.slane %v326, 0
        %330 = vmatpush.msra.mxu0 %v325
        %331 = vmatpush.msra.mxu0 %v324
        %332 = vmatpush.msra.mxu0 %v323
        %333 = vmatpush.msra.mxu0 %v322
        %334 = vmatpush.msra.mxu0 %v321
        %335 = vmatpush.msra.mxu0 %v320
        %336 = vmatpush.msra.mxu0 %v319
        %337 = vmatpush.msra.mxu0 %v318
        %338 = vmatpush.msra.mxu0 %v317
        %339 = vmatpush.msra.mxu0 %v316
        %340 = vmatpush.msra.mxu0 %v315
        %341 = vmatpush.msra.mxu0 %v314
        %342 = vmatpush.msra.mxu0 %v313
        %343 = vmatpush.msra.mxu0 %v312
        %344 = vmatpush.msra.mxu0 %v311
        %345 = vmatpush.msra.mxu0 %v310
        %346 = vmatmul.f32.gmra.mxu0 %v278
        %v347 = vpop.f32.mrf.mxu0
        %v348 = vadd.f32 %v328, %v347
        %349 = vmatmul.f32.gmra.mxu0 %v279
        %v350 = vpop.f32.mrf.mxu0
        %v351 = vadd.f32 %v328, %v350
        %352 = vmatmul.f32.gmra.mxu0 %v280
        %v353 = vpop.f32.mrf.mxu0
        %v354 = vadd.f32 %v328, %v353
        %355 = vmatmul.f32.gmra.mxu0 %v281
        %v356 = vpop.f32.mrf.mxu0
        %v357 = vadd.f32 %v328, %v356
        %358 = vmatmul.f32.gmra.mxu0 %v282
        %v359 = vpop.f32.mrf.mxu0
        %v360 = vadd.f32 %v328, %v359
        %361 = vmatmul.f32.gmra.mxu0 %v283
        %v362 = vpop.f32.mrf.mxu0
        %v363 = vadd.f32 %v328, %v362
        %364 = vmatmul.f32.gmra.mxu0 %v284
        %v365 = vpop.f32.mrf.mxu0
        %v366 = vadd.f32 %v328, %v365
        %367 = vmatmul.f32.gmra.mxu0 %v285
        %v368 = vpop.f32.mrf.mxu0
        %v369 = vadd.f32 %v328, %v368
        %370 = vmatmul.f32.gmra.mxu0 %v286
        %v371 = vpop.f32.mrf.mxu0
        %v372 = vadd.f32 %v328, %v371
        %373 = vmatmul.f32.gmra.mxu0 %v287
        %v374 = vpop.f32.mrf.mxu0
        %v375 = vadd.f32 %v328, %v374
        %376 = vmatmul.f32.gmra.mxu0 %v288
        %v377 = vpop.f32.mrf.mxu0
        %v378 = vadd.f32 %v328, %v377
        %379 = vmatmul.f32.gmra.mxu0 %v289
        %v380 = vpop.f32.mrf.mxu0
        %v381 = vadd.f32 %v328, %v380
        %382 = vmatmul.f32.gmra.mxu0 %v290
        %v383 = vpop.f32.mrf.mxu0
        %v384 = vadd.f32 %v328, %v383
        %385 = vmatmul.f32.gmra.mxu0 %v291
        %v386 = vpop.f32.mrf.mxu0
        %v387 = vadd.f32 %v328, %v386
        %388 = vmatmul.f32.gmra.mxu0 %v292
        %v389 = vpop.f32.mrf.mxu0
        %v390 = vadd.f32 %v328, %v389
        %391 = vmatmul.f32.gmra.mxu0 %v293
        %v392 = vpop.f32.mrf.mxu0
        %v393 = vadd.f32 %v328, %v392
        %394 = vmatmul.f32.gmra.mxu0 %v294
        %v395 = vpop.f32.mrf.mxu0
        %v396 = vadd.f32 %v328, %v395
        %397 = vmatmul.f32.gmra.mxu0 %v295
        %v398 = vpop.f32.mrf.mxu0
        %v399 = vadd.f32 %v328, %v398
        %400 = vmatmul.f32.gmra.mxu0 %v296
        %v401 = vpop.f32.mrf.mxu0
        %v402 = vadd.f32 %v328, %v401
        %403 = vmatmul.f32.gmra.mxu0 %v297
        %v404 = vpop.f32.mrf.mxu0
        %v405 = vadd.f32 %v328, %v404
        %406 = vmatmul.f32.gmra.mxu0 %v298
        %v407 = vpop.f32.mrf.mxu0
        %v408 = vadd.f32 %v328, %v407
        %409 = vmatmul.f32.gmra.mxu0 %v299
        %v410 = vpop.f32.mrf.mxu0
        %v411 = vadd.f32 %v328, %v410
        %412 = vmatmul.f32.gmra.mxu0 %v300
        %v413 = vpop.f32.mrf.mxu0
        %v414 = vadd.f32 %v328, %v413
        %415 = vmatmul.f32.gmra.mxu0 %v301
        %v416 = vpop.f32.mrf.mxu0
        %v417 = vadd.f32 %v328, %v416
        %418 = vmatmul.f32.gmra.mxu0 %v302
        %v419 = vpop.f32.mrf.mxu0
        %v420 = vadd.f32 %v328, %v419
        %421 = vmatmul.f32.gmra.mxu0 %v303
        %v422 = vpop.f32.mrf.mxu0
        %v423 = vadd.f32 %v328, %v422
        %424 = vmatmul.f32.gmra.mxu0 %v304
        %v425 = vpop.f32.mrf.mxu0
        %v426 = vadd.f32 %v328, %v425
        %427 = vmatmul.f32.gmra.mxu0 %v305
        %v428 = vpop.f32.mrf.mxu0
        %v429 = vadd.f32 %v328, %v428
        %430 = vmatmul.f32.gmra.mxu0 %v306
        %v431 = vpop.f32.mrf.mxu0
        %v432 = vadd.f32 %v328, %v431
        %433 = vmatmul.f32.gmra.mxu0 %v307
        %v434 = vpop.f32.mrf.mxu0
        %v435 = vadd.f32 %v328, %v434
        %436 = vmatmul.f32.gmra.mxu0 %v308
        %v437 = vpop.f32.mrf.mxu0
        %v438 = vadd.f32 %v328, %v437
        %439 = vmatmul.f32.gmra.mxu0 %v309
        %v440 = vpop.f32.mrf.mxu0
        %v441 = vadd.f32 %v328, %v440
        %442 = vdwg.mxu0
        %v443 = vxor.u32 %v348, 2147483648
        %v444 = vxor.u32 %v351, 2147483648
        %v445 = vxor.u32 %v354, 2147483648
        %v446 = vxor.u32 %v357, 2147483648
        %v447 = vxor.u32 %v360, 2147483648
        %v448 = vxor.u32 %v363, 2147483648
        %v449 = vxor.u32 %v366, 2147483648
        %v450 = vxor.u32 %v369, 2147483648
        %v451 = vxor.u32 %v372, 2147483648
        %v452 = vxor.u32 %v375, 2147483648
        %v453 = vxor.u32 %v378, 2147483648
        %v454 = vxor.u32 %v381, 2147483648
        %v455 = vxor.u32 %v384, 2147483648
        %v456 = vxor.u32 %v387, 2147483648
        %v457 = vxor.u32 %v390, 2147483648
        %v458 = vxor.u32 %v393, 2147483648
        %v459 = vxor.u32 %v396, 2147483648
        %v460 = vxor.u32 %v399, 2147483648
        %v461 = vxor.u32 %v402, 2147483648
        %v462 = vxor.u32 %v405, 2147483648
        %v463 = vxor.u32 %v408, 2147483648
        %v464 = vxor.u32 %v411, 2147483648
        %v465 = vxor.u32 %v414, 2147483648
        %v466 = vxor.u32 %v417, 2147483648
        %v467 = vxor.u32 %v420, 2147483648
        %v468 = vxor.u32 %v423, 2147483648
        %v469 = vxor.u32 %v426, 2147483648
        %v470 = vxor.u32 %v429, 2147483648
        %v471 = vxor.u32 %v432, 2147483648
        %v472 = vxor.u32 %v435, 2147483648
        %v473 = vxor.u32 %v438, 2147483648
        %v474 = vxor.u32 %v441, 2147483648
        %v475 = vmul.f32 %v443, 1.442695
        %v476 = vpow.pop %v475
        %v477 = vmul.f32 %v444, 1.442695
        %v478 = vpow.pop %v477
        %v479 = vmul.f32 %v445, 1.442695
        %v480 = vpow.pop %v479
        %v481 = vmul.f32 %v446, 1.442695
        %v482 = vpow.pop %v481
        %v483 = vmul.f32 %v447, 1.442695
        %v484 = vpow.pop %v483
        %v485 = vmul.f32 %v448, 1.442695
        %v486 = vpow.pop %v485
        %v487 = vmul.f32 %v449, 1.442695
        %v488 = vpow.pop %v487
        %v489 = vmul.f32 %v450, 1.442695
        %v490 = vpow.pop %v489
        %v491 = vmul.f32 %v451, 1.442695
        %v492 = vpow.pop %v491
        %v493 = vmul.f32 %v452, 1.442695
        %v494 = vpow.pop %v493
        %v495 = vmul.f32 %v453, 1.442695
        %v496 = vpow.pop %v495
        %v497 = vmul.f32 %v454, 1.442695
        %v498 = vpow.pop %v497
        %v499 = vmul.f32 %v455, 1.442695
        %v500 = vpow.pop %v499
        %v501 = vmul.f32 %v456, 1.442695
        %v502 = vpow.pop %v501
        %v503 = vmul.f32 %v457, 1.442695
        %v504 = vpow.pop %v503
        %v505 = vmul.f32 %v458, 1.442695
        %v506 = vpow.pop %v505
        %v507 = vmul.f32 %v459, 1.442695
        %v508 = vpow.pop %v507
        %v509 = vmul.f32 %v460, 1.442695
        %v510 = vpow.pop %v509
        %v511 = vmul.f32 %v461, 1.442695
        %v512 = vpow.pop %v511
        %v513 = vmul.f32 %v462, 1.442695
        %v514 = vpow.pop %v513
        %v515 = vmul.f32 %v463, 1.442695
        %v516 = vpow.pop %v515
        %v517 = vmul.f32 %v464, 1.442695
        %v518 = vpow.pop %v517
        %v519 = vmul.f32 %v465, 1.442695
        %v520 = vpow.pop %v519
        %v521 = vmul.f32 %v466, 1.442695
        %v522 = vpow.pop %v521
        %v523 = vmul.f32 %v467, 1.442695
        %v524 = vpow.pop %v523
        %v525 = vmul.f32 %v468, 1.442695
        %v526 = vpow.pop %v525
        %v527 = vmul.f32 %v469, 1.442695
        %v528 = vpow.pop %v527
        %v529 = vmul.f32 %v470, 1.442695
        %v530 = vpow.pop %v529
        %v531 = vmul.f32 %v471, 1.442695
        %v532 = vpow.pop %v531
        %v533 = vmul.f32 %v472, 1.442695
        %v534 = vpow.pop %v533
        %v535 = vmul.f32 %v473, 1.442695
        %v536 = vpow.pop %v535
        %v537 = vmul.f32 %v474, 1.442695
        %v538 = vpow.pop %v537
        %v539 = vadd.f32 %v476, 1.0
        %v540 = vadd.f32 %v478, 1.0
        %v541 = vadd.f32 %v480, 1.0
        %v542 = vadd.f32 %v482, 1.0
        %v543 = vadd.f32 %v484, 1.0
        %v544 = vadd.f32 %v486, 1.0
        %v545 = vadd.f32 %v488, 1.0
        %v546 = vadd.f32 %v490, 1.0
        %v547 = vadd.f32 %v492, 1.0
        %v548 = vadd.f32 %v494, 1.0
        %v549 = vadd.f32 %v496, 1.0
        %v550 = vadd.f32 %v498, 1.0
        %v551 = vadd.f32 %v500, 1.0
        %v552 = vadd.f32 %v502, 1.0
        %v553 = vadd.f32 %v504, 1.0
        %v554 = vadd.f32 %v506, 1.0
        %v555 = vadd.f32 %v508, 1.0
        %v556 = vadd.f32 %v510, 1.0
        %v557 = vadd.f32 %v512, 1.0
        %v558 = vadd.f32 %v514, 1.0
        %v559 = vadd.f32 %v516, 1.0
        %v560 = vadd.f32 %v518, 1.0
        %v561 = vadd.f32 %v520, 1.0
        %v562 = vadd.f32 %v522, 1.0
        %v563 = vadd.f32 %v524, 1.0
        %v564 = vadd.f32 %v526, 1.0
        %v565 = vadd.f32 %v528, 1.0
        %v566 = vadd.f32 %v530, 1.0
        %v567 = vadd.f32 %v532, 1.0
        %v568 = vadd.f32 %v534, 1.0
        %v569 = vadd.f32 %v536, 1.0
        %v570 = vadd.f32 %v538, 1.0
        %v571 = vrcp.pop %v539
        %v572 = vmul.f32 %v539, %v571
        %v573 = vsub.f32 1.0, %v572
        %v574 = vmul.f32 %v571, %v573
        %v575 = vadd.f32 %v571, %v574
        %vm576 = vweird.f32 %v539
        %vm577 = vweird.f32 %v571
        %vm578 = vmor %vm576, %vm577
        %v579 = vsel %vm578, %v571, %v575
        %v580 = vand.u32 2147483647, %v539
        %vm581 = vcmp.eq.f32.partialorder %v580, 8.507059e+37
        %v582 = vand.u32 %v539, 2147483648
        %v583 = vor.u32 1.1754944e-38, %v582
        %v584 = vsel %vm581, %v583, %v579
        %v585 = vmul.f32 1.0, %v584
        %v586 = vrcp.pop %v540
        %v587 = vmul.f32 %v540, %v586
        %v588 = vsub.f32 1.0, %v587
        %v589 = vmul.f32 %v586, %v588
        %v590 = vadd.f32 %v586, %v589
        %vm591 = vweird.f32 %v540
        %vm592 = vweird.f32 %v586
        %vm593 = vmor %vm591, %vm592
        %v594 = vsel %vm593, %v586, %v590
        %v595 = vand.u32 2147483647, %v540
        %vm596 = vcmp.eq.f32.partialorder %v595, 8.507059e+37
        %v597 = vand.u32 %v540, 2147483648
        %v598 = vor.u32 1.1754944e-38, %v597
        %v599 = vsel %vm596, %v598, %v594
        %v600 = vmul.f32 1.0, %v599
        %v601 = vrcp.pop %v541
        %v602 = vmul.f32 %v541, %v601
        %v603 = vsub.f32 1.0, %v602
        %v604 = vmul.f32 %v601, %v603
        %v605 = vadd.f32 %v601, %v604
        %vm606 = vweird.f32 %v541
        %vm607 = vweird.f32 %v601
        %vm608 = vmor %vm606, %vm607
        %v609 = vsel %vm608, %v601, %v605
        %v610 = vand.u32 2147483647, %v541
        %vm611 = vcmp.eq.f32.partialorder %v610, 8.507059e+37
        %v612 = vand.u32 %v541, 2147483648
        %v613 = vor.u32 1.1754944e-38, %v612
        %v614 = vsel %vm611, %v613, %v609
        %v615 = vmul.f32 1.0, %v614
        %v616 = vrcp.pop %v542
        %v617 = vmul.f32 %v542, %v616
        %v618 = vsub.f32 1.0, %v617
        %v619 = vmul.f32 %v616, %v618
        %v620 = vadd.f32 %v616, %v619
        %vm621 = vweird.f32 %v542
        %vm622 = vweird.f32 %v616
        %vm623 = vmor %vm621, %vm622
        %v624 = vsel %vm623, %v616, %v620
        %v625 = vand.u32 2147483647, %v542
        %vm626 = vcmp.eq.f32.partialorder %v625, 8.507059e+37
        %v627 = vand.u32 %v542, 2147483648
        %v628 = vor.u32 1.1754944e-38, %v627
        %v629 = vsel %vm626, %v628, %v624
        %v630 = vmul.f32 1.0, %v629
        %v631 = vrcp.pop %v543
        %v632 = vmul.f32 %v543, %v631
        %v633 = vsub.f32 1.0, %v632
        %v634 = vmul.f32 %v631, %v633
        %v635 = vadd.f32 %v631, %v634
        %vm636 = vweird.f32 %v543
        %vm637 = vweird.f32 %v631
        %vm638 = vmor %vm636, %vm637
        %v639 = vsel %vm638, %v631, %v635
        %v640 = vand.u32 2147483647, %v543
        %vm641 = vcmp.eq.f32.partialorder %v640, 8.507059e+37
        %v642 = vand.u32 %v543, 2147483648
        %v643 = vor.u32 1.1754944e-38, %v642
        %v644 = vsel %vm641, %v643, %v639
        %v645 = vmul.f32 1.0, %v644
        %v646 = vrcp.pop %v544
        %v647 = vmul.f32 %v544, %v646
        %v648 = vsub.f32 1.0, %v647
        %v649 = vmul.f32 %v646, %v648
        %v650 = vadd.f32 %v646, %v649
        %vm651 = vweird.f32 %v544
        %vm652 = vweird.f32 %v646
        %vm653 = vmor %vm651, %vm652
        %v654 = vsel %vm653, %v646, %v650
        %v655 = vand.u32 2147483647, %v544
        %vm656 = vcmp.eq.f32.partialorder %v655, 8.507059e+37
        %v657 = vand.u32 %v544, 2147483648
        %v658 = vor.u32 1.1754944e-38, %v657
        %v659 = vsel %vm656, %v658, %v654
        %v660 = vmul.f32 1.0, %v659
        %v661 = vrcp.pop %v545
        %v662 = vmul.f32 %v545, %v661
        %v663 = vsub.f32 1.0, %v662
        %v664 = vmul.f32 %v661, %v663
        %v665 = vadd.f32 %v661, %v664
        %vm666 = vweird.f32 %v545
        %vm667 = vweird.f32 %v661
        %vm668 = vmor %vm666, %vm667
        %v669 = vsel %vm668, %v661, %v665
        %v670 = vand.u32 2147483647, %v545
        %vm671 = vcmp.eq.f32.partialorder %v670, 8.507059e+37
        %v672 = vand.u32 %v545, 2147483648
        %v673 = vor.u32 1.1754944e-38, %v672
        %v674 = vsel %vm671, %v673, %v669
        %v675 = vmul.f32 1.0, %v674
        %v676 = vrcp.pop %v546
        %v677 = vmul.f32 %v546, %v676
        %v678 = vsub.f32 1.0, %v677
        %v679 = vmul.f32 %v676, %v678
        %v680 = vadd.f32 %v676, %v679
        %vm681 = vweird.f32 %v546
        %vm682 = vweird.f32 %v676
        %vm683 = vmor %vm681, %vm682
        %v684 = vsel %vm683, %v676, %v680
        %v685 = vand.u32 2147483647, %v546
        %vm686 = vcmp.eq.f32.partialorder %v685, 8.507059e+37
        %v687 = vand.u32 %v546, 2147483648
        %v688 = vor.u32 1.1754944e-38, %v687
        %v689 = vsel %vm686, %v688, %v684
        %v690 = vmul.f32 1.0, %v689
        %v691 = vrcp.pop %v547
        %v692 = vmul.f32 %v547, %v691
        %v693 = vsub.f32 1.0, %v692
        %v694 = vmul.f32 %v691, %v693
        %v695 = vadd.f32 %v691, %v694
        %vm696 = vweird.f32 %v547
        %vm697 = vweird.f32 %v691
        %vm698 = vmor %vm696, %vm697
        %v699 = vsel %vm698, %v691, %v695
        %v700 = vand.u32 2147483647, %v547
        %vm701 = vcmp.eq.f32.partialorder %v700, 8.507059e+37
        %v702 = vand.u32 %v547, 2147483648
        %v703 = vor.u32 1.1754944e-38, %v702
        %v704 = vsel %vm701, %v703, %v699
        %v705 = vmul.f32 1.0, %v704
        %v706 = vrcp.pop %v548
        %v707 = vmul.f32 %v548, %v706
        %v708 = vsub.f32 1.0, %v707
        %v709 = vmul.f32 %v706, %v708
        %v710 = vadd.f32 %v706, %v709
        %vm711 = vweird.f32 %v548
        %vm712 = vweird.f32 %v706
        %vm713 = vmor %vm711, %vm712
        %v714 = vsel %vm713, %v706, %v710
        %v715 = vand.u32 2147483647, %v548
        %vm716 = vcmp.eq.f32.partialorder %v715, 8.507059e+37
        %v717 = vand.u32 %v548, 2147483648
        %v718 = vor.u32 1.1754944e-38, %v717
        %v719 = vsel %vm716, %v718, %v714
        %v720 = vmul.f32 1.0, %v719
        %v721 = vrcp.pop %v549
        %v722 = vmul.f32 %v549, %v721
        %v723 = vsub.f32 1.0, %v722
        %v724 = vmul.f32 %v721, %v723
        %v725 = vadd.f32 %v721, %v724
        %vm726 = vweird.f32 %v549
        %vm727 = vweird.f32 %v721
        %vm728 = vmor %vm726, %vm727
        %v729 = vsel %vm728, %v721, %v725
        %v730 = vand.u32 2147483647, %v549
        %vm731 = vcmp.eq.f32.partialorder %v730, 8.507059e+37
        %v732 = vand.u32 %v549, 2147483648
        %v733 = vor.u32 1.1754944e-38, %v732
        %v734 = vsel %vm731, %v733, %v729
        %v735 = vmul.f32 1.0, %v734
        %v736 = vrcp.pop %v550
        %v737 = vmul.f32 %v550, %v736
        %v738 = vsub.f32 1.0, %v737
        %v739 = vmul.f32 %v736, %v738
        %v740 = vadd.f32 %v736, %v739
        %vm741 = vweird.f32 %v550
        %vm742 = vweird.f32 %v736
        %vm743 = vmor %vm741, %vm742
        %v744 = vsel %vm743, %v736, %v740
        %v745 = vand.u32 2147483647, %v550
        %vm746 = vcmp.eq.f32.partialorder %v745, 8.507059e+37
        %v747 = vand.u32 %v550, 2147483648
        %v748 = vor.u32 1.1754944e-38, %v747
        %v749 = vsel %vm746, %v748, %v744
        %v750 = vmul.f32 1.0, %v749
        %v751 = vrcp.pop %v551
        %v752 = vmul.f32 %v551, %v751
        %v753 = vsub.f32 1.0, %v752
        %v754 = vmul.f32 %v751, %v753
        %v755 = vadd.f32 %v751, %v754
        %vm756 = vweird.f32 %v551
        %vm757 = vweird.f32 %v751
        %vm758 = vmor %vm756, %vm757
        %v759 = vsel %vm758, %v751, %v755
        %v760 = vand.u32 2147483647, %v551
        %vm761 = vcmp.eq.f32.partialorder %v760, 8.507059e+37
        %v762 = vand.u32 %v551, 2147483648
        %v763 = vor.u32 1.1754944e-38, %v762
        %v764 = vsel %vm761, %v763, %v759
        %v765 = vmul.f32 1.0, %v764
        %v766 = vrcp.pop %v552
        %v767 = vmul.f32 %v552, %v766
        %v768 = vsub.f32 1.0, %v767
        %v769 = vmul.f32 %v766, %v768
        %v770 = vadd.f32 %v766, %v769
        %vm771 = vweird.f32 %v552
        %vm772 = vweird.f32 %v766
        %vm773 = vmor %vm771, %vm772
        %v774 = vsel %vm773, %v766, %v770
        %v775 = vand.u32 2147483647, %v552
        %vm776 = vcmp.eq.f32.partialorder %v775, 8.507059e+37
        %v777 = vand.u32 %v552, 2147483648
        %v778 = vor.u32 1.1754944e-38, %v777
        %v779 = vsel %vm776, %v778, %v774
        %v780 = vmul.f32 1.0, %v779
        %v781 = vrcp.pop %v553
        %v782 = vmul.f32 %v553, %v781
        %v783 = vsub.f32 1.0, %v782
        %v784 = vmul.f32 %v781, %v783
        %v785 = vadd.f32 %v781, %v784
        %vm786 = vweird.f32 %v553
        %vm787 = vweird.f32 %v781
        %vm788 = vmor %vm786, %vm787
        %v789 = vsel %vm788, %v781, %v785
        %v790 = vand.u32 2147483647, %v553
        %vm791 = vcmp.eq.f32.partialorder %v790, 8.507059e+37
        %v792 = vand.u32 %v553, 2147483648
        %v793 = vor.u32 1.1754944e-38, %v792
        %v794 = vsel %vm791, %v793, %v789
        %v795 = vmul.f32 1.0, %v794
        %v796 = vrcp.pop %v554
        %v797 = vmul.f32 %v554, %v796
        %v798 = vsub.f32 1.0, %v797
        %v799 = vmul.f32 %v796, %v798
        %v800 = vadd.f32 %v796, %v799
        %vm801 = vweird.f32 %v554
        %vm802 = vweird.f32 %v796
        %vm803 = vmor %vm801, %vm802
        %v804 = vsel %vm803, %v796, %v800
        %v805 = vand.u32 2147483647, %v554
        %vm806 = vcmp.eq.f32.partialorder %v805, 8.507059e+37
        %v807 = vand.u32 %v554, 2147483648
        %v808 = vor.u32 1.1754944e-38, %v807
        %v809 = vsel %vm806, %v808, %v804
        %v810 = vmul.f32 1.0, %v809
        %v811 = vrcp.pop %v555
        %v812 = vmul.f32 %v555, %v811
        %v813 = vsub.f32 1.0, %v812
        %v814 = vmul.f32 %v811, %v813
        %v815 = vadd.f32 %v811, %v814
        %vm816 = vweird.f32 %v555
        %vm817 = vweird.f32 %v811
        %vm818 = vmor %vm816, %vm817
        %v819 = vsel %vm818, %v811, %v815
        %v820 = vand.u32 2147483647, %v555
        %vm821 = vcmp.eq.f32.partialorder %v820, 8.507059e+37
        %v822 = vand.u32 %v555, 2147483648
        %v823 = vor.u32 1.1754944e-38, %v822
        %v824 = vsel %vm821, %v823, %v819
        %v825 = vmul.f32 1.0, %v824
        %v826 = vrcp.pop %v556
        %v827 = vmul.f32 %v556, %v826
        %v828 = vsub.f32 1.0, %v827
        %v829 = vmul.f32 %v826, %v828
        %v830 = vadd.f32 %v826, %v829
        %vm831 = vweird.f32 %v556
        %vm832 = vweird.f32 %v826
        %vm833 = vmor %vm831, %vm832
        %v834 = vsel %vm833, %v826, %v830
        %v835 = vand.u32 2147483647, %v556
        %vm836 = vcmp.eq.f32.partialorder %v835, 8.507059e+37
        %v837 = vand.u32 %v556, 2147483648
        %v838 = vor.u32 1.1754944e-38, %v837
        %v839 = vsel %vm836, %v838, %v834
        %v840 = vmul.f32 1.0, %v839
        %v841 = vrcp.pop %v557
        %v842 = vmul.f32 %v557, %v841
        %v843 = vsub.f32 1.0, %v842
        %v844 = vmul.f32 %v841, %v843
        %v845 = vadd.f32 %v841, %v844
        %vm846 = vweird.f32 %v557
        %vm847 = vweird.f32 %v841
        %vm848 = vmor %vm846, %vm847
        %v849 = vsel %vm848, %v841, %v845
        %v850 = vand.u32 2147483647, %v557
        %vm851 = vcmp.eq.f32.partialorder %v850, 8.507059e+37
        %v852 = vand.u32 %v557, 2147483648
        %v853 = vor.u32 1.1754944e-38, %v852
        %v854 = vsel %vm851, %v853, %v849
        %v855 = vmul.f32 1.0, %v854
        %v856 = vrcp.pop %v558
        %v857 = vmul.f32 %v558, %v856
        %v858 = vsub.f32 1.0, %v857
        %v859 = vmul.f32 %v856, %v858
        %v860 = vadd.f32 %v856, %v859
        %vm861 = vweird.f32 %v558
        %vm862 = vweird.f32 %v856
        %vm863 = vmor %vm861, %vm862
        %v864 = vsel %vm863, %v856, %v860
        %v865 = vand.u32 2147483647, %v558
        %vm866 = vcmp.eq.f32.partialorder %v865, 8.507059e+37
        %v867 = vand.u32 %v558, 2147483648
        %v868 = vor.u32 1.1754944e-38, %v867
        %v869 = vsel %vm866, %v868, %v864
        %v870 = vmul.f32 1.0, %v869
        %v871 = vrcp.pop %v559
        %v872 = vmul.f32 %v559, %v871
        %v873 = vsub.f32 1.0, %v872
        %v874 = vmul.f32 %v871, %v873
        %v875 = vadd.f32 %v871, %v874
        %vm876 = vweird.f32 %v559
        %vm877 = vweird.f32 %v871
        %vm878 = vmor %vm876, %vm877
        %v879 = vsel %vm878, %v871, %v875
        %v880 = vand.u32 2147483647, %v559
        %vm881 = vcmp.eq.f32.partialorder %v880, 8.507059e+37
        %v882 = vand.u32 %v559, 2147483648
        %v883 = vor.u32 1.1754944e-38, %v882
        %v884 = vsel %vm881, %v883, %v879
        %v885 = vmul.f32 1.0, %v884
        %v886 = vrcp.pop %v560
        %v887 = vmul.f32 %v560, %v886
        %v888 = vsub.f32 1.0, %v887
        %v889 = vmul.f32 %v886, %v888
        %v890 = vadd.f32 %v886, %v889
        %vm891 = vweird.f32 %v560
        %vm892 = vweird.f32 %v886
        %vm893 = vmor %vm891, %vm892
        %v894 = vsel %vm893, %v886, %v890
        %v895 = vand.u32 2147483647, %v560
        %vm896 = vcmp.eq.f32.partialorder %v895, 8.507059e+37
        %v897 = vand.u32 %v560, 2147483648
        %v898 = vor.u32 1.1754944e-38, %v897
        %v899 = vsel %vm896, %v898, %v894
        %v900 = vmul.f32 1.0, %v899
        %v901 = vrcp.pop %v561
        %v902 = vmul.f32 %v561, %v901
        %v903 = vsub.f32 1.0, %v902
        %v904 = vmul.f32 %v901, %v903
        %v905 = vadd.f32 %v901, %v904
        %vm906 = vweird.f32 %v561
        %vm907 = vweird.f32 %v901
        %vm908 = vmor %vm906, %vm907
        %v909 = vsel %vm908, %v901, %v905
        %v910 = vand.u32 2147483647, %v561
        %vm911 = vcmp.eq.f32.partialorder %v910, 8.507059e+37
        %v912 = vand.u32 %v561, 2147483648
        %v913 = vor.u32 1.1754944e-38, %v912
        %v914 = vsel %vm911, %v913, %v909
        %v915 = vmul.f32 1.0, %v914
        %v916 = vrcp.pop %v562
        %v917 = vmul.f32 %v562, %v916
        %v918 = vsub.f32 1.0, %v917
        %v919 = vmul.f32 %v916, %v918
        %v920 = vadd.f32 %v916, %v919
        %vm921 = vweird.f32 %v562
        %vm922 = vweird.f32 %v916
        %vm923 = vmor %vm921, %vm922
        %v924 = vsel %vm923, %v916, %v920
        %v925 = vand.u32 2147483647, %v562
        %vm926 = vcmp.eq.f32.partialorder %v925, 8.507059e+37
        %v927 = vand.u32 %v562, 2147483648
        %v928 = vor.u32 1.1754944e-38, %v927
        %v929 = vsel %vm926, %v928, %v924
        %v930 = vmul.f32 1.0, %v929
        %v931 = vrcp.pop %v563
        %v932 = vmul.f32 %v563, %v931
        %v933 = vsub.f32 1.0, %v932
        %v934 = vmul.f32 %v931, %v933
        %v935 = vadd.f32 %v931, %v934
        %vm936 = vweird.f32 %v563
        %vm937 = vweird.f32 %v931
        %vm938 = vmor %vm936, %vm937
        %v939 = vsel %vm938, %v931, %v935
        %v940 = vand.u32 2147483647, %v563
        %vm941 = vcmp.eq.f32.partialorder %v940, 8.507059e+37
        %v942 = vand.u32 %v563, 2147483648
        %v943 = vor.u32 1.1754944e-38, %v942
        %v944 = vsel %vm941, %v943, %v939
        %v945 = vmul.f32 1.0, %v944
        %v946 = vrcp.pop %v564
        %v947 = vmul.f32 %v564, %v946
        %v948 = vsub.f32 1.0, %v947
        %v949 = vmul.f32 %v946, %v948
        %v950 = vadd.f32 %v946, %v949
        %vm951 = vweird.f32 %v564
        %vm952 = vweird.f32 %v946
        %vm953 = vmor %vm951, %vm952
        %v954 = vsel %vm953, %v946, %v950
        %v955 = vand.u32 2147483647, %v564
        %vm956 = vcmp.eq.f32.partialorder %v955, 8.507059e+37
        %v957 = vand.u32 %v564, 2147483648
        %v958 = vor.u32 1.1754944e-38, %v957
        %v959 = vsel %vm956, %v958, %v954
        %v960 = vmul.f32 1.0, %v959
        %v961 = vrcp.pop %v565
        %v962 = vmul.f32 %v565, %v961
        %v963 = vsub.f32 1.0, %v962
        %v964 = vmul.f32 %v961, %v963
        %v965 = vadd.f32 %v961, %v964
        %vm966 = vweird.f32 %v565
        %vm967 = vweird.f32 %v961
        %vm968 = vmor %vm966, %vm967
        %v969 = vsel %vm968, %v961, %v965
        %v970 = vand.u32 2147483647, %v565
        %vm971 = vcmp.eq.f32.partialorder %v970, 8.507059e+37
        %v972 = vand.u32 %v565, 2147483648
        %v973 = vor.u32 1.1754944e-38, %v972
        %v974 = vsel %vm971, %v973, %v969
        %v975 = vmul.f32 1.0, %v974
        %v976 = vrcp.pop %v566
        %v977 = vmul.f32 %v566, %v976
        %v978 = vsub.f32 1.0, %v977
        %v979 = vmul.f32 %v976, %v978
        %v980 = vadd.f32 %v976, %v979
        %vm981 = vweird.f32 %v566
        %vm982 = vweird.f32 %v976
        %vm983 = vmor %vm981, %vm982
        %v984 = vsel %vm983, %v976, %v980
        %v985 = vand.u32 2147483647, %v566
        %vm986 = vcmp.eq.f32.partialorder %v985, 8.507059e+37
        %v987 = vand.u32 %v566, 2147483648
        %v988 = vor.u32 1.1754944e-38, %v987
        %v989 = vsel %vm986, %v988, %v984
        %v990 = vmul.f32 1.0, %v989
        %v991 = vrcp.pop %v567
        %v992 = vmul.f32 %v567, %v991
        %v993 = vsub.f32 1.0, %v992
        %v994 = vmul.f32 %v991, %v993
        %v995 = vadd.f32 %v991, %v994
        %vm996 = vweird.f32 %v567
        %vm997 = vweird.f32 %v991
        %vm998 = vmor %vm996, %vm997
        %v999 = vsel %vm998, %v991, %v995
        %v1000 = vand.u32 2147483647, %v567
        %vm1001 = vcmp.eq.f32.partialorder %v1000, 8.507059e+37
        %v1002 = vand.u32 %v567, 2147483648
        %v1003 = vor.u32 1.1754944e-38, %v1002
        %v1004 = vsel %vm1001, %v1003, %v999
        %v1005 = vmul.f32 1.0, %v1004
        %v1006 = vrcp.pop %v568
        %v1007 = vmul.f32 %v568, %v1006
        %v1008 = vsub.f32 1.0, %v1007
        %v1009 = vmul.f32 %v1006, %v1008
        %v1010 = vadd.f32 %v1006, %v1009
        %vm1011 = vweird.f32 %v568
        %vm1012 = vweird.f32 %v1006
        %vm1013 = vmor %vm1011, %vm1012
        %v1014 = vsel %vm1013, %v1006, %v1010
        %v1015 = vand.u32 2147483647, %v568
        %vm1016 = vcmp.eq.f32.partialorder %v1015, 8.507059e+37
        %v1017 = vand.u32 %v568, 2147483648
        %v1018 = vor.u32 1.1754944e-38, %v1017
        %v1019 = vsel %vm1016, %v1018, %v1014
        %v1020 = vmul.f32 1.0, %v1019
        %v1021 = vrcp.pop %v569
        %v1022 = vmul.f32 %v569, %v1021
        %v1023 = vsub.f32 1.0, %v1022
        %v1024 = vmul.f32 %v1021, %v1023
        %v1025 = vadd.f32 %v1021, %v1024
        %vm1026 = vweird.f32 %v569
        %vm1027 = vweird.f32 %v1021
        %vm1028 = vmor %vm1026, %vm1027
        %v1029 = vsel %vm1028, %v1021, %v1025
        %v1030 = vand.u32 2147483647, %v569
        %vm1031 = vcmp.eq.f32.partialorder %v1030, 8.507059e+37
        %v1032 = vand.u32 %v569, 2147483648
        %v1033 = vor.u32 1.1754944e-38, %v1032
        %v1034 = vsel %vm1031, %v1033, %v1029
        %v1035 = vmul.f32 1.0, %v1034
        %v1036 = vrcp.pop %v570
        %v1037 = vmul.f32 %v570, %v1036
        %v1038 = vsub.f32 1.0, %v1037
        %v1039 = vmul.f32 %v1036, %v1038
        %v1040 = vadd.f32 %v1036, %v1039
        %vm1041 = vweird.f32 %v570
        %vm1042 = vweird.f32 %v1036
        %vm1043 = vmor %vm1041, %vm1042
        %v1044 = vsel %vm1043, %v1036, %v1040
        %v1045 = vand.u32 2147483647, %v570
        %vm1046 = vcmp.eq.f32.partialorder %v1045, 8.507059e+37
        %v1047 = vand.u32 %v570, 2147483648
        %v1048 = vor.u32 1.1754944e-38, %v1047
        %v1049 = vsel %vm1046, %v1048, %v1044
        %v1050 = vmul.f32 1.0, %v1049
        %v1051 = vmul.f32 %v348, %v585
        %v1052 = vmul.f32 %v351, %v600
        %v1053 = vmul.f32 %v354, %v615
        %v1054 = vmul.f32 %v357, %v630
        %v1055 = vmul.f32 %v360, %v645
        %v1056 = vmul.f32 %v363, %v660
        %v1057 = vmul.f32 %v366, %v675
        %v1058 = vmul.f32 %v369, %v690
        %v1059 = vmul.f32 %v372, %v705
        %v1060 = vmul.f32 %v375, %v720
        %v1061 = vmul.f32 %v378, %v735
        %v1062 = vmul.f32 %v381, %v750
        %v1063 = vmul.f32 %v384, %v765
        %v1064 = vmul.f32 %v387, %v780
        %v1065 = vmul.f32 %v390, %v795
        %v1066 = vmul.f32 %v393, %v810
        %v1067 = vmul.f32 %v396, %v825
        %v1068 = vmul.f32 %v399, %v840
        %v1069 = vmul.f32 %v402, %v855
        %v1070 = vmul.f32 %v405, %v870
        %v1071 = vmul.f32 %v408, %v885
        %v1072 = vmul.f32 %v411, %v900
        %v1073 = vmul.f32 %v414, %v915
        %v1074 = vmul.f32 %v417, %v930
        %v1075 = vmul.f32 %v420, %v945
        %v1076 = vmul.f32 %v423, %v960
        %v1077 = vmul.f32 %v426, %v975
        %v1078 = vmul.f32 %v429, %v990
        %v1079 = vmul.f32 %v432, %v1005
        %v1080 = vmul.f32 %v435, %v1020
        %v1081 = vmul.f32 %v438, %v1035
        %v1082 = vmul.f32 %v441, %v1050
        %v1083 = vld [vmem:[#allocation7] sm:$0xff]
        %v1084 = vld [vmem:[#allocation7 + $0x8] sm:$0xff]
        %v1085 = vld [vmem:[#allocation7 + $0x10] sm:$0xff]
        %v1086 = vld [vmem:[#allocation7 + $0x18] sm:$0xff]
        %v1087 = vld [vmem:[#allocation7 + $0x20] sm:$0xff]
        %v1088 = vld [vmem:[#allocation7 + $0x28] sm:$0xff]
        %v1089 = vld [vmem:[#allocation7 + $0x30] sm:$0xff]
        %v1090 = vld [vmem:[#allocation7 + $0x38] sm:$0xff]
        %v1091 = vld [vmem:[#allocation7 + $0x40] sm:$0xff]
        %v1092 = vld [vmem:[#allocation7 + $0x48] sm:$0xff]
        %v1093 = vld [vmem:[#allocation7 + $0x50] sm:$0xff]
        %v1094 = vld [vmem:[#allocation7 + $0x58] sm:$0xff]
        %v1095 = vld [vmem:[#allocation7 + $0x60] sm:$0xff]
        %v1096 = vld [vmem:[#allocation7 + $0x68] sm:$0xff]
        %v1097 = vld [vmem:[#allocation7 + $0x70] sm:$0xff]
        %v1098 = vld [vmem:[#allocation7 + $0x78] sm:$0xff]
        %v1099 = vmax.f32 %v1051, %v1053
        %v1100 = vmax.f32 %v1052, %v1054
        %v1101 = vmax.f32 %v1053, %v1055
        %v1102 = vmax.f32 %v1054, %v1056
        %v1103 = vmax.f32 %v1055, %v1057
        %v1104 = vmax.f32 %v1056, %v1058
        %v1105 = vmax.f32 %v1057, %v1059
        %v1106 = vmax.f32 %v1058, %v1060
        %v1107 = vmax.f32 %v1059, %v1061
        %v1108 = vmax.f32 %v1060, %v1062
        %v1109 = vmax.f32 %v1061, %v1063
        %v1110 = vmax.f32 %v1062, %v1064
        %v1111 = vmax.f32 %v1063, %v1065
        %v1112 = vmax.f32 %v1064, %v1066
        %v1113 = vmax.f32 %v1065, %v1067
        %v1114 = vmax.f32 %v1066, %v1068
        %v1115 = vmax.f32 %v1067, %v1069
        %v1116 = vmax.f32 %v1068, %v1070
        %v1117 = vmax.f32 %v1069, %v1071
        %v1118 = vmax.f32 %v1070, %v1072
        %v1119 = vmax.f32 %v1071, %v1073
        %v1120 = vmax.f32 %v1072, %v1074
        %v1121 = vmax.f32 %v1073, %v1075
        %v1122 = vmax.f32 %v1074, %v1076
        %v1123 = vmax.f32 %v1075, %v1077
        %v1124 = vmax.f32 %v1076, %v1078
        %v1125 = vmax.f32 %v1077, %v1079
        %v1126 = vmax.f32 %v1078, %v1080
        %v1127 = vmax.f32 %v1099, %v1055
        %v1128 = vmax.f32 %v1100, %v1056
        %v1129 = vmax.f32 %v1101, %v1057
        %v1130 = vmax.f32 %v1102, %v1058
        %v1131 = vmax.f32 %v1103, %v1059
        %v1132 = vmax.f32 %v1104, %v1060
        %v1133 = vmax.f32 %v1105, %v1061
        %v1134 = vmax.f32 %v1106, %v1062
        %v1135 = vmax.f32 %v1107, %v1063
        %v1136 = vmax.f32 %v1108, %v1064
        %v1137 = vmax.f32 %v1109, %v1065
        %v1138 = vmax.f32 %v1110, %v1066
        %v1139 = vmax.f32 %v1111, %v1067
        %v1140 = vmax.f32 %v1112, %v1068
        %v1141 = vmax.f32 %v1113, %v1069
        %v1142 = vmax.f32 %v1114, %v1070
        %v1143 = vmax.f32 %v1115, %v1071
        %v1144 = vmax.f32 %v1116, %v1072
        %v1145 = vmax.f32 %v1117, %v1073
        %v1146 = vmax.f32 %v1118, %v1074
        %v1147 = vmax.f32 %v1119, %v1075
        %v1148 = vmax.f32 %v1120, %v1076
        %v1149 = vmax.f32 %v1121, %v1077
        %v1150 = vmax.f32 %v1122, %v1078
        %v1151 = vmax.f32 %v1123, %v1079
        %v1152 = vmax.f32 %v1124, %v1080
        %v1153 = vmax.f32 %v1125, %v1081
        %v1154 = vmax.f32 %v1126, %v1082
        %v1155 = vmax.f32 %v1127, %v1057
        %v1156 = vmax.f32 %v1128, %v1058
        %v1157 = vmax.f32 %v1129, %v1059
        %v1158 = vmax.f32 %v1130, %v1060
        %v1159 = vmax.f32 %v1131, %v1061
        %v1160 = vmax.f32 %v1132, %v1062
        %v1161 = vmax.f32 %v1133, %v1063
        %v1162 = vmax.f32 %v1134, %v1064
        %v1163 = vmax.f32 %v1135, %v1065
        %v1164 = vmax.f32 %v1136, %v1066
        %v1165 = vmax.f32 %v1137, %v1067
        %v1166 = vmax.f32 %v1138, %v1068
        %v1167 = vmax.f32 %v1139, %v1069
        %v1168 = vmax.f32 %v1140, %v1070
        %v1169 = vmax.f32 %v1141, %v1071
        %v1170 = vmax.f32 %v1142, %v1072
        %v1171 = vmax.f32 %v1143, %v1073
        %v1172 = vmax.f32 %v1144, %v1074
        %v1173 = vmax.f32 %v1145, %v1075
        %v1174 = vmax.f32 %v1146, %v1076
        %v1175 = vmax.f32 %v1147, %v1077
        %v1176 = vmax.f32 %v1148, %v1078
        %v1177 = vmax.f32 %v1149, %v1079
        %v1178 = vmax.f32 %v1150, %v1080
        %v1179 = vmax.f32 %v1151, %v1081
        %v1180 = vmax.f32 %v1152, %v1082
        %v1181 = vmax.f32 %v1155, %v1059
        %v1182 = vmax.f32 %v1156, %v1060
        %v1183 = vmax.f32 %v1157, %v1061
        %v1184 = vmax.f32 %v1158, %v1062
        %v1185 = vmax.f32 %v1159, %v1063
        %v1186 = vmax.f32 %v1160, %v1064
        %v1187 = vmax.f32 %v1161, %v1065
        %v1188 = vmax.f32 %v1162, %v1066
        %v1189 = vmax.f32 %v1163, %v1067
        %v1190 = vmax.f32 %v1164, %v1068
        %v1191 = vmax.f32 %v1165, %v1069
        %v1192 = vmax.f32 %v1166, %v1070
        %v1193 = vmax.f32 %v1167, %v1071
        %v1194 = vmax.f32 %v1168, %v1072
        %v1195 = vmax.f32 %v1169, %v1073
        %v1196 = vmax.f32 %v1170, %v1074
        %v1197 = vmax.f32 %v1171, %v1075
        %v1198 = vmax.f32 %v1172, %v1076
        %v1199 = vmax.f32 %v1173, %v1077
        %v1200 = vmax.f32 %v1174, %v1078
        %v1201 = vmax.f32 %v1175, %v1079
        %v1202 = vmax.f32 %v1176, %v1080
        %v1203 = vmax.f32 %v1177, %v1081
        %v1204 = vmax.f32 %v1178, %v1082
        %vm1237 = vcmask 1041408
        %v1238 = vrot.slane %v1127, 6
        %v1239 = vrot.slane %v1128, 6
        %v1240 = vsel %vm1237, %v1238, %v1239
        %v1241 = vrot.slane %v1155, 6
        %v1242 = vrot.slane %v1156, 6
        %v1243 = vsel %vm1237, %v1241, %v1242
        %v1244 = vrot.slane %v1181, 6
        %v1245 = vrot.slane %v1182, 6
        %v1246 = vsel %vm1237, %v1244, %v1245
        %v1247 = vrot.slane %v1183, 6
        %v1248 = vrot.slane %v1184, 6
        %v1249 = vsel %vm1237, %v1247, %v1248
        %v1250 = vrot.slane %v1185, 6
        %v1251 = vrot.slane %v1186, 6
        %v1252 = vsel %vm1237, %v1250, %v1251
        %v1253 = vrot.slane %v1187, 6
        %v1254 = vrot.slane %v1188, 6
        %v1255 = vsel %vm1237, %v1253, %v1254
        %v1256 = vrot.slane %v1189, 6
        %v1257 = vrot.slane %v1190, 6
        %v1258 = vsel %vm1237, %v1256, %v1257
        %v1259 = vrot.slane %v1191, 6
        %v1260 = vrot.slane %v1192, 6
        %v1261 = vsel %vm1237, %v1259, %v1260
        %v1262 = vrot.slane %v1193, 6
        %v1263 = vrot.slane %v1194, 6
        %v1264 = vsel %vm1237, %v1262, %v1263
        %v1265 = vrot.slane %v1195, 6
        %v1266 = vrot.slane %v1196, 6
        %v1267 = vsel %vm1237, %v1265, %v1266
        %v1268 = vrot.slane %v1197, 6
        %v1269 = vrot.slane %v1198, 6
        %v1270 = vsel %vm1237, %v1268, %v1269
        %v1271 = vrot.slane %v1199, 6
        %v1272 = vrot.slane %v1200, 6
        %v1273 = vsel %vm1237, %v1271, %v1272
        %v1274 = vrot.slane %v1201, 6
        %v1275 = vrot.slane %v1202, 6
        %v1276 = vsel %vm1237, %v1274, %v1275
        %v1277 = vrot.slane %v1203, 6
        %v1278 = vrot.slane %v1204, 6
        %v1279 = vsel %vm1237, %v1277, %v1278
        %v1280 = vrot.slane %v1179, 6
        %v1281 = vrot.slane %v1180, 6
        %v1282 = vsel %vm1237, %v1280, %v1281
        %v1283 = vrot.slane %v1153, 6
        %v1284 = vrot.slane %v1154, 6
        %v1285 = vsel %vm1237, %v1283, %v1284
        %v1334 = vsel %vm1237, -inf, %v1238
        %v1335 = vsel %vm1237, -inf, %v1241
        %v1336 = vsel %vm1237, -inf, %v1244
        %v1337 = vsel %vm1237, -inf, %v1247
        %v1338 = vsel %vm1237, -inf, %v1250
        %v1339 = vsel %vm1237, -inf, %v1253
        %v1340 = vsel %vm1237, -inf, %v1256
        %v1341 = vsel %vm1237, -inf, %v1259
        %v1342 = vsel %vm1237, -inf, %v1262
        %v1343 = vsel %vm1237, -inf, %v1265
        %v1344 = vsel %vm1237, -inf, %v1268
        %v1345 = vsel %vm1237, -inf, %v1271
        %v1346 = vsel %vm1237, -inf, %v1274
        %v1347 = vsel %vm1237, -inf, %v1277
        %v1348 = vsel %vm1237, -inf, %v1280
        %v1349 = vsel %vm1237, -inf, %v1283
        %v1350 = vsel %vm1237, %v1239, -inf
        %v1351 = vsel %vm1237, %v1242, -inf
        %v1352 = vsel %vm1237, %v1245, -inf
        %v1353 = vsel %vm1237, %v1248, -inf
        %v1354 = vsel %vm1237, %v1251, -inf
        %v1355 = vsel %vm1237, %v1254, -inf
        %v1356 = vsel %vm1237, %v1257, -inf
        %v1357 = vsel %vm1237, %v1260, -inf
        %v1358 = vsel %vm1237, %v1263, -inf
        %v1359 = vsel %vm1237, %v1266, -inf
        %v1360 = vsel %vm1237, %v1269, -inf
        %v1361 = vsel %vm1237, %v1272, -inf
        %v1362 = vsel %vm1237, %v1275, -inf
        %v1363 = vsel %vm1237, %v1278, -inf
        %v1364 = vsel %vm1237, %v1281, -inf
        %v1365 = vsel %vm1237, %v1284, -inf
        %vm1398 = vcmask 1046528
        %v1399 = vrot.slane %v1334, 1
        %v1400 = vrot.slane %v1240, 1
        %v1401 = vsel %vm1398, %v1399, %v1400
        %v1402 = vrot.slane %v1350, 1
        %v1403 = vsel %vm1398, %v1400, %v1402
        %v1404 = vrot.slane %v1335, 1
        %v1405 = vrot.slane %v1243, 1
        %v1406 = vsel %vm1398, %v1404, %v1405
        %v1407 = vrot.slane %v1351, 1
        %v1408 = vsel %vm1398, %v1405, %v1407
        %v1409 = vrot.slane %v1336, 1
        %v1410 = vrot.slane %v1246, 1
        %v1411 = vsel %vm1398, %v1409, %v1410
        %v1412 = vrot.slane %v1352, 1
        %v1413 = vsel %vm1398, %v1410, %v1412
        %v1414 = vrot.slane %v1337, 1
        %v1415 = vrot.slane %v1249, 1
        %v1416 = vsel %vm1398, %v1414, %v1415
        %v1417 = vrot.slane %v1353, 1
        %v1418 = vsel %vm1398, %v1415, %v1417
        %v1419 = vrot.slane %v1338, 1
        %v1420 = vrot.slane %v1252, 1
        %v1421 = vsel %vm1398, %v1419, %v1420
        %v1422 = vrot.slane %v1354, 1
        %v1423 = vsel %vm1398, %v1420, %v1422
        %v1424 = vrot.slane %v1339, 1
        %v1425 = vrot.slane %v1255, 1
        %v1426 = vsel %vm1398, %v1424, %v1425
        %v1427 = vrot.slane %v1355, 1
        %v1428 = vsel %vm1398, %v1425, %v1427
        %v1429 = vrot.slane %v1340, 1
        %v1430 = vrot.slane %v1258, 1
        %v1431 = vsel %vm1398, %v1429, %v1430
        %v1432 = vrot.slane %v1356, 1
        %v1433 = vsel %vm1398, %v1430, %v1432
        %v1434 = vrot.slane %v1341, 1
        %v1435 = vrot.slane %v1261, 1
        %v1436 = vsel %vm1398, %v1434, %v1435
        %v1437 = vrot.slane %v1357, 1
        %v1438 = vsel %vm1398, %v1435, %v1437
        %v1439 = vrot.slane %v1342, 1
        %v1440 = vrot.slane %v1264, 1
        %v1441 = vsel %vm1398, %v1439, %v1440
        %v1442 = vrot.slane %v1358, 1
        %v1443 = vsel %vm1398, %v1440, %v1442
        %v1444 = vrot.slane %v1343, 1
        %v1445 = vrot.slane %v1267, 1
        %v1446 = vsel %vm1398, %v1444, %v1445
        %v1447 = vrot.slane %v1359, 1
        %v1448 = vsel %vm1398, %v1445, %v1447
        %v1449 = vrot.slane %v1344, 1
        %v1450 = vrot.slane %v1270, 1
        %v1451 = vsel %vm1398, %v1449, %v1450
        %v1452 = vrot.slane %v1360, 1
        %v1453 = vsel %vm1398, %v1450, %v1452
        %v1454 = vrot.slane %v1345, 1
        %v1455 = vrot.slane %v1273, 1
        %v1456 = vsel %vm1398, %v1454, %v1455
        %v1457 = vrot.slane %v1361, 1
        %v1458 = vsel %vm1398, %v1455, %v1457
        %v1459 = vrot.slane %v1346, 1
        %v1460 = vrot.slane %v1276, 1
        %v1461 = vsel %vm1398, %v1459, %v1460
        %v1462 = vrot.slane %v1362, 1
        %v1463 = vsel %vm1398, %v1460, %v1462
        %v1464 = vrot.slane %v1347, 1
        %v1465 = vrot.slane %v1279, 1
        %v1466 = vsel %vm1398, %v1464, %v1465
        %v1467 = vrot.slane %v1363, 1
        %v1468 = vsel %vm1398, %v1465, %v1467
        %v1469 = vrot.slane %v1348, 1
        %v1470 = vrot.slane %v1282, 1
        %v1471 = vsel %vm1398, %v1469, %v1470
        %v1472 = vrot.slane %v1364, 1
        %v1473 = vsel %vm1398, %v1470, %v1472
        %v1474 = vrot.slane %v1349, 1
        %v1475 = vrot.slane %v1285, 1
        %v1476 = vsel %vm1398, %v1474, %v1475
        %v1477 = vrot.slane %v1365, 1
        %v1478 = vsel %vm1398, %v1475, %v1477
        %v1511 = vmax.f32 %v1334, %v1401
        %v1512 = vmax.f32 %v1240, %v1403
        %v1513 = vmax.f32 %v1335, %v1406
        %v1514 = vmax.f32 %v1243, %v1408
        %v1515 = vmax.f32 %v1336, %v1411
        %v1516 = vmax.f32 %v1246, %v1413
        %v1517 = vmax.f32 %v1337, %v1416
        %v1518 = vmax.f32 %v1249, %v1418
        %v1519 = vmax.f32 %v1338, %v1421
        %v1520 = vmax.f32 %v1252, %v1423
        %v1521 = vmax.f32 %v1339, %v1426
        %v1522 = vmax.f32 %v1255, %v1428
        %v1523 = vmax.f32 %v1340, %v1431
        %v1524 = vmax.f32 %v1258, %v1433
        %v1525 = vmax.f32 %v1341, %v1436
        %v1526 = vmax.f32 %v1261, %v1438
        %v1527 = vmax.f32 %v1342, %v1441
        %v1528 = vmax.f32 %v1264, %v1443
        %v1529 = vmax.f32 %v1343, %v1446
        %v1530 = vmax.f32 %v1267, %v1448
        %v1531 = vmax.f32 %v1344, %v1451
        %v1532 = vmax.f32 %v1270, %v1453
        %v1533 = vmax.f32 %v1345, %v1456
        %v1534 = vmax.f32 %v1273, %v1458
        %v1535 = vmax.f32 %v1346, %v1461
        %v1536 = vmax.f32 %v1276, %v1463
        %v1537 = vmax.f32 %v1347, %v1466
        %v1538 = vmax.f32 %v1279, %v1468
        %v1539 = vmax.f32 %v1348, %v1471
        %v1540 = vmax.f32 %v1282, %v1473
        %v1541 = vmax.f32 %v1349, %v1476
        %v1542 = vmax.f32 %v1285, %v1478
        %vm1543 = vcmask 1045504
        %v1544 = vrot.slane %v1334, 2
        %v1545 = vrot.slane %v1240, 2
        %v1546 = vsel %vm1543, %v1544, %v1545
        %v1547 = vrot.slane %v1350, 2
        %v1548 = vsel %vm1543, %v1545, %v1547
        %v1549 = vrot.slane %v1335, 2
        %v1550 = vrot.slane %v1243, 2
        %v1551 = vsel %vm1543, %v1549, %v1550
        %v1552 = vrot.slane %v1351, 2
        %v1553 = vsel %vm1543, %v1550, %v1552
        %v1554 = vrot.slane %v1336, 2
        %v1555 = vrot.slane %v1246, 2
        %v1556 = vsel %vm1543, %v1554, %v1555
        %v1557 = vrot.slane %v1352, 2
        %v1558 = vsel %vm1543, %v1555, %v1557
        %v1559 = vrot.slane %v1337, 2
        %v1560 = vrot.slane %v1249, 2
        %v1561 = vsel %vm1543, %v1559, %v1560
        %v1562 = vrot.slane %v1353, 2
        %v1563 = vsel %vm1543, %v1560, %v1562
        %v1564 = vrot.slane %v1338, 2
        %v1565 = vrot.slane %v1252, 2
        %v1566 = vsel %vm1543, %v1564, %v1565
        %v1567 = vrot.slane %v1354, 2
        %v1568 = vsel %vm1543, %v1565, %v1567
        %v1569 = vrot.slane %v1339, 2
        %v1570 = vrot.slane %v1255, 2
        %v1571 = vsel %vm1543, %v1569, %v1570
        %v1572 = vrot.slane %v1355, 2
        %v1573 = vsel %vm1543, %v1570, %v1572
        %v1574 = vrot.slane %v1340, 2
        %v1575 = vrot.slane %v1258, 2
        %v1576 = vsel %vm1543, %v1574, %v1575
        %v1577 = vrot.slane %v1356, 2
        %v1578 = vsel %vm1543, %v1575, %v1577
        %v1579 = vrot.slane %v1341, 2
        %v1580 = vrot.slane %v1261, 2
        %v1581 = vsel %vm1543, %v1579, %v1580
        %v1582 = vrot.slane %v1357, 2
        %v1583 = vsel %vm1543, %v1580, %v1582
        %v1584 = vrot.slane %v1342, 2
        %v1585 = vrot.slane %v1264, 2
        %v1586 = vsel %vm1543, %v1584, %v1585
        %v1587 = vrot.slane %v1358, 2
        %v1588 = vsel %vm1543, %v1585, %v1587
        %v1589 = vrot.slane %v1343, 2
        %v1590 = vrot.slane %v1267, 2
        %v1591 = vsel %vm1543, %v1589, %v1590
        %v1592 = vrot.slane %v1359, 2
        %v1593 = vsel %vm1543, %v1590, %v1592
        %v1594 = vrot.slane %v1344, 2
        %v1595 = vrot.slane %v1270, 2
        %v1596 = vsel %vm1543, %v1594, %v1595
        %v1597 = vrot.slane %v1360, 2
        %v1598 = vsel %vm1543, %v1595, %v1597
        %v1599 = vrot.slane %v1345, 2
        %v1600 = vrot.slane %v1273, 2
        %v1601 = vsel %vm1543, %v1599, %v1600
        %v1602 = vrot.slane %v1361, 2
        %v1603 = vsel %vm1543, %v1600, %v1602
        %v1604 = vrot.slane %v1346, 2
        %v1605 = vrot.slane %v1276, 2
        %v1606 = vsel %vm1543, %v1604, %v1605
        %v1607 = vrot.slane %v1362, 2
        %v1608 = vsel %vm1543, %v1605, %v1607
        %v1609 = vrot.slane %v1347, 2
        %v1610 = vrot.slane %v1279, 2
        %v1611 = vsel %vm1543, %v1609, %v1610
        %v1612 = vrot.slane %v1363, 2
        %v1613 = vsel %vm1543, %v1610, %v1612
        %v1614 = vrot.slane %v1348, 2
        %v1615 = vrot.slane %v1282, 2
        %v1616 = vsel %vm1543, %v1614, %v1615
        %v1617 = vrot.slane %v1364, 2
        %v1618 = vsel %vm1543, %v1615, %v1617
        %v1619 = vrot.slane %v1349, 2
        %v1620 = vrot.slane %v1285, 2
        %v1621 = vsel %vm1543, %v1619, %v1620
        %v1622 = vrot.slane %v1365, 2
        %v1623 = vsel %vm1543, %v1620, %v1622
        %v1656 = vmax.f32 %v1511, %v1546
        %v1657 = vmax.f32 %v1512, %v1548
        %v1658 = vmax.f32 %v1513, %v1551
        %v1659 = vmax.f32 %v1514, %v1553
        %v1660 = vmax.f32 %v1515, %v1556
        %v1661 = vmax.f32 %v1516, %v1558
        %v1662 = vmax.f32 %v1517, %v1561
        %v1663 = vmax.f32 %v1518, %v1563
        %v1664 = vmax.f32 %v1519, %v1566
        %v1665 = vmax.f32 %v1520, %v1568
        %v1666 = vmax.f32 %v1521, %v1571
        %v1667 = vmax.f32 %v1522, %v1573
        %v1668 = vmax.f32 %v1523, %v1576
        %v1669 = vmax.f32 %v1524, %v1578
        %v1670 = vmax.f32 %v1525, %v1581
        %v1671 = vmax.f32 %v1526, %v1583
        %v1672 = vmax.f32 %v1527, %v1586
        %v1673 = vmax.f32 %v1528, %v1588
        %v1674 = vmax.f32 %v1529, %v1591
        %v1675 = vmax.f32 %v1530, %v1593
        %v1676 = vmax.f32 %v1531, %v1596
        %v1677 = vmax.f32 %v1532, %v1598
        %v1678 = vmax.f32 %v1533, %v1601
        %v1679 = vmax.f32 %v1534, %v1603
        %v1680 = vmax.f32 %v1535, %v1606
        %v1681 = vmax.f32 %v1536, %v1608
        %v1682 = vmax.f32 %v1537, %v1611
        %v1683 = vmax.f32 %v1538, %v1613
        %v1684 = vmax.f32 %v1539, %v1616
        %v1685 = vmax.f32 %v1540, %v1618
        %v1686 = vmax.f32 %v1541, %v1621
        %v1687 = vmax.f32 %v1542, %v1623
        %vm1688 = vcmask 1044480
        %v1689 = vrot.slane %v1334, 3
        %v1690 = vrot.slane %v1240, 3
        %v1691 = vsel %vm1688, %v1689, %v1690
        %v1692 = vrot.slane %v1350, 3
        %v1693 = vsel %vm1688, %v1690, %v1692
        %v1694 = vrot.slane %v1335, 3
        %v1695 = vrot.slane %v1243, 3
        %v1696 = vsel %vm1688, %v1694, %v1695
        %v1697 = vrot.slane %v1351, 3
        %v1698 = vsel %vm1688, %v1695, %v1697
        %v1699 = vrot.slane %v1336, 3
        %v1700 = vrot.slane %v1246, 3
        %v1701 = vsel %vm1688, %v1699, %v1700
        %v1702 = vrot.slane %v1352, 3
        %v1703 = vsel %vm1688, %v1700, %v1702
        %v1704 = vrot.slane %v1337, 3
        %v1705 = vrot.slane %v1249, 3
        %v1706 = vsel %vm1688, %v1704, %v1705
        %v1707 = vrot.slane %v1353, 3
        %v1708 = vsel %vm1688, %v1705, %v1707
        %v1709 = vrot.slane %v1338, 3
        %v1710 = vrot.slane %v1252, 3
        %v1711 = vsel %vm1688, %v1709, %v1710
        %v1712 = vrot.slane %v1354, 3
        %v1713 = vsel %vm1688, %v1710, %v1712
        %v1714 = vrot.slane %v1339, 3
        %v1715 = vrot.slane %v1255, 3
        %v1716 = vsel %vm1688, %v1714, %v1715
        %v1717 = vrot.slane %v1355, 3
        %v1718 = vsel %vm1688, %v1715, %v1717
        %v1719 = vrot.slane %v1340, 3
        %v1720 = vrot.slane %v1258, 3
        %v1721 = vsel %vm1688, %v1719, %v1720
        %v1722 = vrot.slane %v1356, 3
        %v1723 = vsel %vm1688, %v1720, %v1722
        %v1724 = vrot.slane %v1341, 3
        %v1725 = vrot.slane %v1261, 3
        %v1726 = vsel %vm1688, %v1724, %v1725
        %v1727 = vrot.slane %v1357, 3
        %v1728 = vsel %vm1688, %v1725, %v1727
        %v1729 = vrot.slane %v1342, 3
        %v1730 = vrot.slane %v1264, 3
        %v1731 = vsel %vm1688, %v1729, %v1730
        %v1732 = vrot.slane %v1358, 3
        %v1733 = vsel %vm1688, %v1730, %v1732
        %v1734 = vrot.slane %v1343, 3
        %v1735 = vrot.slane %v1267, 3
        %v1736 = vsel %vm1688, %v1734, %v1735
        %v1737 = vrot.slane %v1359, 3
        %v1738 = vsel %vm1688, %v1735, %v1737
        %v1739 = vrot.slane %v1344, 3
        %v1740 = vrot.slane %v1270, 3
        %v1741 = vsel %vm1688, %v1739, %v1740
        %v1742 = vrot.slane %v1360, 3
        %v1743 = vsel %vm1688, %v1740, %v1742
        %v1744 = vrot.slane %v1345, 3
        %v1745 = vrot.slane %v1273, 3
        %v1746 = vsel %vm1688, %v1744, %v1745
        %v1747 = vrot.slane %v1361, 3
        %v1748 = vsel %vm1688, %v1745, %v1747
        %v1749 = vrot.slane %v1346, 3
        %v1750 = vrot.slane %v1276, 3
        %v1751 = vsel %vm1688, %v1749, %v1750
        %v1752 = vrot.slane %v1362, 3
        %v1753 = vsel %vm1688, %v1750, %v1752
        %v1754 = vrot.slane %v1347, 3
        %v1755 = vrot.slane %v1279, 3
        %v1756 = vsel %vm1688, %v1754, %v1755
        %v1757 = vrot.slane %v1363, 3
        %v1758 = vsel %vm1688, %v1755, %v1757
        %v1759 = vrot.slane %v1348, 3
        %v1760 = vrot.slane %v1282, 3
        %v1761 = vsel %vm1688, %v1759, %v1760
        %v1762 = vrot.slane %v1364, 3
        %v1763 = vsel %vm1688, %v1760, %v1762
        %v1764 = vrot.slane %v1349, 3
        %v1765 = vrot.slane %v1285, 3
        %v1766 = vsel %vm1688, %v1764, %v1765
        %v1767 = vrot.slane %v1365, 3
        %v1768 = vsel %vm1688, %v1765, %v1767
        %v1801 = vmax.f32 %v1656, %v1691
        %v1802 = vmax.f32 %v1657, %v1693
        %v1803 = vmax.f32 %v1658, %v1696
        %v1804 = vmax.f32 %v1659, %v1698
        %v1805 = vmax.f32 %v1660, %v1701
        %v1806 = vmax.f32 %v1661, %v1703
        %v1807 = vmax.f32 %v1662, %v1706
        %v1808 = vmax.f32 %v1663, %v1708
        %v1809 = vmax.f32 %v1664, %v1711
        %v1810 = vmax.f32 %v1665, %v1713
        %v1811 = vmax.f32 %v1666, %v1716
        %v1812 = vmax.f32 %v1667, %v1718
        %v1813 = vmax.f32 %v1668, %v1721
        %v1814 = vmax.f32 %v1669, %v1723
        %v1815 = vmax.f32 %v1670, %v1726
        %v1816 = vmax.f32 %v1671, %v1728
        %v1817 = vmax.f32 %v1672, %v1731
        %v1818 = vmax.f32 %v1673, %v1733
        %v1819 = vmax.f32 %v1674, %v1736
        %v1820 = vmax.f32 %v1675, %v1738
        %v1821 = vmax.f32 %v1676, %v1741
        %v1822 = vmax.f32 %v1677, %v1743
        %v1823 = vmax.f32 %v1678, %v1746
        %v1824 = vmax.f32 %v1679, %v1748
        %v1825 = vmax.f32 %v1680, %v1751
        %v1826 = vmax.f32 %v1681, %v1753
        %v1827 = vmax.f32 %v1682, %v1756
        %v1828 = vmax.f32 %v1683, %v1758
        %v1829 = vmax.f32 %v1684, %v1761
        %v1830 = vmax.f32 %v1685, %v1763
        %v1831 = vmax.f32 %v1686, %v1766
        %v1832 = vmax.f32 %v1687, %v1768
        %vm1833 = vcmask 1043456
        %v1834 = vrot.slane %v1334, 4
        %v1835 = vrot.slane %v1240, 4
        %v1836 = vsel %vm1833, %v1834, %v1835
        %v1837 = vrot.slane %v1350, 4
        %v1838 = vsel %vm1833, %v1835, %v1837
        %v1839 = vrot.slane %v1335, 4
        %v1840 = vrot.slane %v1243, 4
        %v1841 = vsel %vm1833, %v1839, %v1840
        %v1842 = vrot.slane %v1351, 4
        %v1843 = vsel %vm1833, %v1840, %v1842
        %v1844 = vrot.slane %v1336, 4
        %v1845 = vrot.slane %v1246, 4
        %v1846 = vsel %vm1833, %v1844, %v1845
        %v1847 = vrot.slane %v1352, 4
        %v1848 = vsel %vm1833, %v1845, %v1847
        %v1849 = vrot.slane %v1337, 4
        %v1850 = vrot.slane %v1249, 4
        %v1851 = vsel %vm1833, %v1849, %v1850
        %v1852 = vrot.slane %v1353, 4
        %v1853 = vsel %vm1833, %v1850, %v1852
        %v1854 = vrot.slane %v1338, 4
        %v1855 = vrot.slane %v1252, 4
        %v1856 = vsel %vm1833, %v1854, %v1855
        %v1857 = vrot.slane %v1354, 4
        %v1858 = vsel %vm1833, %v1855, %v1857
        %v1859 = vrot.slane %v1339, 4
        %v1860 = vrot.slane %v1255, 4
        %v1861 = vsel %vm1833, %v1859, %v1860
        %v1862 = vrot.slane %v1355, 4
        %v1863 = vsel %vm1833, %v1860, %v1862
        %v1864 = vrot.slane %v1340, 4
        %v1865 = vrot.slane %v1258, 4
        %v1866 = vsel %vm1833, %v1864, %v1865
        %v1867 = vrot.slane %v1356, 4
        %v1868 = vsel %vm1833, %v1865, %v1867
        %v1869 = vrot.slane %v1341, 4
        %v1870 = vrot.slane %v1261, 4
        %v1871 = vsel %vm1833, %v1869, %v1870
        %v1872 = vrot.slane %v1357, 4
        %v1873 = vsel %vm1833, %v1870, %v1872
        %v1874 = vrot.slane %v1342, 4
        %v1875 = vrot.slane %v1264, 4
        %v1876 = vsel %vm1833, %v1874, %v1875
        %v1877 = vrot.slane %v1358, 4
        %v1878 = vsel %vm1833, %v1875, %v1877
        %v1879 = vrot.slane %v1343, 4
        %v1880 = vrot.slane %v1267, 4
        %v1881 = vsel %vm1833, %v1879, %v1880
        %v1882 = vrot.slane %v1359, 4
        %v1883 = vsel %vm1833, %v1880, %v1882
        %v1884 = vrot.slane %v1344, 4
        %v1885 = vrot.slane %v1270, 4
        %v1886 = vsel %vm1833, %v1884, %v1885
        %v1887 = vrot.slane %v1360, 4
        %v1888 = vsel %vm1833, %v1885, %v1887
        %v1889 = vrot.slane %v1345, 4
        %v1890 = vrot.slane %v1273, 4
        %v1891 = vsel %vm1833, %v1889, %v1890
        %v1892 = vrot.slane %v1361, 4
        %v1893 = vsel %vm1833, %v1890, %v1892
        %v1894 = vrot.slane %v1346, 4
        %v1895 = vrot.slane %v1276, 4
        %v1896 = vsel %vm1833, %v1894, %v1895
        %v1897 = vrot.slane %v1362, 4
        %v1898 = vsel %vm1833, %v1895, %v1897
        %v1899 = vrot.slane %v1347, 4
        %v1900 = vrot.slane %v1279, 4
        %v1901 = vsel %vm1833, %v1899, %v1900
        %v1902 = vrot.slane %v1363, 4
        %v1903 = vsel %vm1833, %v1900, %v1902
        %v1904 = vrot.slane %v1348, 4
        %v1905 = vrot.slane %v1282, 4
        %v1906 = vsel %vm1833, %v1904, %v1905
        %v1907 = vrot.slane %v1364, 4
        %v1908 = vsel %vm1833, %v1905, %v1907
        %v1909 = vrot.slane %v1349, 4
        %v1910 = vrot.slane %v1285, 4
        %v1911 = vsel %vm1833, %v1909, %v1910
        %v1912 = vrot.slane %v1365, 4
        %v1913 = vsel %vm1833, %v1910, %v1912
        %v1946 = vmax.f32 %v1801, %v1836
        %v1947 = vmax.f32 %v1802, %v1838
        %v1948 = vmax.f32 %v1803, %v1841
        %v1949 = vmax.f32 %v1804, %v1843
        %v1950 = vmax.f32 %v1805, %v1846
        %v1951 = vmax.f32 %v1806, %v1848
        %v1952 = vmax.f32 %v1807, %v1851
        %v1953 = vmax.f32 %v1808, %v1853
        %v1954 = vmax.f32 %v1809, %v1856
        %v1955 = vmax.f32 %v1810, %v1858
        %v1956 = vmax.f32 %v1811, %v1861
        %v1957 = vmax.f32 %v1812, %v1863
        %v1958 = vmax.f32 %v1813, %v1866
        %v1959 = vmax.f32 %v1814, %v1868
        %v1960 = vmax.f32 %v1815, %v1871
        %v1961 = vmax.f32 %v1816, %v1873
        %v1962 = vmax.f32 %v1817, %v1876
        %v1963 = vmax.f32 %v1818, %v1878
        %v1964 = vmax.f32 %v1819, %v1881
        %v1965 = vmax.f32 %v1820, %v1883
        %v1966 = vmax.f32 %v1821, %v1886
        %v1967 = vmax.f32 %v1822, %v1888
        %v1968 = vmax.f32 %v1823, %v1891
        %v1969 = vmax.f32 %v1824, %v1893
        %v1970 = vmax.f32 %v1825, %v1896
        %v1971 = vmax.f32 %v1826, %v1898
        %v1972 = vmax.f32 %v1827, %v1901
        %v1973 = vmax.f32 %v1828, %v1903
        %v1974 = vmax.f32 %v1829, %v1906
        %v1975 = vmax.f32 %v1830, %v1908
        %v1976 = vmax.f32 %v1831, %v1911
        %v1977 = vmax.f32 %v1832, %v1913
        %v1978 = vld [vmem:[#allocation7 + $0x80] sm:$0xff]
        %v1979 = vld [vmem:[#allocation7 + $0x88] sm:$0xff]
        %v1980 = vld [vmem:[#allocation7 + $0x90] sm:$0xff]
        %v1981 = vld [vmem:[#allocation7 + $0x98] sm:$0xff]
        %v1982 = vld [vmem:[#allocation7 + $0xa0] sm:$0xff]
        %v1983 = vld [vmem:[#allocation7 + $0xa8] sm:$0xff]
        %v1984 = vld [vmem:[#allocation7 + $0xb0] sm:$0xff]
        %v1985 = vld [vmem:[#allocation7 + $0xb8] sm:$0xff]
        %v1986 = vld [vmem:[#allocation7 + $0xc0] sm:$0xff]
        %v1987 = vld [vmem:[#allocation7 + $0xc8] sm:$0xff]
        %v1988 = vld [vmem:[#allocation7 + $0xd0] sm:$0xff]
        %v1989 = vld [vmem:[#allocation7 + $0xd8] sm:$0xff]
        %v1990 = vld [vmem:[#allocation7 + $0xe0] sm:$0xff]
        %v1991 = vld [vmem:[#allocation7 + $0xe8] sm:$0xff]
        %v1992 = vld [vmem:[#allocation7 + $0xf0] sm:$0xff]
        %v1993 = vld [vmem:[#allocation7 + $0xf8] sm:$0xff]
        %1994 = vmatpush.msra.mxu0 %v1993
        %1995 = vmatpush.msra.mxu0 %v1992
        %1996 = vmatpush.msra.mxu0 %v1991
        %1997 = vmatpush.msra.mxu0 %v1990
        %1998 = vmatpush.msra.mxu0 %v1989
        %1999 = vmatpush.msra.mxu0 %v1988
        %2000 = vmatpush.msra.mxu0 %v1987
        %2001 = vmatpush.msra.mxu0 %v1986
        %2002 = vmatpush.msra.mxu0 %v1985
        %2003 = vmatpush.msra.mxu0 %v1984
        %2004 = vmatpush.msra.mxu0 %v1983
        %2005 = vmatpush.msra.mxu0 %v1982
        %2006 = vmatpush.msra.mxu0 %v1981
        %2007 = vmatpush.msra.mxu0 %v1980
        %2008 = vmatpush.msra.mxu0 %v1979
        %2009 = vmatpush.msra.mxu0 %v1978
        %2010 = vmatmul.f32.gmra.mxu0 %v1946
        %v2011 = vpop.f32.mrf.mxu0
        %v2012 = vadd.f32 0.0, %v2011
        %2013 = vmatmul.f32.gmra.mxu0 %v1947
        %v2014 = vpop.f32.mrf.mxu0
        %v2015 = vadd.f32 0.0, %v2014
        %2016 = vmatmul.f32.gmra.mxu0 %v1948
        %v2017 = vpop.f32.mrf.mxu0
        %v2018 = vadd.f32 0.0, %v2017
        %2019 = vmatmul.f32.gmra.mxu0 %v1949
        %v2020 = vpop.f32.mrf.mxu0
        %v2021 = vadd.f32 0.0, %v2020
        %2022 = vmatmul.f32.gmra.mxu0 %v1950
        %v2023 = vpop.f32.mrf.mxu0
        %v2024 = vadd.f32 0.0, %v2023
        %2025 = vmatmul.f32.gmra.mxu0 %v1951
        %v2026 = vpop.f32.mrf.mxu0
        %v2027 = vadd.f32 0.0, %v2026
        %2028 = vmatmul.f32.gmra.mxu0 %v1952
        %v2029 = vpop.f32.mrf.mxu0
        %v2030 = vadd.f32 0.0, %v2029
        %2031 = vmatmul.f32.gmra.mxu0 %v1953
        %v2032 = vpop.f32.mrf.mxu0
        %v2033 = vadd.f32 0.0, %v2032
        %2034 = vmatmul.f32.gmra.mxu0 %v1954
        %v2035 = vpop.f32.mrf.mxu0
        %v2036 = vadd.f32 0.0, %v2035
        %2037 = vmatmul.f32.gmra.mxu0 %v1955
        %v2038 = vpop.f32.mrf.mxu0
        %v2039 = vadd.f32 0.0, %v2038
        %2040 = vmatmul.f32.gmra.mxu0 %v1956
        %v2041 = vpop.f32.mrf.mxu0
        %v2042 = vadd.f32 0.0, %v2041
        %2043 = vmatmul.f32.gmra.mxu0 %v1957
        %v2044 = vpop.f32.mrf.mxu0
        %v2045 = vadd.f32 0.0, %v2044
        %2046 = vmatmul.f32.gmra.mxu0 %v1958
        %v2047 = vpop.f32.mrf.mxu0
        %v2048 = vadd.f32 0.0, %v2047
        %2049 = vmatmul.f32.gmra.mxu0 %v1959
        %v2050 = vpop.f32.mrf.mxu0
        %v2051 = vadd.f32 0.0, %v2050
        %2052 = vmatmul.f32.gmra.mxu0 %v1960
        %v2053 = vpop.f32.mrf.mxu0
        %v2054 = vadd.f32 0.0, %v2053
        %2055 = vmatmul.f32.gmra.mxu0 %v1961
        %v2056 = vpop.f32.mrf.mxu0
        %v2057 = vadd.f32 0.0, %v2056
        %2058 = vmatmul.f32.gmra.mxu0 %v1962
        %v2059 = vpop.f32.mrf.mxu0
        %v2060 = vadd.f32 0.0, %v2059
        %2061 = vmatmul.f32.gmra.mxu0 %v1963
        %v2062 = vpop.f32.mrf.mxu0
        %v2063 = vadd.f32 0.0, %v2062
        %2064 = vmatmul.f32.gmra.mxu0 %v1964
        %v2065 = vpop.f32.mrf.mxu0
        %v2066 = vadd.f32 0.0, %v2065
        %2067 = vmatmul.f32.gmra.mxu0 %v1965
        %v2068 = vpop.f32.mrf.mxu0
        %v2069 = vadd.f32 0.0, %v2068
        %2070 = vmatmul.f32.gmra.mxu0 %v1966
        %v2071 = vpop.f32.mrf.mxu0
        %v2072 = vadd.f32 0.0, %v2071
        %2073 = vmatmul.f32.gmra.mxu0 %v1967
        %v2074 = vpop.f32.mrf.mxu0
        %v2075 = vadd.f32 0.0, %v2074
        %2076 = vmatmul.f32.gmra.mxu0 %v1968
        %v2077 = vpop.f32.mrf.mxu0
        %v2078 = vadd.f32 0.0, %v2077
        %2079 = vmatmul.f32.gmra.mxu0 %v1969
        %v2080 = vpop.f32.mrf.mxu0
        %v2081 = vadd.f32 0.0, %v2080
        %2082 = vmatmul.f32.gmra.mxu0 %v1970
        %v2083 = vpop.f32.mrf.mxu0
        %v2084 = vadd.f32 0.0, %v2083
        %2085 = vmatmul.f32.gmra.mxu0 %v1971
        %v2086 = vpop.f32.mrf.mxu0
        %v2087 = vadd.f32 0.0, %v2086
        %2088 = vmatmul.f32.gmra.mxu0 %v1972
        %v2089 = vpop.f32.mrf.mxu0
        %v2090 = vadd.f32 0.0, %v2089
        %2091 = vmatmul.f32.gmra.mxu0 %v1973
        %v2092 = vpop.f32.mrf.mxu0
        %v2093 = vadd.f32 0.0, %v2092
        %2094 = vmatmul.f32.gmra.mxu0 %v1974
        %v2095 = vpop.f32.mrf.mxu0
        %v2096 = vadd.f32 0.0, %v2095
        %2097 = vmatmul.f32.gmra.mxu0 %v1975
        %v2098 = vpop.f32.mrf.mxu0
        %v2099 = vadd.f32 0.0, %v2098
        %2100 = vmatmul.f32.gmra.mxu0 %v1976
        %v2101 = vpop.f32.mrf.mxu0
        %v2102 = vadd.f32 0.0, %v2101
        %2103 = vmatmul.f32.gmra.mxu0 %v1977
        %v2104 = vpop.f32.mrf.mxu0
        %v2105 = vadd.f32 0.0, %v2104
        %2106 = vdwg.mxu0
        %2107 = vmatpush.msra.mxu0 %v1098
        %2108 = vmatpush.msra.mxu0 %v1097
        %2109 = vmatpush.msra.mxu0 %v1096
        %2110 = vmatpush.msra.mxu0 %v1095
        %2111 = vmatpush.msra.mxu0 %v1094
        %2112 = vmatpush.msra.mxu0 %v1093
        %2113 = vmatpush.msra.mxu0 %v1092
        %2114 = vmatpush.msra.mxu0 %v1091
        %2115 = vmatpush.msra.mxu0 %v1090
        %2116 = vmatpush.msra.mxu0 %v1089
        %2117 = vmatpush.msra.mxu0 %v1088
        %2118 = vmatpush.msra.mxu0 %v1087
        %2119 = vmatpush.msra.mxu0 %v1086
        %2120 = vmatpush.msra.mxu0 %v1085
        %2121 = vmatpush.msra.mxu0 %v1084
        %2122 = vmatpush.msra.mxu0 %v1083
        %2123 = vmatmul.f32.gmra.mxu0 %v1051
        %v2124 = vpop.f32.mrf.mxu0
        %v2125 = vadd.f32 %v2012, %v2124
        %2126 = vmatmul.f32.gmra.mxu0 %v1052
        %v2127 = vpop.f32.mrf.mxu0
        %v2128 = vadd.f32 %v2015, %v2127
        %2129 = vmatmul.f32.gmra.mxu0 %v1053
        %v2130 = vpop.f32.mrf.mxu0
        %v2131 = vadd.f32 %v2018, %v2130
        %2132 = vmatmul.f32.gmra.mxu0 %v1054
        %v2133 = vpop.f32.mrf.mxu0
        %v2134 = vadd.f32 %v2021, %v2133
        %2135 = vmatmul.f32.gmra.mxu0 %v1055
        %v2136 = vpop.f32.mrf.mxu0
        %v2137 = vadd.f32 %v2024, %v2136
        %2138 = vmatmul.f32.gmra.mxu0 %v1056
        %v2139 = vpop.f32.mrf.mxu0
        %v2140 = vadd.f32 %v2027, %v2139
        %2141 = vmatmul.f32.gmra.mxu0 %v1057
        %v2142 = vpop.f32.mrf.mxu0
        %v2143 = vadd.f32 %v2030, %v2142
        %2144 = vmatmul.f32.gmra.mxu0 %v1058
        %v2145 = vpop.f32.mrf.mxu0
        %v2146 = vadd.f32 %v2033, %v2145
        %2147 = vmatmul.f32.gmra.mxu0 %v1059
        %v2148 = vpop.f32.mrf.mxu0
        %v2149 = vadd.f32 %v2036, %v2148
        %2150 = vmatmul.f32.gmra.mxu0 %v1060
        %v2151 = vpop.f32.mrf.mxu0
        %v2152 = vadd.f32 %v2039, %v2151
        %2153 = vmatmul.f32.gmra.mxu0 %v1061
        %v2154 = vpop.f32.mrf.mxu0
        %v2155 = vadd.f32 %v2042, %v2154
        %2156 = vmatmul.f32.gmra.mxu0 %v1062
        %v2157 = vpop.f32.mrf.mxu0
        %v2158 = vadd.f32 %v2045, %v2157
        %2159 = vmatmul.f32.gmra.mxu0 %v1063
        %v2160 = vpop.f32.mrf.mxu0
        %v2161 = vadd.f32 %v2048, %v2160
        %2162 = vmatmul.f32.gmra.mxu0 %v1064
        %v2163 = vpop.f32.mrf.mxu0
        %v2164 = vadd.f32 %v2051, %v2163
        %2165 = vmatmul.f32.gmra.mxu0 %v1065
        %v2166 = vpop.f32.mrf.mxu0
        %v2167 = vadd.f32 %v2054, %v2166
        %2168 = vmatmul.f32.gmra.mxu0 %v1066
        %v2169 = vpop.f32.mrf.mxu0
        %v2170 = vadd.f32 %v2057, %v2169
        %2171 = vmatmul.f32.gmra.mxu0 %v1067
        %v2172 = vpop.f32.mrf.mxu0
        %v2173 = vadd.f32 %v2060, %v2172
        %2174 = vmatmul.f32.gmra.mxu0 %v1068
        %v2175 = vpop.f32.mrf.mxu0
        %v2176 = vadd.f32 %v2063, %v2175
        %2177 = vmatmul.f32.gmra.mxu0 %v1069
        %v2178 = vpop.f32.mrf.mxu0
        %v2179 = vadd.f32 %v2066, %v2178
        %2180 = vmatmul.f32.gmra.mxu0 %v1070
        %v2181 = vpop.f32.mrf.mxu0
        %v2182 = vadd.f32 %v2069, %v2181
        %2183 = vmatmul.f32.gmra.mxu0 %v1071
        %v2184 = vpop.f32.mrf.mxu0
        %v2185 = vadd.f32 %v2072, %v2184
        %2186 = vmatmul.f32.gmra.mxu0 %v1072
        %v2187 = vpop.f32.mrf.mxu0
        %v2188 = vadd.f32 %v2075, %v2187
        %2189 = vmatmul.f32.gmra.mxu0 %v1073
        %v2190 = vpop.f32.mrf.mxu0
        %v2191 = vadd.f32 %v2078, %v2190
        %2192 = vmatmul.f32.gmra.mxu0 %v1074
        %v2193 = vpop.f32.mrf.mxu0
        %v2194 = vadd.f32 %v2081, %v2193
        %2195 = vmatmul.f32.gmra.mxu0 %v1075
        %v2196 = vpop.f32.mrf.mxu0
        %v2197 = vadd.f32 %v2084, %v2196
        %2198 = vmatmul.f32.gmra.mxu0 %v1076
        %v2199 = vpop.f32.mrf.mxu0
        %v2200 = vadd.f32 %v2087, %v2199
        %2201 = vmatmul.f32.gmra.mxu0 %v1077
        %v2202 = vpop.f32.mrf.mxu0
        %v2203 = vadd.f32 %v2090, %v2202
        %2204 = vmatmul.f32.gmra.mxu0 %v1078
        %v2205 = vpop.f32.mrf.mxu0
        %v2206 = vadd.f32 %v2093, %v2205
        %2207 = vmatmul.f32.gmra.mxu0 %v1079
        %v2208 = vpop.f32.mrf.mxu0
        %v2209 = vadd.f32 %v2096, %v2208
        %2210 = vmatmul.f32.gmra.mxu0 %v1080
        %v2211 = vpop.f32.mrf.mxu0
        %v2212 = vadd.f32 %v2099, %v2211
        %2213 = vmatmul.f32.gmra.mxu0 %v1081
        %v2214 = vpop.f32.mrf.mxu0
        %v2215 = vadd.f32 %v2102, %v2214
        %2216 = vmatmul.f32.gmra.mxu0 %v1082
        %v2217 = vpop.f32.mrf.mxu0
        %v2218 = vadd.f32 %v2105, %v2217
        %2219 = vdwg.mxu0
        %v2220 = vmax.f32 %v1946, %v1948
        %v2221 = vmax.f32 %v1947, %v1949
        %v2222 = vmax.f32 %v1948, %v1950
        %v2223 = vmax.f32 %v1949, %v1951
        %v2224 = vmax.f32 %v1950, %v1952
        %v2225 = vmax.f32 %v1951, %v1953
        %v2226 = vmax.f32 %v1952, %v1954
        %v2227 = vmax.f32 %v1953, %v1955
        %v2228 = vmax.f32 %v1954, %v1956
        %v2229 = vmax.f32 %v1955, %v1957
        %v2230 = vmax.f32 %v1956, %v1958
        %v2231 = vmax.f32 %v1957, %v1959
        %v2232 = vmax.f32 %v1958, %v1960
        %v2233 = vmax.f32 %v1959, %v1961
        %v2234 = vmax.f32 %v1960, %v1962
        %v2235 = vmax.f32 %v1961, %v1963
        %v2236 = vmax.f32 %v1962, %v1964
        %v2237 = vmax.f32 %v1963, %v1965
        %v2238 = vmax.f32 %v1964, %v1966
        %v2239 = vmax.f32 %v1965, %v1967
        %v2240 = vmax.f32 %v1966, %v1968
        %v2241 = vmax.f32 %v1967, %v1969
        %v2242 = vmax.f32 %v1968, %v1970
        %v2243 = vmax.f32 %v1969, %v1971
        %v2244 = vmax.f32 %v1970, %v1972
        %v2245 = vmax.f32 %v1971, %v1973
        %v2246 = vmax.f32 %v1972, %v1974
        %v2247 = vmax.f32 %v1973, %v1975
        %v2248 = vmax.f32 %v2220, %v1950
        %v2249 = vmax.f32 %v2221, %v1951
        %v2250 = vmax.f32 %v2222, %v1952
        %v2251 = vmax.f32 %v2223, %v1953
        %v2252 = vmax.f32 %v2224, %v1954
        %v2253 = vmax.f32 %v2225, %v1955
        %v2254 = vmax.f32 %v2226, %v1956
        %v2255 = vmax.f32 %v2227, %v1957
        %v2256 = vmax.f32 %v2228, %v1958
        %v2257 = vmax.f32 %v2229, %v1959
        %v2258 = vmax.f32 %v2230, %v1960
        %v2259 = vmax.f32 %v2231, %v1961
        %v2260 = vmax.f32 %v2232, %v1962
        %v2261 = vmax.f32 %v2233, %v1963
        %v2262 = vmax.f32 %v2234, %v1964
        %v2263 = vmax.f32 %v2235, %v1965
        %v2264 = vmax.f32 %v2236, %v1966
        %v2265 = vmax.f32 %v2237, %v1967
        %v2266 = vmax.f32 %v2238, %v1968
        %v2267 = vmax.f32 %v2239, %v1969
        %v2268 = vmax.f32 %v2240, %v1970
        %v2269 = vmax.f32 %v2241, %v1971
        %v2270 = vmax.f32 %v2242, %v1972
        %v2271 = vmax.f32 %v2243, %v1973
        %v2272 = vmax.f32 %v2244, %v1974
        %v2273 = vmax.f32 %v2245, %v1975
        %v2274 = vmax.f32 %v2246, %v1976
        %v2275 = vmax.f32 %v2247, %v1977
        %v2276 = vmax.f32 %v2248, %v1952
        %v2277 = vmax.f32 %v2249, %v1953
        %v2278 = vmax.f32 %v2250, %v1954
        %v2279 = vmax.f32 %v2251, %v1955
        %v2280 = vmax.f32 %v2252, %v1956
        %v2281 = vmax.f32 %v2253, %v1957
        %v2282 = vmax.f32 %v2254, %v1958
        %v2283 = vmax.f32 %v2255, %v1959
        %v2284 = vmax.f32 %v2256, %v1960
        %v2285 = vmax.f32 %v2257, %v1961
        %v2286 = vmax.f32 %v2258, %v1962
        %v2287 = vmax.f32 %v2259, %v1963
        %v2288 = vmax.f32 %v2260, %v1964
        %v2289 = vmax.f32 %v2261, %v1965
        %v2290 = vmax.f32 %v2262, %v1966
        %v2291 = vmax.f32 %v2263, %v1967
        %v2292 = vmax.f32 %v2264, %v1968
        %v2293 = vmax.f32 %v2265, %v1969
        %v2294 = vmax.f32 %v2266, %v1970
        %v2295 = vmax.f32 %v2267, %v1971
        %v2296 = vmax.f32 %v2268, %v1972
        %v2297 = vmax.f32 %v2269, %v1973
        %v2298 = vmax.f32 %v2270, %v1974
        %v2299 = vmax.f32 %v2271, %v1975
        %v2300 = vmax.f32 %v2272, %v1976
        %v2301 = vmax.f32 %v2273, %v1977
        %v2302 = vmax.f32 %v2276, %v1954
        %v2303 = vmax.f32 %v2277, %v1955
        %v2304 = vmax.f32 %v2278, %v1956
        %v2305 = vmax.f32 %v2279, %v1957
        %v2306 = vmax.f32 %v2280, %v1958
        %v2307 = vmax.f32 %v2281, %v1959
        %v2308 = vmax.f32 %v2282, %v1960
        %v2309 = vmax.f32 %v2283, %v1961
        %v2310 = vmax.f32 %v2284, %v1962
        %v2311 = vmax.f32 %v2285, %v1963
        %v2312 = vmax.f32 %v2286, %v1964
        %v2313 = vmax.f32 %v2287, %v1965
        %v2314 = vmax.f32 %v2288, %v1966
        %v2315 = vmax.f32 %v2289, %v1967
        %v2316 = vmax.f32 %v2290, %v1968
        %v2317 = vmax.f32 %v2291, %v1969
        %v2318 = vmax.f32 %v2292, %v1970
        %v2319 = vmax.f32 %v2293, %v1971
        %v2320 = vmax.f32 %v2294, %v1972
        %v2321 = vmax.f32 %v2295, %v1973
        %v2322 = vmax.f32 %v2296, %v1974
        %v2323 = vmax.f32 %v2297, %v1975
        %v2324 = vmax.f32 %v2298, %v1976
        %v2325 = vmax.f32 %v2299, %v1977
        %v2358 = vrot.slane %v2248, 6
        %v2359 = vrot.slane %v2249, 6
        %v2360 = vsel %vm1237, %v2358, %v2359
        %v2361 = vrot.slane %v2276, 6
        %v2362 = vrot.slane %v2277, 6
        %v2363 = vsel %vm1237, %v2361, %v2362
        %v2364 = vrot.slane %v2302, 6
        %v2365 = vrot.slane %v2303, 6
        %v2366 = vsel %vm1237, %v2364, %v2365
        %v2367 = vrot.slane %v2304, 6
        %v2368 = vrot.slane %v2305, 6
        %v2369 = vsel %vm1237, %v2367, %v2368
        %v2370 = vrot.slane %v2306, 6
        %v2371 = vrot.slane %v2307, 6
        %v2372 = vsel %vm1237, %v2370, %v2371
        %v2373 = vrot.slane %v2308, 6
        %v2374 = vrot.slane %v2309, 6
        %v2375 = vsel %vm1237, %v2373, %v2374
        %v2376 = vrot.slane %v2310, 6
        %v2377 = vrot.slane %v2311, 6
        %v2378 = vsel %vm1237, %v2376, %v2377
        %v2379 = vrot.slane %v2312, 6
        %v2380 = vrot.slane %v2313, 6
        %v2381 = vsel %vm1237, %v2379, %v2380
        %v2382 = vrot.slane %v2314, 6
        %v2383 = vrot.slane %v2315, 6
        %v2384 = vsel %vm1237, %v2382, %v2383
        %v2385 = vrot.slane %v2316, 6
        %v2386 = vrot.slane %v2317, 6
        %v2387 = vsel %vm1237, %v2385, %v2386
        %v2388 = vrot.slane %v2318, 6
        %v2389 = vrot.slane %v2319, 6
        %v2390 = vsel %vm1237, %v2388, %v2389
        %v2391 = vrot.slane %v2320, 6
        %v2392 = vrot.slane %v2321, 6
        %v2393 = vsel %vm1237, %v2391, %v2392
        %v2394 = vrot.slane %v2322, 6
        %v2395 = vrot.slane %v2323, 6
        %v2396 = vsel %vm1237, %v2394, %v2395
        %v2397 = vrot.slane %v2324, 6
        %v2398 = vrot.slane %v2325, 6
        %v2399 = vsel %vm1237, %v2397, %v2398
        %v2400 = vrot.slane %v2300, 6
        %v2401 = vrot.slane %v2301, 6
        %v2402 = vsel %vm1237, %v2400, %v2401
        %v2403 = vrot.slane %v2274, 6
        %v2404 = vrot.slane %v2275, 6
        %v2405 = vsel %vm1237, %v2403, %v2404
        %v2454 = vsel %vm1237, -inf, %v2358
        %v2455 = vsel %vm1237, -inf, %v2361
        %v2456 = vsel %vm1237, -inf, %v2364
        %v2457 = vsel %vm1237, -inf, %v2367
        %v2458 = vsel %vm1237, -inf, %v2370
        %v2459 = vsel %vm1237, -inf, %v2373
        %v2460 = vsel %vm1237, -inf, %v2376
        %v2461 = vsel %vm1237, -inf, %v2379
        %v2462 = vsel %vm1237, -inf, %v2382
        %v2463 = vsel %vm1237, -inf, %v2385
        %v2464 = vsel %vm1237, -inf, %v2388
        %v2465 = vsel %vm1237, -inf, %v2391
        %v2466 = vsel %vm1237, -inf, %v2394
        %v2467 = vsel %vm1237, -inf, %v2397
        %v2468 = vsel %vm1237, -inf, %v2400
        %v2469 = vsel %vm1237, -inf, %v2403
        %v2470 = vsel %vm1237, %v2359, -inf
        %v2471 = vsel %vm1237, %v2362, -inf
        %v2472 = vsel %vm1237, %v2365, -inf
        %v2473 = vsel %vm1237, %v2368, -inf
        %v2474 = vsel %vm1237, %v2371, -inf
        %v2475 = vsel %vm1237, %v2374, -inf
        %v2476 = vsel %vm1237, %v2377, -inf
        %v2477 = vsel %vm1237, %v2380, -inf
        %v2478 = vsel %vm1237, %v2383, -inf
        %v2479 = vsel %vm1237, %v2386, -inf
        %v2480 = vsel %vm1237, %v2389, -inf
        %v2481 = vsel %vm1237, %v2392, -inf
        %v2482 = vsel %vm1237, %v2395, -inf
        %v2483 = vsel %vm1237, %v2398, -inf
        %v2484 = vsel %vm1237, %v2401, -inf
        %v2485 = vsel %vm1237, %v2404, -inf
        %v2518 = vrot.slane %v2454, 1
        %v2519 = vrot.slane %v2360, 1
        %v2520 = vsel %vm1398, %v2518, %v2519
        %v2521 = vrot.slane %v2470, 1
        %v2522 = vsel %vm1398, %v2519, %v2521
        %v2523 = vrot.slane %v2455, 1
        %v2524 = vrot.slane %v2363, 1
        %v2525 = vsel %vm1398, %v2523, %v2524
        %v2526 = vrot.slane %v2471, 1
        %v2527 = vsel %vm1398, %v2524, %v2526
        %v2528 = vrot.slane %v2456, 1
        %v2529 = vrot.slane %v2366, 1
        %v2530 = vsel %vm1398, %v2528, %v2529
        %v2531 = vrot.slane %v2472, 1
        %v2532 = vsel %vm1398, %v2529, %v2531
        %v2533 = vrot.slane %v2457, 1
        %v2534 = vrot.slane %v2369, 1
        %v2535 = vsel %vm1398, %v2533, %v2534
        %v2536 = vrot.slane %v2473, 1
        %v2537 = vsel %vm1398, %v2534, %v2536
        %v2538 = vrot.slane %v2458, 1
        %v2539 = vrot.slane %v2372, 1
        %v2540 = vsel %vm1398, %v2538, %v2539
        %v2541 = vrot.slane %v2474, 1
        %v2542 = vsel %vm1398, %v2539, %v2541
        %v2543 = vrot.slane %v2459, 1
        %v2544 = vrot.slane %v2375, 1
        %v2545 = vsel %vm1398, %v2543, %v2544
        %v2546 = vrot.slane %v2475, 1
        %v2547 = vsel %vm1398, %v2544, %v2546
        %v2548 = vrot.slane %v2460, 1
        %v2549 = vrot.slane %v2378, 1
        %v2550 = vsel %vm1398, %v2548, %v2549
        %v2551 = vrot.slane %v2476, 1
        %v2552 = vsel %vm1398, %v2549, %v2551
        %v2553 = vrot.slane %v2461, 1
        %v2554 = vrot.slane %v2381, 1
        %v2555 = vsel %vm1398, %v2553, %v2554
        %v2556 = vrot.slane %v2477, 1
        %v2557 = vsel %vm1398, %v2554, %v2556
        %v2558 = vrot.slane %v2462, 1
        %v2559 = vrot.slane %v2384, 1
        %v2560 = vsel %vm1398, %v2558, %v2559
        %v2561 = vrot.slane %v2478, 1
        %v2562 = vsel %vm1398, %v2559, %v2561
        %v2563 = vrot.slane %v2463, 1
        %v2564 = vrot.slane %v2387, 1
        %v2565 = vsel %vm1398, %v2563, %v2564
        %v2566 = vrot.slane %v2479, 1
        %v2567 = vsel %vm1398, %v2564, %v2566
        %v2568 = vrot.slane %v2464, 1
        %v2569 = vrot.slane %v2390, 1
        %v2570 = vsel %vm1398, %v2568, %v2569
        %v2571 = vrot.slane %v2480, 1
        %v2572 = vsel %vm1398, %v2569, %v2571
        %v2573 = vrot.slane %v2465, 1
        %v2574 = vrot.slane %v2393, 1
        %v2575 = vsel %vm1398, %v2573, %v2574
        %v2576 = vrot.slane %v2481, 1
        %v2577 = vsel %vm1398, %v2574, %v2576
        %v2578 = vrot.slane %v2466, 1
        %v2579 = vrot.slane %v2396, 1
        %v2580 = vsel %vm1398, %v2578, %v2579
        %v2581 = vrot.slane %v2482, 1
        %v2582 = vsel %vm1398, %v2579, %v2581
        %v2583 = vrot.slane %v2467, 1
        %v2584 = vrot.slane %v2399, 1
        %v2585 = vsel %vm1398, %v2583, %v2584
        %v2586 = vrot.slane %v2483, 1
        %v2587 = vsel %vm1398, %v2584, %v2586
        %v2588 = vrot.slane %v2468, 1
        %v2589 = vrot.slane %v2402, 1
        %v2590 = vsel %vm1398, %v2588, %v2589
        %v2591 = vrot.slane %v2484, 1
        %v2592 = vsel %vm1398, %v2589, %v2591
        %v2593 = vrot.slane %v2469, 1
        %v2594 = vrot.slane %v2405, 1
        %v2595 = vsel %vm1398, %v2593, %v2594
        %v2596 = vrot.slane %v2485, 1
        %v2597 = vsel %vm1398, %v2594, %v2596
        %v2630 = vmax.f32 %v2454, %v2520
        %v2631 = vmax.f32 %v2360, %v2522
        %v2632 = vmax.f32 %v2455, %v2525
        %v2633 = vmax.f32 %v2363, %v2527
        %v2634 = vmax.f32 %v2456, %v2530
        %v2635 = vmax.f32 %v2366, %v2532
        %v2636 = vmax.f32 %v2457, %v2535
        %v2637 = vmax.f32 %v2369, %v2537
        %v2638 = vmax.f32 %v2458, %v2540
        %v2639 = vmax.f32 %v2372, %v2542
        %v2640 = vmax.f32 %v2459, %v2545
        %v2641 = vmax.f32 %v2375, %v2547
        %v2642 = vmax.f32 %v2460, %v2550
        %v2643 = vmax.f32 %v2378, %v2552
        %v2644 = vmax.f32 %v2461, %v2555
        %v2645 = vmax.f32 %v2381, %v2557
        %v2646 = vmax.f32 %v2462, %v2560
        %v2647 = vmax.f32 %v2384, %v2562
        %v2648 = vmax.f32 %v2463, %v2565
        %v2649 = vmax.f32 %v2387, %v2567
        %v2650 = vmax.f32 %v2464, %v2570
        %v2651 = vmax.f32 %v2390, %v2572
        %v2652 = vmax.f32 %v2465, %v2575
        %v2653 = vmax.f32 %v2393, %v2577
        %v2654 = vmax.f32 %v2466, %v2580
        %v2655 = vmax.f32 %v2396, %v2582
        %v2656 = vmax.f32 %v2467, %v2585
        %v2657 = vmax.f32 %v2399, %v2587
        %v2658 = vmax.f32 %v2468, %v2590
        %v2659 = vmax.f32 %v2402, %v2592
        %v2660 = vmax.f32 %v2469, %v2595
        %v2661 = vmax.f32 %v2405, %v2597
        %v2662 = vrot.slane %v2454, 2
        %v2663 = vrot.slane %v2360, 2
        %v2664 = vsel %vm1543, %v2662, %v2663
        %v2665 = vrot.slane %v2470, 2
        %v2666 = vsel %vm1543, %v2663, %v2665
        %v2667 = vrot.slane %v2455, 2
        %v2668 = vrot.slane %v2363, 2
        %v2669 = vsel %vm1543, %v2667, %v2668
        %v2670 = vrot.slane %v2471, 2
        %v2671 = vsel %vm1543, %v2668, %v2670
        %v2672 = vrot.slane %v2456, 2
        %v2673 = vrot.slane %v2366, 2
        %v2674 = vsel %vm1543, %v2672, %v2673
        %v2675 = vrot.slane %v2472, 2
        %v2676 = vsel %vm1543, %v2673, %v2675
        %v2677 = vrot.slane %v2457, 2
        %v2678 = vrot.slane %v2369, 2
        %v2679 = vsel %vm1543, %v2677, %v2678
        %v2680 = vrot.slane %v2473, 2
        %v2681 = vsel %vm1543, %v2678, %v2680
        %v2682 = vrot.slane %v2458, 2
        %v2683 = vrot.slane %v2372, 2
        %v2684 = vsel %vm1543, %v2682, %v2683
        %v2685 = vrot.slane %v2474, 2
        %v2686 = vsel %vm1543, %v2683, %v2685
        %v2687 = vrot.slane %v2459, 2
        %v2688 = vrot.slane %v2375, 2
        %v2689 = vsel %vm1543, %v2687, %v2688
        %v2690 = vrot.slane %v2475, 2
        %v2691 = vsel %vm1543, %v2688, %v2690
        %v2692 = vrot.slane %v2460, 2
        %v2693 = vrot.slane %v2378, 2
        %v2694 = vsel %vm1543, %v2692, %v2693
        %v2695 = vrot.slane %v2476, 2
        %v2696 = vsel %vm1543, %v2693, %v2695
        %v2697 = vrot.slane %v2461, 2
        %v2698 = vrot.slane %v2381, 2
        %v2699 = vsel %vm1543, %v2697, %v2698
        %v2700 = vrot.slane %v2477, 2
        %v2701 = vsel %vm1543, %v2698, %v2700
        %v2702 = vrot.slane %v2462, 2
        %v2703 = vrot.slane %v2384, 2
        %v2704 = vsel %vm1543, %v2702, %v2703
        %v2705 = vrot.slane %v2478, 2
        %v2706 = vsel %vm1543, %v2703, %v2705
        %v2707 = vrot.slane %v2463, 2
        %v2708 = vrot.slane %v2387, 2
        %v2709 = vsel %vm1543, %v2707, %v2708
        %v2710 = vrot.slane %v2479, 2
        %v2711 = vsel %vm1543, %v2708, %v2710
        %v2712 = vrot.slane %v2464, 2
        %v2713 = vrot.slane %v2390, 2
        %v2714 = vsel %vm1543, %v2712, %v2713
        %v2715 = vrot.slane %v2480, 2
        %v2716 = vsel %vm1543, %v2713, %v2715
        %v2717 = vrot.slane %v2465, 2
        %v2718 = vrot.slane %v2393, 2
        %v2719 = vsel %vm1543, %v2717, %v2718
        %v2720 = vrot.slane %v2481, 2
        %v2721 = vsel %vm1543, %v2718, %v2720
        %v2722 = vrot.slane %v2466, 2
        %v2723 = vrot.slane %v2396, 2
        %v2724 = vsel %vm1543, %v2722, %v2723
        %v2725 = vrot.slane %v2482, 2
        %v2726 = vsel %vm1543, %v2723, %v2725
        %v2727 = vrot.slane %v2467, 2
        %v2728 = vrot.slane %v2399, 2
        %v2729 = vsel %vm1543, %v2727, %v2728
        %v2730 = vrot.slane %v2483, 2
        %v2731 = vsel %vm1543, %v2728, %v2730
        %v2732 = vrot.slane %v2468, 2
        %v2733 = vrot.slane %v2402, 2
        %v2734 = vsel %vm1543, %v2732, %v2733
        %v2735 = vrot.slane %v2484, 2
        %v2736 = vsel %vm1543, %v2733, %v2735
        %v2737 = vrot.slane %v2469, 2
        %v2738 = vrot.slane %v2405, 2
        %v2739 = vsel %vm1543, %v2737, %v2738
        %v2740 = vrot.slane %v2485, 2
        %v2741 = vsel %vm1543, %v2738, %v2740
        %v2774 = vmax.f32 %v2630, %v2664
        %v2775 = vmax.f32 %v2631, %v2666
        %v2776 = vmax.f32 %v2632, %v2669
        %v2777 = vmax.f32 %v2633, %v2671
        %v2778 = vmax.f32 %v2634, %v2674
        %v2779 = vmax.f32 %v2635, %v2676
        %v2780 = vmax.f32 %v2636, %v2679
        %v2781 = vmax.f32 %v2637, %v2681
        %v2782 = vmax.f32 %v2638, %v2684
        %v2783 = vmax.f32 %v2639, %v2686
        %v2784 = vmax.f32 %v2640, %v2689
        %v2785 = vmax.f32 %v2641, %v2691
        %v2786 = vmax.f32 %v2642, %v2694
        %v2787 = vmax.f32 %v2643, %v2696
        %v2788 = vmax.f32 %v2644, %v2699
        %v2789 = vmax.f32 %v2645, %v2701
        %v2790 = vmax.f32 %v2646, %v2704
        %v2791 = vmax.f32 %v2647, %v2706
        %v2792 = vmax.f32 %v2648, %v2709
        %v2793 = vmax.f32 %v2649, %v2711
        %v2794 = vmax.f32 %v2650, %v2714
        %v2795 = vmax.f32 %v2651, %v2716
        %v2796 = vmax.f32 %v2652, %v2719
        %v2797 = vmax.f32 %v2653, %v2721
        %v2798 = vmax.f32 %v2654, %v2724
        %v2799 = vmax.f32 %v2655, %v2726
        %v2800 = vmax.f32 %v2656, %v2729
        %v2801 = vmax.f32 %v2657, %v2731
        %v2802 = vmax.f32 %v2658, %v2734
        %v2803 = vmax.f32 %v2659, %v2736
        %v2804 = vmax.f32 %v2660, %v2739
        %v2805 = vmax.f32 %v2661, %v2741
        %v2806 = vrot.slane %v2454, 3
        %v2807 = vrot.slane %v2360, 3
        %v2808 = vsel %vm1688, %v2806, %v2807
        %v2809 = vrot.slane %v2470, 3
        %v2810 = vsel %vm1688, %v2807, %v2809
        %v2811 = vrot.slane %v2455, 3
        %v2812 = vrot.slane %v2363, 3
        %v2813 = vsel %vm1688, %v2811, %v2812
        %v2814 = vrot.slane %v2471, 3
        %v2815 = vsel %vm1688, %v2812, %v2814
        %v2816 = vrot.slane %v2456, 3
        %v2817 = vrot.slane %v2366, 3
        %v2818 = vsel %vm1688, %v2816, %v2817
        %v2819 = vrot.slane %v2472, 3
        %v2820 = vsel %vm1688, %v2817, %v2819
        %v2821 = vrot.slane %v2457, 3
        %v2822 = vrot.slane %v2369, 3
        %v2823 = vsel %vm1688, %v2821, %v2822
        %v2824 = vrot.slane %v2473, 3
        %v2825 = vsel %vm1688, %v2822, %v2824
        %v2826 = vrot.slane %v2458, 3
        %v2827 = vrot.slane %v2372, 3
        %v2828 = vsel %vm1688, %v2826, %v2827
        %v2829 = vrot.slane %v2474, 3
        %v2830 = vsel %vm1688, %v2827, %v2829
        %v2831 = vrot.slane %v2459, 3
        %v2832 = vrot.slane %v2375, 3
        %v2833 = vsel %vm1688, %v2831, %v2832
        %v2834 = vrot.slane %v2475, 3
        %v2835 = vsel %vm1688, %v2832, %v2834
        %v2836 = vrot.slane %v2460, 3
        %v2837 = vrot.slane %v2378, 3
        %v2838 = vsel %vm1688, %v2836, %v2837
        %v2839 = vrot.slane %v2476, 3
        %v2840 = vsel %vm1688, %v2837, %v2839
        %v2841 = vrot.slane %v2461, 3
        %v2842 = vrot.slane %v2381, 3
        %v2843 = vsel %vm1688, %v2841, %v2842
        %v2844 = vrot.slane %v2477, 3
        %v2845 = vsel %vm1688, %v2842, %v2844
        %v2846 = vrot.slane %v2462, 3
        %v2847 = vrot.slane %v2384, 3
        %v2848 = vsel %vm1688, %v2846, %v2847
        %v2849 = vrot.slane %v2478, 3
        %v2850 = vsel %vm1688, %v2847, %v2849
        %v2851 = vrot.slane %v2463, 3
        %v2852 = vrot.slane %v2387, 3
        %v2853 = vsel %vm1688, %v2851, %v2852
        %v2854 = vrot.slane %v2479, 3
        %v2855 = vsel %vm1688, %v2852, %v2854
        %v2856 = vrot.slane %v2464, 3
        %v2857 = vrot.slane %v2390, 3
        %v2858 = vsel %vm1688, %v2856, %v2857
        %v2859 = vrot.slane %v2480, 3
        %v2860 = vsel %vm1688, %v2857, %v2859
        %v2861 = vrot.slane %v2465, 3
        %v2862 = vrot.slane %v2393, 3
        %v2863 = vsel %vm1688, %v2861, %v2862
        %v2864 = vrot.slane %v2481, 3
        %v2865 = vsel %vm1688, %v2862, %v2864
        %v2866 = vrot.slane %v2466, 3
        %v2867 = vrot.slane %v2396, 3
        %v2868 = vsel %vm1688, %v2866, %v2867
        %v2869 = vrot.slane %v2482, 3
        %v2870 = vsel %vm1688, %v2867, %v2869
        %v2871 = vrot.slane %v2467, 3
        %v2872 = vrot.slane %v2399, 3
        %v2873 = vsel %vm1688, %v2871, %v2872
        %v2874 = vrot.slane %v2483, 3
        %v2875 = vsel %vm1688, %v2872, %v2874
        %v2876 = vrot.slane %v2468, 3
        %v2877 = vrot.slane %v2402, 3
        %v2878 = vsel %vm1688, %v2876, %v2877
        %v2879 = vrot.slane %v2484, 3
        %v2880 = vsel %vm1688, %v2877, %v2879
        %v2881 = vrot.slane %v2469, 3
        %v2882 = vrot.slane %v2405, 3
        %v2883 = vsel %vm1688, %v2881, %v2882
        %v2884 = vrot.slane %v2485, 3
        %v2885 = vsel %vm1688, %v2882, %v2884
        %v2918 = vmax.f32 %v2774, %v2808
        %v2919 = vmax.f32 %v2775, %v2810
        %v2920 = vmax.f32 %v2776, %v2813
        %v2921 = vmax.f32 %v2777, %v2815
        %v2922 = vmax.f32 %v2778, %v2818
        %v2923 = vmax.f32 %v2779, %v2820
        %v2924 = vmax.f32 %v2780, %v2823
        %v2925 = vmax.f32 %v2781, %v2825
        %v2926 = vmax.f32 %v2782, %v2828
        %v2927 = vmax.f32 %v2783, %v2830
        %v2928 = vmax.f32 %v2784, %v2833
        %v2929 = vmax.f32 %v2785, %v2835
        %v2930 = vmax.f32 %v2786, %v2838
        %v2931 = vmax.f32 %v2787, %v2840
        %v2932 = vmax.f32 %v2788, %v2843
        %v2933 = vmax.f32 %v2789, %v2845
        %v2934 = vmax.f32 %v2790, %v2848
        %v2935 = vmax.f32 %v2791, %v2850
        %v2936 = vmax.f32 %v2792, %v2853
        %v2937 = vmax.f32 %v2793, %v2855
        %v2938 = vmax.f32 %v2794, %v2858
        %v2939 = vmax.f32 %v2795, %v2860
        %v2940 = vmax.f32 %v2796, %v2863
        %v2941 = vmax.f32 %v2797, %v2865
        %v2942 = vmax.f32 %v2798, %v2868
        %v2943 = vmax.f32 %v2799, %v2870
        %v2944 = vmax.f32 %v2800, %v2873
        %v2945 = vmax.f32 %v2801, %v2875
        %v2946 = vmax.f32 %v2802, %v2878
        %v2947 = vmax.f32 %v2803, %v2880
        %v2948 = vmax.f32 %v2804, %v2883
        %v2949 = vmax.f32 %v2805, %v2885
        %v2950 = vrot.slane %v2454, 4
        %v2951 = vrot.slane %v2360, 4
        %v2952 = vsel %vm1833, %v2950, %v2951
        %v2953 = vrot.slane %v2470, 4
        %v2954 = vsel %vm1833, %v2951, %v2953
        %v2955 = vrot.slane %v2455, 4
        %v2956 = vrot.slane %v2363, 4
        %v2957 = vsel %vm1833, %v2955, %v2956
        %v2958 = vrot.slane %v2471, 4
        %v2959 = vsel %vm1833, %v2956, %v2958
        %v2960 = vrot.slane %v2456, 4
        %v2961 = vrot.slane %v2366, 4
        %v2962 = vsel %vm1833, %v2960, %v2961
        %v2963 = vrot.slane %v2472, 4
        %v2964 = vsel %vm1833, %v2961, %v2963
        %v2965 = vrot.slane %v2457, 4
        %v2966 = vrot.slane %v2369, 4
        %v2967 = vsel %vm1833, %v2965, %v2966
        %v2968 = vrot.slane %v2473, 4
        %v2969 = vsel %vm1833, %v2966, %v2968
        %v2970 = vrot.slane %v2458, 4
        %v2971 = vrot.slane %v2372, 4
        %v2972 = vsel %vm1833, %v2970, %v2971
        %v2973 = vrot.slane %v2474, 4
        %v2974 = vsel %vm1833, %v2971, %v2973
        %v2975 = vrot.slane %v2459, 4
        %v2976 = vrot.slane %v2375, 4
        %v2977 = vsel %vm1833, %v2975, %v2976
        %v2978 = vrot.slane %v2475, 4
        %v2979 = vsel %vm1833, %v2976, %v2978
        %v2980 = vrot.slane %v2460, 4
        %v2981 = vrot.slane %v2378, 4
        %v2982 = vsel %vm1833, %v2980, %v2981
        %v2983 = vrot.slane %v2476, 4
        %v2984 = vsel %vm1833, %v2981, %v2983
        %v2985 = vrot.slane %v2461, 4
        %v2986 = vrot.slane %v2381, 4
        %v2987 = vsel %vm1833, %v2985, %v2986
        %v2988 = vrot.slane %v2477, 4
        %v2989 = vsel %vm1833, %v2986, %v2988
        %v2990 = vrot.slane %v2462, 4
        %v2991 = vrot.slane %v2384, 4
        %v2992 = vsel %vm1833, %v2990, %v2991
        %v2993 = vrot.slane %v2478, 4
        %v2994 = vsel %vm1833, %v2991, %v2993
        %v2995 = vrot.slane %v2463, 4
        %v2996 = vrot.slane %v2387, 4
        %v2997 = vsel %vm1833, %v2995, %v2996
        %v2998 = vrot.slane %v2479, 4
        %v2999 = vsel %vm1833, %v2996, %v2998
        %v3000 = vrot.slane %v2464, 4
        %v3001 = vrot.slane %v2390, 4
        %v3002 = vsel %vm1833, %v3000, %v3001
        %v3003 = vrot.slane %v2480, 4
        %v3004 = vsel %vm1833, %v3001, %v3003
        %v3005 = vrot.slane %v2465, 4
        %v3006 = vrot.slane %v2393, 4
        %v3007 = vsel %vm1833, %v3005, %v3006
        %v3008 = vrot.slane %v2481, 4
        %v3009 = vsel %vm1833, %v3006, %v3008
        %v3010 = vrot.slane %v2466, 4
        %v3011 = vrot.slane %v2396, 4
        %v3012 = vsel %vm1833, %v3010, %v3011
        %v3013 = vrot.slane %v2482, 4
        %v3014 = vsel %vm1833, %v3011, %v3013
        %v3015 = vrot.slane %v2467, 4
        %v3016 = vrot.slane %v2399, 4
        %v3017 = vsel %vm1833, %v3015, %v3016
        %v3018 = vrot.slane %v2483, 4
        %v3019 = vsel %vm1833, %v3016, %v3018
        %v3020 = vrot.slane %v2468, 4
        %v3021 = vrot.slane %v2402, 4
        %v3022 = vsel %vm1833, %v3020, %v3021
        %v3023 = vrot.slane %v2484, 4
        %v3024 = vsel %vm1833, %v3021, %v3023
        %v3025 = vrot.slane %v2469, 4
        %v3026 = vrot.slane %v2405, 4
        %v3027 = vsel %vm1833, %v3025, %v3026
        %v3028 = vrot.slane %v2485, 4
        %v3029 = vsel %vm1833, %v3026, %v3028
        %v3062 = vmax.f32 %v2918, %v2952
        %v3063 = vmax.f32 %v2919, %v2954
        %v3064 = vmax.f32 %v2920, %v2957
        %v3065 = vmax.f32 %v2921, %v2959
        %v3066 = vmax.f32 %v2922, %v2962
        %v3067 = vmax.f32 %v2923, %v2964
        %v3068 = vmax.f32 %v2924, %v2967
        %v3069 = vmax.f32 %v2925, %v2969
        %v3070 = vmax.f32 %v2926, %v2972
        %v3071 = vmax.f32 %v2927, %v2974
        %v3072 = vmax.f32 %v2928, %v2977
        %v3073 = vmax.f32 %v2929, %v2979
        %v3074 = vmax.f32 %v2930, %v2982
        %v3075 = vmax.f32 %v2931, %v2984
        %v3076 = vmax.f32 %v2932, %v2987
        %v3077 = vmax.f32 %v2933, %v2989
        %v3078 = vmax.f32 %v2934, %v2992
        %v3079 = vmax.f32 %v2935, %v2994
        %v3080 = vmax.f32 %v2936, %v2997
        %v3081 = vmax.f32 %v2937, %v2999
        %v3082 = vmax.f32 %v2938, %v3002
        %v3083 = vmax.f32 %v2939, %v3004
        %v3084 = vmax.f32 %v2940, %v3007
        %v3085 = vmax.f32 %v2941, %v3009
        %v3086 = vmax.f32 %v2942, %v3012
        %v3087 = vmax.f32 %v2943, %v3014
        %v3088 = vmax.f32 %v2944, %v3017
        %v3089 = vmax.f32 %v2945, %v3019
        %v3090 = vmax.f32 %v2946, %v3022
        %v3091 = vmax.f32 %v2947, %v3024
        %v3092 = vmax.f32 %v2948, %v3027
        %v3093 = vmax.f32 %v2949, %v3029
        %v3094 = vld [vmem:[#allocation7 + $0x100] sm:$0xff]
        %v3095 = vld [vmem:[#allocation7 + $0x108] sm:$0xff]
        %v3096 = vld [vmem:[#allocation7 + $0x110] sm:$0xff]
        %v3097 = vld [vmem:[#allocation7 + $0x118] sm:$0xff]
        %v3098 = vld [vmem:[#allocation7 + $0x120] sm:$0xff]
        %v3099 = vld [vmem:[#allocation7 + $0x128] sm:$0xff]
        %v3100 = vld [vmem:[#allocation7 + $0x130] sm:$0xff]
        %v3101 = vld [vmem:[#allocation7 + $0x138] sm:$0xff]
        %v3102 = vld [vmem:[#allocation7 + $0x140] sm:$0xff]
        %v3103 = vld [vmem:[#allocation7 + $0x148] sm:$0xff]
        %v3104 = vld [vmem:[#allocation7 + $0x150] sm:$0xff]
        %v3105 = vld [vmem:[#allocation7 + $0x158] sm:$0xff]
        %v3106 = vld [vmem:[#allocation7 + $0x160] sm:$0xff]
        %v3107 = vld [vmem:[#allocation7 + $0x168] sm:$0xff]
        %v3108 = vld [vmem:[#allocation7 + $0x170] sm:$0xff]
        %v3109 = vld [vmem:[#allocation7 + $0x178] sm:$0xff]
        %3110 = vmatpush.msra.mxu0 %v3109
        %3111 = vmatpush.msra.mxu0 %v3108
        %3112 = vmatpush.msra.mxu0 %v3107
        %3113 = vmatpush.msra.mxu0 %v3106
        %3114 = vmatpush.msra.mxu0 %v3105
        %3115 = vmatpush.msra.mxu0 %v3104
        %3116 = vmatpush.msra.mxu0 %v3103
        %3117 = vmatpush.msra.mxu0 %v3102
        %3118 = vmatpush.msra.mxu0 %v3101
        %3119 = vmatpush.msra.mxu0 %v3100
        %3120 = vmatpush.msra.mxu0 %v3099
        %3121 = vmatpush.msra.mxu0 %v3098
        %3122 = vmatpush.msra.mxu0 %v3097
        %3123 = vmatpush.msra.mxu0 %v3096
        %3124 = vmatpush.msra.mxu0 %v3095
        %3125 = vmatpush.msra.mxu0 %v3094
        %3126 = vmatmul.f32.gmra.mxu0 %v3062
        %v3127 = vpop.f32.mrf.mxu0
        %v3128 = vadd.f32 0.0, %v3127
        %3129 = vmatmul.f32.gmra.mxu0 %v3063
        %v3130 = vpop.f32.mrf.mxu0
        %v3131 = vadd.f32 0.0, %v3130
        %3132 = vmatmul.f32.gmra.mxu0 %v3064
        %v3133 = vpop.f32.mrf.mxu0
        %v3134 = vadd.f32 0.0, %v3133
        %3135 = vmatmul.f32.gmra.mxu0 %v3065
        %v3136 = vpop.f32.mrf.mxu0
        %v3137 = vadd.f32 0.0, %v3136
        %3138 = vmatmul.f32.gmra.mxu0 %v3066
        %v3139 = vpop.f32.mrf.mxu0
        %v3140 = vadd.f32 0.0, %v3139
        %3141 = vmatmul.f32.gmra.mxu0 %v3067
        %v3142 = vpop.f32.mrf.mxu0
        %v3143 = vadd.f32 0.0, %v3142
        %3144 = vmatmul.f32.gmra.mxu0 %v3068
        %v3145 = vpop.f32.mrf.mxu0
        %v3146 = vadd.f32 0.0, %v3145
        %3147 = vmatmul.f32.gmra.mxu0 %v3069
        %v3148 = vpop.f32.mrf.mxu0
        %v3149 = vadd.f32 0.0, %v3148
        %3150 = vmatmul.f32.gmra.mxu0 %v3070
        %v3151 = vpop.f32.mrf.mxu0
        %v3152 = vadd.f32 0.0, %v3151
        %3153 = vmatmul.f32.gmra.mxu0 %v3071
        %v3154 = vpop.f32.mrf.mxu0
        %v3155 = vadd.f32 0.0, %v3154
        %3156 = vmatmul.f32.gmra.mxu0 %v3072
        %v3157 = vpop.f32.mrf.mxu0
        %v3158 = vadd.f32 0.0, %v3157
        %3159 = vmatmul.f32.gmra.mxu0 %v3073
        %v3160 = vpop.f32.mrf.mxu0
        %v3161 = vadd.f32 0.0, %v3160
        %3162 = vmatmul.f32.gmra.mxu0 %v3074
        %v3163 = vpop.f32.mrf.mxu0
        %v3164 = vadd.f32 0.0, %v3163
        %3165 = vmatmul.f32.gmra.mxu0 %v3075
        %v3166 = vpop.f32.mrf.mxu0
        %v3167 = vadd.f32 0.0, %v3166
        %3168 = vmatmul.f32.gmra.mxu0 %v3076
        %v3169 = vpop.f32.mrf.mxu0
        %v3170 = vadd.f32 0.0, %v3169
        %3171 = vmatmul.f32.gmra.mxu0 %v3077
        %v3172 = vpop.f32.mrf.mxu0
        %v3173 = vadd.f32 0.0, %v3172
        %3174 = vmatmul.f32.gmra.mxu0 %v3078
        %v3175 = vpop.f32.mrf.mxu0
        %v3176 = vadd.f32 0.0, %v3175
        %3177 = vmatmul.f32.gmra.mxu0 %v3079
        %v3178 = vpop.f32.mrf.mxu0
        %v3179 = vadd.f32 0.0, %v3178
        %3180 = vmatmul.f32.gmra.mxu0 %v3080
        %v3181 = vpop.f32.mrf.mxu0
        %v3182 = vadd.f32 0.0, %v3181
        %3183 = vmatmul.f32.gmra.mxu0 %v3081
        %v3184 = vpop.f32.mrf.mxu0
        %v3185 = vadd.f32 0.0, %v3184
        %3186 = vmatmul.f32.gmra.mxu0 %v3082
        %v3187 = vpop.f32.mrf.mxu0
        %v3188 = vadd.f32 0.0, %v3187
        %3189 = vmatmul.f32.gmra.mxu0 %v3083
        %v3190 = vpop.f32.mrf.mxu0
        %v3191 = vadd.f32 0.0, %v3190
        %3192 = vmatmul.f32.gmra.mxu0 %v3084
        %v3193 = vpop.f32.mrf.mxu0
        %v3194 = vadd.f32 0.0, %v3193
        %3195 = vmatmul.f32.gmra.mxu0 %v3085
        %v3196 = vpop.f32.mrf.mxu0
        %v3197 = vadd.f32 0.0, %v3196
        %3198 = vmatmul.f32.gmra.mxu0 %v3086
        %v3199 = vpop.f32.mrf.mxu0
        %v3200 = vadd.f32 0.0, %v3199
        %3201 = vmatmul.f32.gmra.mxu0 %v3087
        %v3202 = vpop.f32.mrf.mxu0
        %v3203 = vadd.f32 0.0, %v3202
        %3204 = vmatmul.f32.gmra.mxu0 %v3088
        %v3205 = vpop.f32.mrf.mxu0
        %v3206 = vadd.f32 0.0, %v3205
        %3207 = vmatmul.f32.gmra.mxu0 %v3089
        %v3208 = vpop.f32.mrf.mxu0
        %v3209 = vadd.f32 0.0, %v3208
        %3210 = vmatmul.f32.gmra.mxu0 %v3090
        %v3211 = vpop.f32.mrf.mxu0
        %v3212 = vadd.f32 0.0, %v3211
        %3213 = vmatmul.f32.gmra.mxu0 %v3091
        %v3214 = vpop.f32.mrf.mxu0
        %v3215 = vadd.f32 0.0, %v3214
        %3216 = vmatmul.f32.gmra.mxu0 %v3092
        %v3217 = vpop.f32.mrf.mxu0
        %v3218 = vadd.f32 0.0, %v3217
        %3219 = vmatmul.f32.gmra.mxu0 %v3093
        %v3220 = vpop.f32.mrf.mxu0
        %v3221 = vadd.f32 0.0, %v3220
        %3222 = vdwg.mxu0
        %v3223 = vadd.f32 %v2125, %v3128
        %v3224 = vadd.f32 %v2128, %v3131
        %v3225 = vadd.f32 %v2131, %v3134
        %v3226 = vadd.f32 %v2134, %v3137
        %v3227 = vadd.f32 %v2137, %v3140
        %v3228 = vadd.f32 %v2140, %v3143
        %v3229 = vadd.f32 %v2143, %v3146
        %v3230 = vadd.f32 %v2146, %v3149
        %v3231 = vadd.f32 %v2149, %v3152
        %v3232 = vadd.f32 %v2152, %v3155
        %v3233 = vadd.f32 %v2155, %v3158
        %v3234 = vadd.f32 %v2158, %v3161
        %v3235 = vadd.f32 %v2161, %v3164
        %v3236 = vadd.f32 %v2164, %v3167
        %v3237 = vadd.f32 %v2167, %v3170
        %v3238 = vadd.f32 %v2170, %v3173
        %v3239 = vadd.f32 %v2173, %v3176
        %v3240 = vadd.f32 %v2176, %v3179
        %v3241 = vadd.f32 %v2179, %v3182
        %v3242 = vadd.f32 %v2182, %v3185
        %v3243 = vadd.f32 %v2185, %v3188
        %v3244 = vadd.f32 %v2188, %v3191
        %v3245 = vadd.f32 %v2191, %v3194
        %v3246 = vadd.f32 %v2194, %v3197
        %v3247 = vadd.f32 %v2197, %v3200
        %v3248 = vadd.f32 %v2200, %v3203
        %v3249 = vadd.f32 %v2203, %v3206
        %v3250 = vadd.f32 %v2206, %v3209
        %v3251 = vadd.f32 %v2209, %v3212
        %v3252 = vadd.f32 %v2212, %v3215
        %v3253 = vadd.f32 %v2215, %v3218
        %v3254 = vadd.f32 %v2218, %v3221
        %v3255 = vmax.f32 %v3062, %v3064
        %v3256 = vmax.f32 %v3063, %v3065
        %v3257 = vmax.f32 %v3064, %v3066
        %v3258 = vmax.f32 %v3065, %v3067
        %v3259 = vmax.f32 %v3066, %v3068
        %v3260 = vmax.f32 %v3067, %v3069
        %v3261 = vmax.f32 %v3068, %v3070
        %v3262 = vmax.f32 %v3069, %v3071
        %v3263 = vmax.f32 %v3070, %v3072
        %v3264 = vmax.f32 %v3071, %v3073
        %v3265 = vmax.f32 %v3072, %v3074
        %v3266 = vmax.f32 %v3073, %v3075
        %v3267 = vmax.f32 %v3074, %v3076
        %v3268 = vmax.f32 %v3075, %v3077
        %v3269 = vmax.f32 %v3076, %v3078
        %v3270 = vmax.f32 %v3077, %v3079
        %v3271 = vmax.f32 %v3078, %v3080
        %v3272 = vmax.f32 %v3079, %v3081
        %v3273 = vmax.f32 %v3080, %v3082
        %v3274 = vmax.f32 %v3081, %v3083
        %v3275 = vmax.f32 %v3082, %v3084
        %v3276 = vmax.f32 %v3083, %v3085
        %v3277 = vmax.f32 %v3084, %v3086
        %v3278 = vmax.f32 %v3085, %v3087
        %v3279 = vmax.f32 %v3086, %v3088
        %v3280 = vmax.f32 %v3087, %v3089
        %v3281 = vmax.f32 %v3088, %v3090
        %v3282 = vmax.f32 %v3089, %v3091
        %v3283 = vmax.f32 %v3255, %v3066
        %v3284 = vmax.f32 %v3256, %v3067
        %v3285 = vmax.f32 %v3257, %v3068
        %v3286 = vmax.f32 %v3258, %v3069
        %v3287 = vmax.f32 %v3259, %v3070
        %v3288 = vmax.f32 %v3260, %v3071
        %v3289 = vmax.f32 %v3261, %v3072
        %v3290 = vmax.f32 %v3262, %v3073
        %v3291 = vmax.f32 %v3263, %v3074
        %v3292 = vmax.f32 %v3264, %v3075
        %v3293 = vmax.f32 %v3265, %v3076
        %v3294 = vmax.f32 %v3266, %v3077
        %v3295 = vmax.f32 %v3267, %v3078
        %v3296 = vmax.f32 %v3268, %v3079
        %v3297 = vmax.f32 %v3269, %v3080
        %v3298 = vmax.f32 %v3270, %v3081
        %v3299 = vmax.f32 %v3271, %v3082
        %v3300 = vmax.f32 %v3272, %v3083
        %v3301 = vmax.f32 %v3273, %v3084
        %v3302 = vmax.f32 %v3274, %v3085
        %v3303 = vmax.f32 %v3275, %v3086
        %v3304 = vmax.f32 %v3276, %v3087
        %v3305 = vmax.f32 %v3277, %v3088
        %v3306 = vmax.f32 %v3278, %v3089
        %v3307 = vmax.f32 %v3279, %v3090
        %v3308 = vmax.f32 %v3280, %v3091
        %v3309 = vmax.f32 %v3281, %v3092
        %v3310 = vmax.f32 %v3282, %v3093
        %v3311 = vmax.f32 %v3283, %v3068
        %v3312 = vmax.f32 %v3284, %v3069
        %v3313 = vmax.f32 %v3285, %v3070
        %v3314 = vmax.f32 %v3286, %v3071
        %v3315 = vmax.f32 %v3287, %v3072
        %v3316 = vmax.f32 %v3288, %v3073
        %v3317 = vmax.f32 %v3289, %v3074
        %v3318 = vmax.f32 %v3290, %v3075
        %v3319 = vmax.f32 %v3291, %v3076
        %v3320 = vmax.f32 %v3292, %v3077
        %v3321 = vmax.f32 %v3293, %v3078
        %v3322 = vmax.f32 %v3294, %v3079
        %v3323 = vmax.f32 %v3295, %v3080
        %v3324 = vmax.f32 %v3296, %v3081
        %v3325 = vmax.f32 %v3297, %v3082
        %v3326 = vmax.f32 %v3298, %v3083
        %v3327 = vmax.f32 %v3299, %v3084
        %v3328 = vmax.f32 %v3300, %v3085
        %v3329 = vmax.f32 %v3301, %v3086
        %v3330 = vmax.f32 %v3302, %v3087
        %v3331 = vmax.f32 %v3303, %v3088
        %v3332 = vmax.f32 %v3304, %v3089
        %v3333 = vmax.f32 %v3305, %v3090
        %v3334 = vmax.f32 %v3306, %v3091
        %v3335 = vmax.f32 %v3307, %v3092
        %v3336 = vmax.f32 %v3308, %v3093
        %v3337 = vmax.f32 %v3311, %v3070
        %v3338 = vmax.f32 %v3312, %v3071
        %v3339 = vmax.f32 %v3313, %v3072
        %v3340 = vmax.f32 %v3314, %v3073
        %v3341 = vmax.f32 %v3315, %v3074
        %v3342 = vmax.f32 %v3316, %v3075
        %v3343 = vmax.f32 %v3317, %v3076
        %v3344 = vmax.f32 %v3318, %v3077
        %v3345 = vmax.f32 %v3319, %v3078
        %v3346 = vmax.f32 %v3320, %v3079
        %v3347 = vmax.f32 %v3321, %v3080
        %v3348 = vmax.f32 %v3322, %v3081
        %v3349 = vmax.f32 %v3323, %v3082
        %v3350 = vmax.f32 %v3324, %v3083
        %v3351 = vmax.f32 %v3325, %v3084
        %v3352 = vmax.f32 %v3326, %v3085
        %v3353 = vmax.f32 %v3327, %v3086
        %v3354 = vmax.f32 %v3328, %v3087
        %v3355 = vmax.f32 %v3329, %v3088
        %v3356 = vmax.f32 %v3330, %v3089
        %v3357 = vmax.f32 %v3331, %v3090
        %v3358 = vmax.f32 %v3332, %v3091
        %v3359 = vmax.f32 %v3333, %v3092
        %v3360 = vmax.f32 %v3334, %v3093
        %v3393 = vrot.slane %v3283, 6
        %v3394 = vrot.slane %v3284, 6
        %v3395 = vsel %vm1237, %v3393, %v3394
        %v3396 = vrot.slane %v3311, 6
        %v3397 = vrot.slane %v3312, 6
        %v3398 = vsel %vm1237, %v3396, %v3397
        %v3399 = vrot.slane %v3337, 6
        %v3400 = vrot.slane %v3338, 6
        %v3401 = vsel %vm1237, %v3399, %v3400
        %v3402 = vrot.slane %v3339, 6
        %v3403 = vrot.slane %v3340, 6
        %v3404 = vsel %vm1237, %v3402, %v3403
        %v3405 = vrot.slane %v3341, 6
        %v3406 = vrot.slane %v3342, 6
        %v3407 = vsel %vm1237, %v3405, %v3406
        %v3408 = vrot.slane %v3343, 6
        %v3409 = vrot.slane %v3344, 6
        %v3410 = vsel %vm1237, %v3408, %v3409
        %v3411 = vrot.slane %v3345, 6
        %v3412 = vrot.slane %v3346, 6
        %v3413 = vsel %vm1237, %v3411, %v3412
        %v3414 = vrot.slane %v3347, 6
        %v3415 = vrot.slane %v3348, 6
        %v3416 = vsel %vm1237, %v3414, %v3415
        %v3417 = vrot.slane %v3349, 6
        %v3418 = vrot.slane %v3350, 6
        %v3419 = vsel %vm1237, %v3417, %v3418
        %v3420 = vrot.slane %v3351, 6
        %v3421 = vrot.slane %v3352, 6
        %v3422 = vsel %vm1237, %v3420, %v3421
        %v3423 = vrot.slane %v3353, 6
        %v3424 = vrot.slane %v3354, 6
        %v3425 = vsel %vm1237, %v3423, %v3424
        %v3426 = vrot.slane %v3355, 6
        %v3427 = vrot.slane %v3356, 6
        %v3428 = vsel %vm1237, %v3426, %v3427
        %v3429 = vrot.slane %v3357, 6
        %v3430 = vrot.slane %v3358, 6
        %v3431 = vsel %vm1237, %v3429, %v3430
        %v3432 = vrot.slane %v3359, 6
        %v3433 = vrot.slane %v3360, 6
        %v3434 = vsel %vm1237, %v3432, %v3433
        %v3435 = vrot.slane %v3335, 6
        %v3436 = vrot.slane %v3336, 6
        %v3437 = vsel %vm1237, %v3435, %v3436
        %v3438 = vrot.slane %v3309, 6
        %v3439 = vrot.slane %v3310, 6
        %v3440 = vsel %vm1237, %v3438, %v3439
        %v3489 = vsel %vm1237, -inf, %v3393
        %v3490 = vsel %vm1237, -inf, %v3396
        %v3491 = vsel %vm1237, -inf, %v3399
        %v3492 = vsel %vm1237, -inf, %v3402
        %v3493 = vsel %vm1237, -inf, %v3405
        %v3494 = vsel %vm1237, -inf, %v3408
        %v3495 = vsel %vm1237, -inf, %v3411
        %v3496 = vsel %vm1237, -inf, %v3414
        %v3497 = vsel %vm1237, -inf, %v3417
        %v3498 = vsel %vm1237, -inf, %v3420
        %v3499 = vsel %vm1237, -inf, %v3423
        %v3500 = vsel %vm1237, -inf, %v3426
        %v3501 = vsel %vm1237, -inf, %v3429
        %v3502 = vsel %vm1237, -inf, %v3432
        %v3503 = vsel %vm1237, -inf, %v3435
        %v3504 = vsel %vm1237, -inf, %v3438
        %v3505 = vsel %vm1237, %v3394, -inf
        %v3506 = vsel %vm1237, %v3397, -inf
        %v3507 = vsel %vm1237, %v3400, -inf
        %v3508 = vsel %vm1237, %v3403, -inf
        %v3509 = vsel %vm1237, %v3406, -inf
        %v3510 = vsel %vm1237, %v3409, -inf
        %v3511 = vsel %vm1237, %v3412, -inf
        %v3512 = vsel %vm1237, %v3415, -inf
        %v3513 = vsel %vm1237, %v3418, -inf
        %v3514 = vsel %vm1237, %v3421, -inf
        %v3515 = vsel %vm1237, %v3424, -inf
        %v3516 = vsel %vm1237, %v3427, -inf
        %v3517 = vsel %vm1237, %v3430, -inf
        %v3518 = vsel %vm1237, %v3433, -inf
        %v3519 = vsel %vm1237, %v3436, -inf
        %v3520 = vsel %vm1237, %v3439, -inf
        %v3553 = vrot.slane %v3489, 1
        %v3554 = vrot.slane %v3395, 1
        %v3555 = vsel %vm1398, %v3553, %v3554
        %v3556 = vrot.slane %v3505, 1
        %v3557 = vsel %vm1398, %v3554, %v3556
        %v3558 = vrot.slane %v3490, 1
        %v3559 = vrot.slane %v3398, 1
        %v3560 = vsel %vm1398, %v3558, %v3559
        %v3561 = vrot.slane %v3506, 1
        %v3562 = vsel %vm1398, %v3559, %v3561
        %v3563 = vrot.slane %v3491, 1
        %v3564 = vrot.slane %v3401, 1
        %v3565 = vsel %vm1398, %v3563, %v3564
        %v3566 = vrot.slane %v3507, 1
        %v3567 = vsel %vm1398, %v3564, %v3566
        %v3568 = vrot.slane %v3492, 1
        %v3569 = vrot.slane %v3404, 1
        %v3570 = vsel %vm1398, %v3568, %v3569
        %v3571 = vrot.slane %v3508, 1
        %v3572 = vsel %vm1398, %v3569, %v3571
        %v3573 = vrot.slane %v3493, 1
        %v3574 = vrot.slane %v3407, 1
        %v3575 = vsel %vm1398, %v3573, %v3574
        %v3576 = vrot.slane %v3509, 1
        %v3577 = vsel %vm1398, %v3574, %v3576
        %v3578 = vrot.slane %v3494, 1
        %v3579 = vrot.slane %v3410, 1
        %v3580 = vsel %vm1398, %v3578, %v3579
        %v3581 = vrot.slane %v3510, 1
        %v3582 = vsel %vm1398, %v3579, %v3581
        %v3583 = vrot.slane %v3495, 1
        %v3584 = vrot.slane %v3413, 1
        %v3585 = vsel %vm1398, %v3583, %v3584
        %v3586 = vrot.slane %v3511, 1
        %v3587 = vsel %vm1398, %v3584, %v3586
        %v3588 = vrot.slane %v3496, 1
        %v3589 = vrot.slane %v3416, 1
        %v3590 = vsel %vm1398, %v3588, %v3589
        %v3591 = vrot.slane %v3512, 1
        %v3592 = vsel %vm1398, %v3589, %v3591
        %v3593 = vrot.slane %v3497, 1
        %v3594 = vrot.slane %v3419, 1
        %v3595 = vsel %vm1398, %v3593, %v3594
        %v3596 = vrot.slane %v3513, 1
        %v3597 = vsel %vm1398, %v3594, %v3596
        %v3598 = vrot.slane %v3498, 1
        %v3599 = vrot.slane %v3422, 1
        %v3600 = vsel %vm1398, %v3598, %v3599
        %v3601 = vrot.slane %v3514, 1
        %v3602 = vsel %vm1398, %v3599, %v3601
        %v3603 = vrot.slane %v3499, 1
        %v3604 = vrot.slane %v3425, 1
        %v3605 = vsel %vm1398, %v3603, %v3604
        %v3606 = vrot.slane %v3515, 1
        %v3607 = vsel %vm1398, %v3604, %v3606
        %v3608 = vrot.slane %v3500, 1
        %v3609 = vrot.slane %v3428, 1
        %v3610 = vsel %vm1398, %v3608, %v3609
        %v3611 = vrot.slane %v3516, 1
        %v3612 = vsel %vm1398, %v3609, %v3611
        %v3613 = vrot.slane %v3501, 1
        %v3614 = vrot.slane %v3431, 1
        %v3615 = vsel %vm1398, %v3613, %v3614
        %v3616 = vrot.slane %v3517, 1
        %v3617 = vsel %vm1398, %v3614, %v3616
        %v3618 = vrot.slane %v3502, 1
        %v3619 = vrot.slane %v3434, 1
        %v3620 = vsel %vm1398, %v3618, %v3619
        %v3621 = vrot.slane %v3518, 1
        %v3622 = vsel %vm1398, %v3619, %v3621
        %v3623 = vrot.slane %v3503, 1
        %v3624 = vrot.slane %v3437, 1
        %v3625 = vsel %vm1398, %v3623, %v3624
        %v3626 = vrot.slane %v3519, 1
        %v3627 = vsel %vm1398, %v3624, %v3626
        %v3628 = vrot.slane %v3504, 1
        %v3629 = vrot.slane %v3440, 1
        %v3630 = vsel %vm1398, %v3628, %v3629
        %v3631 = vrot.slane %v3520, 1
        %v3632 = vsel %vm1398, %v3629, %v3631
        %v3665 = vmax.f32 %v3489, %v3555
        %v3666 = vmax.f32 %v3395, %v3557
        %v3667 = vmax.f32 %v3490, %v3560
        %v3668 = vmax.f32 %v3398, %v3562
        %v3669 = vmax.f32 %v3491, %v3565
        %v3670 = vmax.f32 %v3401, %v3567
        %v3671 = vmax.f32 %v3492, %v3570
        %v3672 = vmax.f32 %v3404, %v3572
        %v3673 = vmax.f32 %v3493, %v3575
        %v3674 = vmax.f32 %v3407, %v3577
        %v3675 = vmax.f32 %v3494, %v3580
        %v3676 = vmax.f32 %v3410, %v3582
        %v3677 = vmax.f32 %v3495, %v3585
        %v3678 = vmax.f32 %v3413, %v3587
        %v3679 = vmax.f32 %v3496, %v3590
        %v3680 = vmax.f32 %v3416, %v3592
        %v3681 = vmax.f32 %v3497, %v3595
        %v3682 = vmax.f32 %v3419, %v3597
        %v3683 = vmax.f32 %v3498, %v3600
        %v3684 = vmax.f32 %v3422, %v3602
        %v3685 = vmax.f32 %v3499, %v3605
        %v3686 = vmax.f32 %v3425, %v3607
        %v3687 = vmax.f32 %v3500, %v3610
        %v3688 = vmax.f32 %v3428, %v3612
        %v3689 = vmax.f32 %v3501, %v3615
        %v3690 = vmax.f32 %v3431, %v3617
        %v3691 = vmax.f32 %v3502, %v3620
        %v3692 = vmax.f32 %v3434, %v3622
        %v3693 = vmax.f32 %v3503, %v3625
        %v3694 = vmax.f32 %v3437, %v3627
        %v3695 = vmax.f32 %v3504, %v3630
        %v3696 = vmax.f32 %v3440, %v3632
        %v3697 = vrot.slane %v3489, 2
        %v3698 = vrot.slane %v3395, 2
        %v3699 = vsel %vm1543, %v3697, %v3698
        %v3700 = vrot.slane %v3505, 2
        %v3701 = vsel %vm1543, %v3698, %v3700
        %v3702 = vrot.slane %v3490, 2
        %v3703 = vrot.slane %v3398, 2
        %v3704 = vsel %vm1543, %v3702, %v3703
        %v3705 = vrot.slane %v3506, 2
        %v3706 = vsel %vm1543, %v3703, %v3705
        %v3707 = vrot.slane %v3491, 2
        %v3708 = vrot.slane %v3401, 2
        %v3709 = vsel %vm1543, %v3707, %v3708
        %v3710 = vrot.slane %v3507, 2
        %v3711 = vsel %vm1543, %v3708, %v3710
        %v3712 = vrot.slane %v3492, 2
        %v3713 = vrot.slane %v3404, 2
        %v3714 = vsel %vm1543, %v3712, %v3713
        %v3715 = vrot.slane %v3508, 2
        %v3716 = vsel %vm1543, %v3713, %v3715
        %v3717 = vrot.slane %v3493, 2
        %v3718 = vrot.slane %v3407, 2
        %v3719 = vsel %vm1543, %v3717, %v3718
        %v3720 = vrot.slane %v3509, 2
        %v3721 = vsel %vm1543, %v3718, %v3720
        %v3722 = vrot.slane %v3494, 2
        %v3723 = vrot.slane %v3410, 2
        %v3724 = vsel %vm1543, %v3722, %v3723
        %v3725 = vrot.slane %v3510, 2
        %v3726 = vsel %vm1543, %v3723, %v3725
        %v3727 = vrot.slane %v3495, 2
        %v3728 = vrot.slane %v3413, 2
        %v3729 = vsel %vm1543, %v3727, %v3728
        %v3730 = vrot.slane %v3511, 2
        %v3731 = vsel %vm1543, %v3728, %v3730
        %v3732 = vrot.slane %v3496, 2
        %v3733 = vrot.slane %v3416, 2
        %v3734 = vsel %vm1543, %v3732, %v3733
        %v3735 = vrot.slane %v3512, 2
        %v3736 = vsel %vm1543, %v3733, %v3735
        %v3737 = vrot.slane %v3497, 2
        %v3738 = vrot.slane %v3419, 2
        %v3739 = vsel %vm1543, %v3737, %v3738
        %v3740 = vrot.slane %v3513, 2
        %v3741 = vsel %vm1543, %v3738, %v3740
        %v3742 = vrot.slane %v3498, 2
        %v3743 = vrot.slane %v3422, 2
        %v3744 = vsel %vm1543, %v3742, %v3743
        %v3745 = vrot.slane %v3514, 2
        %v3746 = vsel %vm1543, %v3743, %v3745
        %v3747 = vrot.slane %v3499, 2
        %v3748 = vrot.slane %v3425, 2
        %v3749 = vsel %vm1543, %v3747, %v3748
        %v3750 = vrot.slane %v3515, 2
        %v3751 = vsel %vm1543, %v3748, %v3750
        %v3752 = vrot.slane %v3500, 2
        %v3753 = vrot.slane %v3428, 2
        %v3754 = vsel %vm1543, %v3752, %v3753
        %v3755 = vrot.slane %v3516, 2
        %v3756 = vsel %vm1543, %v3753, %v3755
        %v3757 = vrot.slane %v3501, 2
        %v3758 = vrot.slane %v3431, 2
        %v3759 = vsel %vm1543, %v3757, %v3758
        %v3760 = vrot.slane %v3517, 2
        %v3761 = vsel %vm1543, %v3758, %v3760
        %v3762 = vrot.slane %v3502, 2
        %v3763 = vrot.slane %v3434, 2
        %v3764 = vsel %vm1543, %v3762, %v3763
        %v3765 = vrot.slane %v3518, 2
        %v3766 = vsel %vm1543, %v3763, %v3765
        %v3767 = vrot.slane %v3503, 2
        %v3768 = vrot.slane %v3437, 2
        %v3769 = vsel %vm1543, %v3767, %v3768
        %v3770 = vrot.slane %v3519, 2
        %v3771 = vsel %vm1543, %v3768, %v3770
        %v3772 = vrot.slane %v3504, 2
        %v3773 = vrot.slane %v3440, 2
        %v3774 = vsel %vm1543, %v3772, %v3773
        %v3775 = vrot.slane %v3520, 2
        %v3776 = vsel %vm1543, %v3773, %v3775
        %v3809 = vmax.f32 %v3665, %v3699
        %v3810 = vmax.f32 %v3666, %v3701
        %v3811 = vmax.f32 %v3667, %v3704
        %v3812 = vmax.f32 %v3668, %v3706
        %v3813 = vmax.f32 %v3669, %v3709
        %v3814 = vmax.f32 %v3670, %v3711
        %v3815 = vmax.f32 %v3671, %v3714
        %v3816 = vmax.f32 %v3672, %v3716
        %v3817 = vmax.f32 %v3673, %v3719
        %v3818 = vmax.f32 %v3674, %v3721
        %v3819 = vmax.f32 %v3675, %v3724
        %v3820 = vmax.f32 %v3676, %v3726
        %v3821 = vmax.f32 %v3677, %v3729
        %v3822 = vmax.f32 %v3678, %v3731
        %v3823 = vmax.f32 %v3679, %v3734
        %v3824 = vmax.f32 %v3680, %v3736
        %v3825 = vmax.f32 %v3681, %v3739
        %v3826 = vmax.f32 %v3682, %v3741
        %v3827 = vmax.f32 %v3683, %v3744
        %v3828 = vmax.f32 %v3684, %v3746
        %v3829 = vmax.f32 %v3685, %v3749
        %v3830 = vmax.f32 %v3686, %v3751
        %v3831 = vmax.f32 %v3687, %v3754
        %v3832 = vmax.f32 %v3688, %v3756
        %v3833 = vmax.f32 %v3689, %v3759
        %v3834 = vmax.f32 %v3690, %v3761
        %v3835 = vmax.f32 %v3691, %v3764
        %v3836 = vmax.f32 %v3692, %v3766
        %v3837 = vmax.f32 %v3693, %v3769
        %v3838 = vmax.f32 %v3694, %v3771
        %v3839 = vmax.f32 %v3695, %v3774
        %v3840 = vmax.f32 %v3696, %v3776
        %v3841 = vrot.slane %v3489, 3
        %v3842 = vrot.slane %v3395, 3
        %v3843 = vsel %vm1688, %v3841, %v3842
        %v3844 = vrot.slane %v3505, 3
        %v3845 = vsel %vm1688, %v3842, %v3844
        %v3846 = vrot.slane %v3490, 3
        %v3847 = vrot.slane %v3398, 3
        %v3848 = vsel %vm1688, %v3846, %v3847
        %v3849 = vrot.slane %v3506, 3
        %v3850 = vsel %vm1688, %v3847, %v3849
        %v3851 = vrot.slane %v3491, 3
        %v3852 = vrot.slane %v3401, 3
        %v3853 = vsel %vm1688, %v3851, %v3852
        %v3854 = vrot.slane %v3507, 3
        %v3855 = vsel %vm1688, %v3852, %v3854
        %v3856 = vrot.slane %v3492, 3
        %v3857 = vrot.slane %v3404, 3
        %v3858 = vsel %vm1688, %v3856, %v3857
        %v3859 = vrot.slane %v3508, 3
        %v3860 = vsel %vm1688, %v3857, %v3859
        %v3861 = vrot.slane %v3493, 3
        %v3862 = vrot.slane %v3407, 3
        %v3863 = vsel %vm1688, %v3861, %v3862
        %v3864 = vrot.slane %v3509, 3
        %v3865 = vsel %vm1688, %v3862, %v3864
        %v3866 = vrot.slane %v3494, 3
        %v3867 = vrot.slane %v3410, 3
        %v3868 = vsel %vm1688, %v3866, %v3867
        %v3869 = vrot.slane %v3510, 3
        %v3870 = vsel %vm1688, %v3867, %v3869
        %v3871 = vrot.slane %v3495, 3
        %v3872 = vrot.slane %v3413, 3
        %v3873 = vsel %vm1688, %v3871, %v3872
        %v3874 = vrot.slane %v3511, 3
        %v3875 = vsel %vm1688, %v3872, %v3874
        %v3876 = vrot.slane %v3496, 3
        %v3877 = vrot.slane %v3416, 3
        %v3878 = vsel %vm1688, %v3876, %v3877
        %v3879 = vrot.slane %v3512, 3
        %v3880 = vsel %vm1688, %v3877, %v3879
        %v3881 = vrot.slane %v3497, 3
        %v3882 = vrot.slane %v3419, 3
        %v3883 = vsel %vm1688, %v3881, %v3882
        %v3884 = vrot.slane %v3513, 3
        %v3885 = vsel %vm1688, %v3882, %v3884
        %v3886 = vrot.slane %v3498, 3
        %v3887 = vrot.slane %v3422, 3
        %v3888 = vsel %vm1688, %v3886, %v3887
        %v3889 = vrot.slane %v3514, 3
        %v3890 = vsel %vm1688, %v3887, %v3889
        %v3891 = vrot.slane %v3499, 3
        %v3892 = vrot.slane %v3425, 3
        %v3893 = vsel %vm1688, %v3891, %v3892
        %v3894 = vrot.slane %v3515, 3
        %v3895 = vsel %vm1688, %v3892, %v3894
        %v3896 = vrot.slane %v3500, 3
        %v3897 = vrot.slane %v3428, 3
        %v3898 = vsel %vm1688, %v3896, %v3897
        %v3899 = vrot.slane %v3516, 3
        %v3900 = vsel %vm1688, %v3897, %v3899
        %v3901 = vrot.slane %v3501, 3
        %v3902 = vrot.slane %v3431, 3
        %v3903 = vsel %vm1688, %v3901, %v3902
        %v3904 = vrot.slane %v3517, 3
        %v3905 = vsel %vm1688, %v3902, %v3904
        %v3906 = vrot.slane %v3502, 3
        %v3907 = vrot.slane %v3434, 3
        %v3908 = vsel %vm1688, %v3906, %v3907
        %v3909 = vrot.slane %v3518, 3
        %v3910 = vsel %vm1688, %v3907, %v3909
        %v3911 = vrot.slane %v3503, 3
        %v3912 = vrot.slane %v3437, 3
        %v3913 = vsel %vm1688, %v3911, %v3912
        %v3914 = vrot.slane %v3519, 3
        %v3915 = vsel %vm1688, %v3912, %v3914
        %v3916 = vrot.slane %v3504, 3
        %v3917 = vrot.slane %v3440, 3
        %v3918 = vsel %vm1688, %v3916, %v3917
        %v3919 = vrot.slane %v3520, 3
        %v3920 = vsel %vm1688, %v3917, %v3919
        %v3953 = vmax.f32 %v3809, %v3843
        %v3954 = vmax.f32 %v3810, %v3845
        %v3955 = vmax.f32 %v3811, %v3848
        %v3956 = vmax.f32 %v3812, %v3850
        %v3957 = vmax.f32 %v3813, %v3853
        %v3958 = vmax.f32 %v3814, %v3855
        %v3959 = vmax.f32 %v3815, %v3858
        %v3960 = vmax.f32 %v3816, %v3860
        %v3961 = vmax.f32 %v3817, %v3863
        %v3962 = vmax.f32 %v3818, %v3865
        %v3963 = vmax.f32 %v3819, %v3868
        %v3964 = vmax.f32 %v3820, %v3870
        %v3965 = vmax.f32 %v3821, %v3873
        %v3966 = vmax.f32 %v3822, %v3875
        %v3967 = vmax.f32 %v3823, %v3878
        %v3968 = vmax.f32 %v3824, %v3880
        %v3969 = vmax.f32 %v3825, %v3883
        %v3970 = vmax.f32 %v3826, %v3885
        %v3971 = vmax.f32 %v3827, %v3888
        %v3972 = vmax.f32 %v3828, %v3890
        %v3973 = vmax.f32 %v3829, %v3893
        %v3974 = vmax.f32 %v3830, %v3895
        %v3975 = vmax.f32 %v3831, %v3898
        %v3976 = vmax.f32 %v3832, %v3900
        %v3977 = vmax.f32 %v3833, %v3903
        %v3978 = vmax.f32 %v3834, %v3905
        %v3979 = vmax.f32 %v3835, %v3908
        %v3980 = vmax.f32 %v3836, %v3910
        %v3981 = vmax.f32 %v3837, %v3913
        %v3982 = vmax.f32 %v3838, %v3915
        %v3983 = vmax.f32 %v3839, %v3918
        %v3984 = vmax.f32 %v3840, %v3920
        %v3985 = vrot.slane %v3489, 4
        %v3986 = vrot.slane %v3395, 4
        %v3987 = vsel %vm1833, %v3985, %v3986
        %v3988 = vrot.slane %v3505, 4
        %v3989 = vsel %vm1833, %v3986, %v3988
        %v3990 = vrot.slane %v3490, 4
        %v3991 = vrot.slane %v3398, 4
        %v3992 = vsel %vm1833, %v3990, %v3991
        %v3993 = vrot.slane %v3506, 4
        %v3994 = vsel %vm1833, %v3991, %v3993
        %v3995 = vrot.slane %v3491, 4
        %v3996 = vrot.slane %v3401, 4
        %v3997 = vsel %vm1833, %v3995, %v3996
        %v3998 = vrot.slane %v3507, 4
        %v3999 = vsel %vm1833, %v3996, %v3998
        %v4000 = vrot.slane %v3492, 4
        %v4001 = vrot.slane %v3404, 4
        %v4002 = vsel %vm1833, %v4000, %v4001
        %v4003 = vrot.slane %v3508, 4
        %v4004 = vsel %vm1833, %v4001, %v4003
        %v4005 = vrot.slane %v3493, 4
        %v4006 = vrot.slane %v3407, 4
        %v4007 = vsel %vm1833, %v4005, %v4006
        %v4008 = vrot.slane %v3509, 4
        %v4009 = vsel %vm1833, %v4006, %v4008
        %v4010 = vrot.slane %v3494, 4
        %v4011 = vrot.slane %v3410, 4
        %v4012 = vsel %vm1833, %v4010, %v4011
        %v4013 = vrot.slane %v3510, 4
        %v4014 = vsel %vm1833, %v4011, %v4013
        %v4015 = vrot.slane %v3495, 4
        %v4016 = vrot.slane %v3413, 4
        %v4017 = vsel %vm1833, %v4015, %v4016
        %v4018 = vrot.slane %v3511, 4
        %v4019 = vsel %vm1833, %v4016, %v4018
        %v4020 = vrot.slane %v3496, 4
        %v4021 = vrot.slane %v3416, 4
        %v4022 = vsel %vm1833, %v4020, %v4021
        %v4023 = vrot.slane %v3512, 4
        %v4024 = vsel %vm1833, %v4021, %v4023
        %v4025 = vrot.slane %v3497, 4
        %v4026 = vrot.slane %v3419, 4
        %v4027 = vsel %vm1833, %v4025, %v4026
        %v4028 = vrot.slane %v3513, 4
        %v4029 = vsel %vm1833, %v4026, %v4028
        %v4030 = vrot.slane %v3498, 4
        %v4031 = vrot.slane %v3422, 4
        %v4032 = vsel %vm1833, %v4030, %v4031
        %v4033 = vrot.slane %v3514, 4
        %v4034 = vsel %vm1833, %v4031, %v4033
        %v4035 = vrot.slane %v3499, 4
        %v4036 = vrot.slane %v3425, 4
        %v4037 = vsel %vm1833, %v4035, %v4036
        %v4038 = vrot.slane %v3515, 4
        %v4039 = vsel %vm1833, %v4036, %v4038
        %v4040 = vrot.slane %v3500, 4
        %v4041 = vrot.slane %v3428, 4
        %v4042 = vsel %vm1833, %v4040, %v4041
        %v4043 = vrot.slane %v3516, 4
        %v4044 = vsel %vm1833, %v4041, %v4043
        %v4045 = vrot.slane %v3501, 4
        %v4046 = vrot.slane %v3431, 4
        %v4047 = vsel %vm1833, %v4045, %v4046
        %v4048 = vrot.slane %v3517, 4
        %v4049 = vsel %vm1833, %v4046, %v4048
        %v4050 = vrot.slane %v3502, 4
        %v4051 = vrot.slane %v3434, 4
        %v4052 = vsel %vm1833, %v4050, %v4051
        %v4053 = vrot.slane %v3518, 4
        %v4054 = vsel %vm1833, %v4051, %v4053
        %v4055 = vrot.slane %v3503, 4
        %v4056 = vrot.slane %v3437, 4
        %v4057 = vsel %vm1833, %v4055, %v4056
        %v4058 = vrot.slane %v3519, 4
        %v4059 = vsel %vm1833, %v4056, %v4058
        %v4060 = vrot.slane %v3504, 4
        %v4061 = vrot.slane %v3440, 4
        %v4062 = vsel %vm1833, %v4060, %v4061
        %v4063 = vrot.slane %v3520, 4
        %v4064 = vsel %vm1833, %v4061, %v4063
        %v4097 = vmax.f32 %v3953, %v3987
        %v4098 = vmax.f32 %v3954, %v3989
        %v4099 = vmax.f32 %v3955, %v3992
        %v4100 = vmax.f32 %v3956, %v3994
        %v4101 = vmax.f32 %v3957, %v3997
        %v4102 = vmax.f32 %v3958, %v3999
        %v4103 = vmax.f32 %v3959, %v4002
        %v4104 = vmax.f32 %v3960, %v4004
        %v4105 = vmax.f32 %v3961, %v4007
        %v4106 = vmax.f32 %v3962, %v4009
        %v4107 = vmax.f32 %v3963, %v4012
        %v4108 = vmax.f32 %v3964, %v4014
        %v4109 = vmax.f32 %v3965, %v4017
        %v4110 = vmax.f32 %v3966, %v4019
        %v4111 = vmax.f32 %v3967, %v4022
        %v4112 = vmax.f32 %v3968, %v4024
        %v4113 = vmax.f32 %v3969, %v4027
        %v4114 = vmax.f32 %v3970, %v4029
        %v4115 = vmax.f32 %v3971, %v4032
        %v4116 = vmax.f32 %v3972, %v4034
        %v4117 = vmax.f32 %v3973, %v4037
        %v4118 = vmax.f32 %v3974, %v4039
        %v4119 = vmax.f32 %v3975, %v4042
        %v4120 = vmax.f32 %v3976, %v4044
        %v4121 = vmax.f32 %v3977, %v4047
        %v4122 = vmax.f32 %v3978, %v4049
        %v4123 = vmax.f32 %v3979, %v4052
        %v4124 = vmax.f32 %v3980, %v4054
        %v4125 = vmax.f32 %v3981, %v4057
        %v4126 = vmax.f32 %v3982, %v4059
        %v4127 = vmax.f32 %v3983, %v4062
        %v4128 = vmax.f32 %v3984, %v4064
        %v4129 = vld [vmem:[#allocation7 + $0x180] sm:$0xff]
        %v4130 = vld [vmem:[#allocation7 + $0x188] sm:$0xff]
        %v4131 = vld [vmem:[#allocation7 + $0x190] sm:$0xff]
        %v4132 = vld [vmem:[#allocation7 + $0x198] sm:$0xff]
        %v4133 = vld [vmem:[#allocation7 + $0x1a0] sm:$0xff]
        %v4134 = vld [vmem:[#allocation7 + $0x1a8] sm:$0xff]
        %v4135 = vld [vmem:[#allocation7 + $0x1b0] sm:$0xff]
        %v4136 = vld [vmem:[#allocation7 + $0x1b8] sm:$0xff]
        %v4137 = vld [vmem:[#allocation7 + $0x1c0] sm:$0xff]
        %v4138 = vld [vmem:[#allocation7 + $0x1c8] sm:$0xff]
        %v4139 = vld [vmem:[#allocation7 + $0x1d0] sm:$0xff]
        %v4140 = vld [vmem:[#allocation7 + $0x1d8] sm:$0xff]
        %v4141 = vld [vmem:[#allocation7 + $0x1e0] sm:$0xff]
        %v4142 = vld [vmem:[#allocation7 + $0x1e8] sm:$0xff]
        %v4143 = vld [vmem:[#allocation7 + $0x1f0] sm:$0xff]
        %v4144 = vld [vmem:[#allocation7 + $0x1f8] sm:$0xff]
        %4145 = vmatpush.msra.mxu0 %v4144
        %4146 = vmatpush.msra.mxu0 %v4143
        %4147 = vmatpush.msra.mxu0 %v4142
        %4148 = vmatpush.msra.mxu0 %v4141
        %4149 = vmatpush.msra.mxu0 %v4140
        %4150 = vmatpush.msra.mxu0 %v4139
        %4151 = vmatpush.msra.mxu0 %v4138
        %4152 = vmatpush.msra.mxu0 %v4137
        %4153 = vmatpush.msra.mxu0 %v4136
        %4154 = vmatpush.msra.mxu0 %v4135
        %4155 = vmatpush.msra.mxu0 %v4134
        %4156 = vmatpush.msra.mxu0 %v4133
        %4157 = vmatpush.msra.mxu0 %v4132
        %4158 = vmatpush.msra.mxu0 %v4131
        %4159 = vmatpush.msra.mxu0 %v4130
        %4160 = vmatpush.msra.mxu0 %v4129
        %4161 = vmatmul.f32.gmra.mxu0 %v4097
        %v4162 = vpop.f32.mrf.mxu0
        %v4163 = vadd.f32 0.0, %v4162
        %4164 = vmatmul.f32.gmra.mxu0 %v4098
        %v4165 = vpop.f32.mrf.mxu0
        %v4166 = vadd.f32 0.0, %v4165
        %4167 = vmatmul.f32.gmra.mxu0 %v4099
        %v4168 = vpop.f32.mrf.mxu0
        %v4169 = vadd.f32 0.0, %v4168
        %4170 = vmatmul.f32.gmra.mxu0 %v4100
        %v4171 = vpop.f32.mrf.mxu0
        %v4172 = vadd.f32 0.0, %v4171
        %4173 = vmatmul.f32.gmra.mxu0 %v4101
        %v4174 = vpop.f32.mrf.mxu0
        %v4175 = vadd.f32 0.0, %v4174
        %4176 = vmatmul.f32.gmra.mxu0 %v4102
        %v4177 = vpop.f32.mrf.mxu0
        %v4178 = vadd.f32 0.0, %v4177
        %4179 = vmatmul.f32.gmra.mxu0 %v4103
        %v4180 = vpop.f32.mrf.mxu0
        %v4181 = vadd.f32 0.0, %v4180
        %4182 = vmatmul.f32.gmra.mxu0 %v4104
        %v4183 = vpop.f32.mrf.mxu0
        %v4184 = vadd.f32 0.0, %v4183
        %4185 = vmatmul.f32.gmra.mxu0 %v4105
        %v4186 = vpop.f32.mrf.mxu0
        %v4187 = vadd.f32 0.0, %v4186
        %4188 = vmatmul.f32.gmra.mxu0 %v4106
        %v4189 = vpop.f32.mrf.mxu0
        %v4190 = vadd.f32 0.0, %v4189
        %4191 = vmatmul.f32.gmra.mxu0 %v4107
        %v4192 = vpop.f32.mrf.mxu0
        %v4193 = vadd.f32 0.0, %v4192
        %4194 = vmatmul.f32.gmra.mxu0 %v4108
        %v4195 = vpop.f32.mrf.mxu0
        %v4196 = vadd.f32 0.0, %v4195
        %4197 = vmatmul.f32.gmra.mxu0 %v4109
        %v4198 = vpop.f32.mrf.mxu0
        %v4199 = vadd.f32 0.0, %v4198
        %4200 = vmatmul.f32.gmra.mxu0 %v4110
        %v4201 = vpop.f32.mrf.mxu0
        %v4202 = vadd.f32 0.0, %v4201
        %4203 = vmatmul.f32.gmra.mxu0 %v4111
        %v4204 = vpop.f32.mrf.mxu0
        %v4205 = vadd.f32 0.0, %v4204
        %4206 = vmatmul.f32.gmra.mxu0 %v4112
        %v4207 = vpop.f32.mrf.mxu0
        %v4208 = vadd.f32 0.0, %v4207
        %4209 = vmatmul.f32.gmra.mxu0 %v4113
        %v4210 = vpop.f32.mrf.mxu0
        %v4211 = vadd.f32 0.0, %v4210
        %4212 = vmatmul.f32.gmra.mxu0 %v4114
        %v4213 = vpop.f32.mrf.mxu0
        %v4214 = vadd.f32 0.0, %v4213
        %4215 = vmatmul.f32.gmra.mxu0 %v4115
        %v4216 = vpop.f32.mrf.mxu0
        %v4217 = vadd.f32 0.0, %v4216
        %4218 = vmatmul.f32.gmra.mxu0 %v4116
        %v4219 = vpop.f32.mrf.mxu0
        %v4220 = vadd.f32 0.0, %v4219
        %4221 = vmatmul.f32.gmra.mxu0 %v4117
        %v4222 = vpop.f32.mrf.mxu0
        %v4223 = vadd.f32 0.0, %v4222
        %4224 = vmatmul.f32.gmra.mxu0 %v4118
        %v4225 = vpop.f32.mrf.mxu0
        %v4226 = vadd.f32 0.0, %v4225
        %4227 = vmatmul.f32.gmra.mxu0 %v4119
        %v4228 = vpop.f32.mrf.mxu0
        %v4229 = vadd.f32 0.0, %v4228
        %4230 = vmatmul.f32.gmra.mxu0 %v4120
        %v4231 = vpop.f32.mrf.mxu0
        %v4232 = vadd.f32 0.0, %v4231
        %4233 = vmatmul.f32.gmra.mxu0 %v4121
        %v4234 = vpop.f32.mrf.mxu0
        %v4235 = vadd.f32 0.0, %v4234
        %4236 = vmatmul.f32.gmra.mxu0 %v4122
        %v4237 = vpop.f32.mrf.mxu0
        %v4238 = vadd.f32 0.0, %v4237
        %4239 = vmatmul.f32.gmra.mxu0 %v4123
        %v4240 = vpop.f32.mrf.mxu0
        %v4241 = vadd.f32 0.0, %v4240
        %4242 = vmatmul.f32.gmra.mxu0 %v4124
        %v4243 = vpop.f32.mrf.mxu0
        %v4244 = vadd.f32 0.0, %v4243
        %4245 = vmatmul.f32.gmra.mxu0 %v4125
        %v4246 = vpop.f32.mrf.mxu0
        %v4247 = vadd.f32 0.0, %v4246
        %4248 = vmatmul.f32.gmra.mxu0 %v4126
        %v4249 = vpop.f32.mrf.mxu0
        %v4250 = vadd.f32 0.0, %v4249
        %4251 = vmatmul.f32.gmra.mxu0 %v4127
        %v4252 = vpop.f32.mrf.mxu0
        %v4253 = vadd.f32 0.0, %v4252
        %4254 = vmatmul.f32.gmra.mxu0 %v4128
        %v4255 = vpop.f32.mrf.mxu0
        %v4256 = vadd.f32 0.0, %v4255
        %4257 = vdwg.mxu0
        %v4258 = vadd.f32 %v3223, %v4163
        %v4259 = vadd.f32 %v3224, %v4166
        %v4260 = vadd.f32 %v3225, %v4169
        %v4261 = vadd.f32 %v3226, %v4172
        %v4262 = vadd.f32 %v3227, %v4175
        %v4263 = vadd.f32 %v3228, %v4178
        %v4264 = vadd.f32 %v3229, %v4181
        %v4265 = vadd.f32 %v3230, %v4184
        %v4266 = vadd.f32 %v3231, %v4187
        %v4267 = vadd.f32 %v3232, %v4190
        %v4268 = vadd.f32 %v3233, %v4193
        %v4269 = vadd.f32 %v3234, %v4196
        %v4270 = vadd.f32 %v3235, %v4199
        %v4271 = vadd.f32 %v3236, %v4202
        %v4272 = vadd.f32 %v3237, %v4205
        %v4273 = vadd.f32 %v3238, %v4208
        %v4274 = vadd.f32 %v3239, %v4211
        %v4275 = vadd.f32 %v3240, %v4214
        %v4276 = vadd.f32 %v3241, %v4217
        %v4277 = vadd.f32 %v3242, %v4220
        %v4278 = vadd.f32 %v3243, %v4223
        %v4279 = vadd.f32 %v3244, %v4226
        %v4280 = vadd.f32 %v3245, %v4229
        %v4281 = vadd.f32 %v3246, %v4232
        %v4282 = vadd.f32 %v3247, %v4235
        %v4283 = vadd.f32 %v3248, %v4238
        %v4284 = vadd.f32 %v3249, %v4241
        %v4285 = vadd.f32 %v3250, %v4244
        %v4286 = vadd.f32 %v3251, %v4247
        %v4287 = vadd.f32 %v3252, %v4250
        %v4288 = vadd.f32 %v3253, %v4253
        %v4289 = vadd.f32 %v3254, %v4256
        %v4290 = vld [vmem:[%s4] sm:$0x1]
        %v4292 = vperm.slane %v4290, 0
        %v4294 = vadd.f32 %v4258, %v4292
        %v4295 = vadd.f32 %v4259, %v4292
        %v4296 = vadd.f32 %v4260, %v4292
        %v4297 = vadd.f32 %v4261, %v4292
        %v4298 = vadd.f32 %v4262, %v4292
        %v4299 = vadd.f32 %v4263, %v4292
        %v4300 = vadd.f32 %v4264, %v4292
        %v4301 = vadd.f32 %v4265, %v4292
        %v4302 = vadd.f32 %v4266, %v4292
        %v4303 = vadd.f32 %v4267, %v4292
        %v4304 = vadd.f32 %v4268, %v4292
        %v4305 = vadd.f32 %v4269, %v4292
        %v4306 = vadd.f32 %v4270, %v4292
        %v4307 = vadd.f32 %v4271, %v4292
        %v4308 = vadd.f32 %v4272, %v4292
        %v4309 = vadd.f32 %v4273, %v4292
        %v4310 = vadd.f32 %v4274, %v4292
        %v4311 = vadd.f32 %v4275, %v4292
        %v4312 = vadd.f32 %v4276, %v4292
        %v4313 = vadd.f32 %v4277, %v4292
        %v4314 = vadd.f32 %v4278, %v4292
        %v4315 = vadd.f32 %v4279, %v4292
        %v4316 = vadd.f32 %v4280, %v4292
        %v4317 = vadd.f32 %v4281, %v4292
        %v4318 = vadd.f32 %v4282, %v4292
        %v4319 = vadd.f32 %v4283, %v4292
        %v4320 = vadd.f32 %v4284, %v4292
        %v4321 = vadd.f32 %v4285, %v4292
        %v4322 = vadd.f32 %v4286, %v4292
        %v4323 = vadd.f32 %v4287, %v4292
        %v4324 = vadd.f32 %v4288, %v4292
        %v4325 = vadd.f32 %v4289, %v4292
        %v4326 = vxor.u32 %v4294, 2147483648
        %v4327 = vxor.u32 %v4295, 2147483648
        %v4328 = vxor.u32 %v4296, 2147483648
        %v4329 = vxor.u32 %v4297, 2147483648
        %v4330 = vxor.u32 %v4298, 2147483648
        %v4331 = vxor.u32 %v4299, 2147483648
        %v4332 = vxor.u32 %v4300, 2147483648
        %v4333 = vxor.u32 %v4301, 2147483648
        %v4334 = vxor.u32 %v4302, 2147483648
        %v4335 = vxor.u32 %v4303, 2147483648
        %v4336 = vxor.u32 %v4304, 2147483648
        %v4337 = vxor.u32 %v4305, 2147483648
        %v4338 = vxor.u32 %v4306, 2147483648
        %v4339 = vxor.u32 %v4307, 2147483648
        %v4340 = vxor.u32 %v4308, 2147483648
        %v4341 = vxor.u32 %v4309, 2147483648
        %v4342 = vxor.u32 %v4310, 2147483648
        %v4343 = vxor.u32 %v4311, 2147483648
        %v4344 = vxor.u32 %v4312, 2147483648
        %v4345 = vxor.u32 %v4313, 2147483648
        %v4346 = vxor.u32 %v4314, 2147483648
        %v4347 = vxor.u32 %v4315, 2147483648
        %v4348 = vxor.u32 %v4316, 2147483648
        %v4349 = vxor.u32 %v4317, 2147483648
        %v4350 = vxor.u32 %v4318, 2147483648
        %v4351 = vxor.u32 %v4319, 2147483648
        %v4352 = vxor.u32 %v4320, 2147483648
        %v4353 = vxor.u32 %v4321, 2147483648
        %v4354 = vxor.u32 %v4322, 2147483648
        %v4355 = vxor.u32 %v4323, 2147483648
        %v4356 = vxor.u32 %v4324, 2147483648
        %v4357 = vxor.u32 %v4325, 2147483648
        %v4358 = vmul.f32 %v4326, 1.442695
        %v4359 = vpow.pop %v4358
        %v4360 = vmul.f32 %v4327, 1.442695
        %v4361 = vpow.pop %v4360
        %v4362 = vmul.f32 %v4328, 1.442695
        %v4363 = vpow.pop %v4362
        %v4364 = vmul.f32 %v4329, 1.442695
        %v4365 = vpow.pop %v4364
        %v4366 = vmul.f32 %v4330, 1.442695
        %v4367 = vpow.pop %v4366
        %v4368 = vmul.f32 %v4331, 1.442695
        %v4369 = vpow.pop %v4368
        %v4370 = vmul.f32 %v4332, 1.442695
        %v4371 = vpow.pop %v4370
        %v4372 = vmul.f32 %v4333, 1.442695
        %v4373 = vpow.pop %v4372
        %v4374 = vmul.f32 %v4334, 1.442695
        %v4375 = vpow.pop %v4374
        %v4376 = vmul.f32 %v4335, 1.442695
        %v4377 = vpow.pop %v4376
        %v4378 = vmul.f32 %v4336, 1.442695
        %v4379 = vpow.pop %v4378
        %v4380 = vmul.f32 %v4337, 1.442695
        %v4381 = vpow.pop %v4380
        %v4382 = vmul.f32 %v4338, 1.442695
        %v4383 = vpow.pop %v4382
        %v4384 = vmul.f32 %v4339, 1.442695
        %v4385 = vpow.pop %v4384
        %v4386 = vmul.f32 %v4340, 1.442695
        %v4387 = vpow.pop %v4386
        %v4388 = vmul.f32 %v4341, 1.442695
        %v4389 = vpow.pop %v4388
        %v4390 = vmul.f32 %v4342, 1.442695
        %v4391 = vpow.pop %v4390
        %v4392 = vmul.f32 %v4343, 1.442695
        %v4393 = vpow.pop %v4392
        %v4394 = vmul.f32 %v4344, 1.442695
        %v4395 = vpow.pop %v4394
        %v4396 = vmul.f32 %v4345, 1.442695
        %v4397 = vpow.pop %v4396
        %v4398 = vmul.f32 %v4346, 1.442695
        %v4399 = vpow.pop %v4398
        %v4400 = vmul.f32 %v4347, 1.442695
        %v4401 = vpow.pop %v4400
        %v4402 = vmul.f32 %v4348, 1.442695
        %v4403 = vpow.pop %v4402
        %v4404 = vmul.f32 %v4349, 1.442695
        %v4405 = vpow.pop %v4404
        %v4406 = vmul.f32 %v4350, 1.442695
        %v4407 = vpow.pop %v4406
        %v4408 = vmul.f32 %v4351, 1.442695
        %v4409 = vpow.pop %v4408
        %v4410 = vmul.f32 %v4352, 1.442695
        %v4411 = vpow.pop %v4410
        %v4412 = vmul.f32 %v4353, 1.442695
        %v4413 = vpow.pop %v4412
        %v4414 = vmul.f32 %v4354, 1.442695
        %v4415 = vpow.pop %v4414
        %v4416 = vmul.f32 %v4355, 1.442695
        %v4417 = vpow.pop %v4416
        %v4418 = vmul.f32 %v4356, 1.442695
        %v4419 = vpow.pop %v4418
        %v4420 = vmul.f32 %v4357, 1.442695
        %v4421 = vpow.pop %v4420
        %v4422 = vadd.f32 %v4359, 1.0
        %v4423 = vadd.f32 %v4361, 1.0
        %v4424 = vadd.f32 %v4363, 1.0
        %v4425 = vadd.f32 %v4365, 1.0
        %v4426 = vadd.f32 %v4367, 1.0
        %v4427 = vadd.f32 %v4369, 1.0
        %v4428 = vadd.f32 %v4371, 1.0
        %v4429 = vadd.f32 %v4373, 1.0
        %v4430 = vadd.f32 %v4375, 1.0
        %v4431 = vadd.f32 %v4377, 1.0
        %v4432 = vadd.f32 %v4379, 1.0
        %v4433 = vadd.f32 %v4381, 1.0
        %v4434 = vadd.f32 %v4383, 1.0
        %v4435 = vadd.f32 %v4385, 1.0
        %v4436 = vadd.f32 %v4387, 1.0
        %v4437 = vadd.f32 %v4389, 1.0
        %v4438 = vadd.f32 %v4391, 1.0
        %v4439 = vadd.f32 %v4393, 1.0
        %v4440 = vadd.f32 %v4395, 1.0
        %v4441 = vadd.f32 %v4397, 1.0
        %v4442 = vadd.f32 %v4399, 1.0
        %v4443 = vadd.f32 %v4401, 1.0
        %v4444 = vadd.f32 %v4403, 1.0
        %v4445 = vadd.f32 %v4405, 1.0
        %v4446 = vadd.f32 %v4407, 1.0
        %v4447 = vadd.f32 %v4409, 1.0
        %v4448 = vadd.f32 %v4411, 1.0
        %v4449 = vadd.f32 %v4413, 1.0
        %v4450 = vadd.f32 %v4415, 1.0
        %v4451 = vadd.f32 %v4417, 1.0
        %v4452 = vadd.f32 %v4419, 1.0
        %v4453 = vadd.f32 %v4421, 1.0
        %v4454 = vrcp.pop %v4422
        %v4455 = vmul.f32 %v4422, %v4454
        %v4456 = vsub.f32 1.0, %v4455
        %v4457 = vmul.f32 %v4454, %v4456
        %v4458 = vadd.f32 %v4454, %v4457
        %vm4459 = vweird.f32 %v4422
        %vm4460 = vweird.f32 %v4454
        %vm4461 = vmor %vm4459, %vm4460
        %v4462 = vsel %vm4461, %v4454, %v4458
        %v4463 = vand.u32 2147483647, %v4422
        %vm4464 = vcmp.eq.f32.partialorder %v4463, 8.507059e+37
        %v4465 = vand.u32 %v4422, 2147483648
        %v4466 = vor.u32 1.1754944e-38, %v4465
        %v4467 = vsel %vm4464, %v4466, %v4462
        %v4468 = vmul.f32 1.0, %v4467
        %v4469 = vrcp.pop %v4423
        %v4470 = vmul.f32 %v4423, %v4469
        %v4471 = vsub.f32 1.0, %v4470
        %v4472 = vmul.f32 %v4469, %v4471
        %v4473 = vadd.f32 %v4469, %v4472
        %vm4474 = vweird.f32 %v4423
        %vm4475 = vweird.f32 %v4469
        %vm4476 = vmor %vm4474, %vm4475
        %v4477 = vsel %vm4476, %v4469, %v4473
        %v4478 = vand.u32 2147483647, %v4423
        %vm4479 = vcmp.eq.f32.partialorder %v4478, 8.507059e+37
        %v4480 = vand.u32 %v4423, 2147483648
        %v4481 = vor.u32 1.1754944e-38, %v4480
        %v4482 = vsel %vm4479, %v4481, %v4477
        %v4483 = vmul.f32 1.0, %v4482
        %v4484 = vrcp.pop %v4424
        %v4485 = vmul.f32 %v4424, %v4484
        %v4486 = vsub.f32 1.0, %v4485
        %v4487 = vmul.f32 %v4484, %v4486
        %v4488 = vadd.f32 %v4484, %v4487
        %vm4489 = vweird.f32 %v4424
        %vm4490 = vweird.f32 %v4484
        %vm4491 = vmor %vm4489, %vm4490
        %v4492 = vsel %vm4491, %v4484, %v4488
        %v4493 = vand.u32 2147483647, %v4424
        %vm4494 = vcmp.eq.f32.partialorder %v4493, 8.507059e+37
        %v4495 = vand.u32 %v4424, 2147483648
        %v4496 = vor.u32 1.1754944e-38, %v4495
        %v4497 = vsel %vm4494, %v4496, %v4492
        %v4498 = vmul.f32 1.0, %v4497
        %v4499 = vrcp.pop %v4425
        %v4500 = vmul.f32 %v4425, %v4499
        %v4501 = vsub.f32 1.0, %v4500
        %v4502 = vmul.f32 %v4499, %v4501
        %v4503 = vadd.f32 %v4499, %v4502
        %vm4504 = vweird.f32 %v4425
        %vm4505 = vweird.f32 %v4499
        %vm4506 = vmor %vm4504, %vm4505
        %v4507 = vsel %vm4506, %v4499, %v4503
        %v4508 = vand.u32 2147483647, %v4425
        %vm4509 = vcmp.eq.f32.partialorder %v4508, 8.507059e+37
        %v4510 = vand.u32 %v4425, 2147483648
        %v4511 = vor.u32 1.1754944e-38, %v4510
        %v4512 = vsel %vm4509, %v4511, %v4507
        %v4513 = vmul.f32 1.0, %v4512
        %v4514 = vrcp.pop %v4426
        %v4515 = vmul.f32 %v4426, %v4514
        %v4516 = vsub.f32 1.0, %v4515
        %v4517 = vmul.f32 %v4514, %v4516
        %v4518 = vadd.f32 %v4514, %v4517
        %vm4519 = vweird.f32 %v4426
        %vm4520 = vweird.f32 %v4514
        %vm4521 = vmor %vm4519, %vm4520
        %v4522 = vsel %vm4521, %v4514, %v4518
        %v4523 = vand.u32 2147483647, %v4426
        %vm4524 = vcmp.eq.f32.partialorder %v4523, 8.507059e+37
        %v4525 = vand.u32 %v4426, 2147483648
        %v4526 = vor.u32 1.1754944e-38, %v4525
        %v4527 = vsel %vm4524, %v4526, %v4522
        %v4528 = vmul.f32 1.0, %v4527
        %v4529 = vrcp.pop %v4427
        %v4530 = vmul.f32 %v4427, %v4529
        %v4531 = vsub.f32 1.0, %v4530
        %v4532 = vmul.f32 %v4529, %v4531
        %v4533 = vadd.f32 %v4529, %v4532
        %vm4534 = vweird.f32 %v4427
        %vm4535 = vweird.f32 %v4529
        %vm4536 = vmor %vm4534, %vm4535
        %v4537 = vsel %vm4536, %v4529, %v4533
        %v4538 = vand.u32 2147483647, %v4427
        %vm4539 = vcmp.eq.f32.partialorder %v4538, 8.507059e+37
        %v4540 = vand.u32 %v4427, 2147483648
        %v4541 = vor.u32 1.1754944e-38, %v4540
        %v4542 = vsel %vm4539, %v4541, %v4537
        %v4543 = vmul.f32 1.0, %v4542
        %v4544 = vrcp.pop %v4428
        %v4545 = vmul.f32 %v4428, %v4544
        %v4546 = vsub.f32 1.0, %v4545
        %v4547 = vmul.f32 %v4544, %v4546
        %v4548 = vadd.f32 %v4544, %v4547
        %vm4549 = vweird.f32 %v4428
        %vm4550 = vweird.f32 %v4544
        %vm4551 = vmor %vm4549, %vm4550
        %v4552 = vsel %vm4551, %v4544, %v4548
        %v4553 = vand.u32 2147483647, %v4428
        %vm4554 = vcmp.eq.f32.partialorder %v4553, 8.507059e+37
        %v4555 = vand.u32 %v4428, 2147483648
        %v4556 = vor.u32 1.1754944e-38, %v4555
        %v4557 = vsel %vm4554, %v4556, %v4552
        %v4558 = vmul.f32 1.0, %v4557
        %v4559 = vrcp.pop %v4429
        %v4560 = vmul.f32 %v4429, %v4559
        %v4561 = vsub.f32 1.0, %v4560
        %v4562 = vmul.f32 %v4559, %v4561
        %v4563 = vadd.f32 %v4559, %v4562
        %vm4564 = vweird.f32 %v4429
        %vm4565 = vweird.f32 %v4559
        %vm4566 = vmor %vm4564, %vm4565
        %v4567 = vsel %vm4566, %v4559, %v4563
        %v4568 = vand.u32 2147483647, %v4429
        %vm4569 = vcmp.eq.f32.partialorder %v4568, 8.507059e+37
        %v4570 = vand.u32 %v4429, 2147483648
        %v4571 = vor.u32 1.1754944e-38, %v4570
        %v4572 = vsel %vm4569, %v4571, %v4567
        %v4573 = vmul.f32 1.0, %v4572
        %v4574 = vrcp.pop %v4430
        %v4575 = vmul.f32 %v4430, %v4574
        %v4576 = vsub.f32 1.0, %v4575
        %v4577 = vmul.f32 %v4574, %v4576
        %v4578 = vadd.f32 %v4574, %v4577
        %vm4579 = vweird.f32 %v4430
        %vm4580 = vweird.f32 %v4574
        %vm4581 = vmor %vm4579, %vm4580
        %v4582 = vsel %vm4581, %v4574, %v4578
        %v4583 = vand.u32 2147483647, %v4430
        %vm4584 = vcmp.eq.f32.partialorder %v4583, 8.507059e+37
        %v4585 = vand.u32 %v4430, 2147483648
        %v4586 = vor.u32 1.1754944e-38, %v4585
        %v4587 = vsel %vm4584, %v4586, %v4582
        %v4588 = vmul.f32 1.0, %v4587
        %v4589 = vrcp.pop %v4431
        %v4590 = vmul.f32 %v4431, %v4589
        %v4591 = vsub.f32 1.0, %v4590
        %v4592 = vmul.f32 %v4589, %v4591
        %v4593 = vadd.f32 %v4589, %v4592
        %vm4594 = vweird.f32 %v4431
        %vm4595 = vweird.f32 %v4589
        %vm4596 = vmor %vm4594, %vm4595
        %v4597 = vsel %vm4596, %v4589, %v4593
        %v4598 = vand.u32 2147483647, %v4431
        %vm4599 = vcmp.eq.f32.partialorder %v4598, 8.507059e+37
        %v4600 = vand.u32 %v4431, 2147483648
        %v4601 = vor.u32 1.1754944e-38, %v4600
        %v4602 = vsel %vm4599, %v4601, %v4597
        %v4603 = vmul.f32 1.0, %v4602
        %v4604 = vrcp.pop %v4432
        %v4605 = vmul.f32 %v4432, %v4604
        %v4606 = vsub.f32 1.0, %v4605
        %v4607 = vmul.f32 %v4604, %v4606
        %v4608 = vadd.f32 %v4604, %v4607
        %vm4609 = vweird.f32 %v4432
        %vm4610 = vweird.f32 %v4604
        %vm4611 = vmor %vm4609, %vm4610
        %v4612 = vsel %vm4611, %v4604, %v4608
        %v4613 = vand.u32 2147483647, %v4432
        %vm4614 = vcmp.eq.f32.partialorder %v4613, 8.507059e+37
        %v4615 = vand.u32 %v4432, 2147483648
        %v4616 = vor.u32 1.1754944e-38, %v4615
        %v4617 = vsel %vm4614, %v4616, %v4612
        %v4618 = vmul.f32 1.0, %v4617
        %v4619 = vrcp.pop %v4433
        %v4620 = vmul.f32 %v4433, %v4619
        %v4621 = vsub.f32 1.0, %v4620
        %v4622 = vmul.f32 %v4619, %v4621
        %v4623 = vadd.f32 %v4619, %v4622
        %vm4624 = vweird.f32 %v4433
        %vm4625 = vweird.f32 %v4619
        %vm4626 = vmor %vm4624, %vm4625
        %v4627 = vsel %vm4626, %v4619, %v4623
        %v4628 = vand.u32 2147483647, %v4433
        %vm4629 = vcmp.eq.f32.partialorder %v4628, 8.507059e+37
        %v4630 = vand.u32 %v4433, 2147483648
        %v4631 = vor.u32 1.1754944e-38, %v4630
        %v4632 = vsel %vm4629, %v4631, %v4627
        %v4633 = vmul.f32 1.0, %v4632
        %v4634 = vrcp.pop %v4434
        %v4635 = vmul.f32 %v4434, %v4634
        %v4636 = vsub.f32 1.0, %v4635
        %v4637 = vmul.f32 %v4634, %v4636
        %v4638 = vadd.f32 %v4634, %v4637
        %vm4639 = vweird.f32 %v4434
        %vm4640 = vweird.f32 %v4634
        %vm4641 = vmor %vm4639, %vm4640
        %v4642 = vsel %vm4641, %v4634, %v4638
        %v4643 = vand.u32 2147483647, %v4434
        %vm4644 = vcmp.eq.f32.partialorder %v4643, 8.507059e+37
        %v4645 = vand.u32 %v4434, 2147483648
        %v4646 = vor.u32 1.1754944e-38, %v4645
        %v4647 = vsel %vm4644, %v4646, %v4642
        %v4648 = vmul.f32 1.0, %v4647
        %v4649 = vrcp.pop %v4435
        %v4650 = vmul.f32 %v4435, %v4649
        %v4651 = vsub.f32 1.0, %v4650
        %v4652 = vmul.f32 %v4649, %v4651
        %v4653 = vadd.f32 %v4649, %v4652
        %vm4654 = vweird.f32 %v4435
        %vm4655 = vweird.f32 %v4649
        %vm4656 = vmor %vm4654, %vm4655
        %v4657 = vsel %vm4656, %v4649, %v4653
        %v4658 = vand.u32 2147483647, %v4435
        %vm4659 = vcmp.eq.f32.partialorder %v4658, 8.507059e+37
        %v4660 = vand.u32 %v4435, 2147483648
        %v4661 = vor.u32 1.1754944e-38, %v4660
        %v4662 = vsel %vm4659, %v4661, %v4657
        %v4663 = vmul.f32 1.0, %v4662
        %v4664 = vrcp.pop %v4436
        %v4665 = vmul.f32 %v4436, %v4664
        %v4666 = vsub.f32 1.0, %v4665
        %v4667 = vmul.f32 %v4664, %v4666
        %v4668 = vadd.f32 %v4664, %v4667
        %vm4669 = vweird.f32 %v4436
        %vm4670 = vweird.f32 %v4664
        %vm4671 = vmor %vm4669, %vm4670
        %v4672 = vsel %vm4671, %v4664, %v4668
        %v4673 = vand.u32 2147483647, %v4436
        %vm4674 = vcmp.eq.f32.partialorder %v4673, 8.507059e+37
        %v4675 = vand.u32 %v4436, 2147483648
        %v4676 = vor.u32 1.1754944e-38, %v4675
        %v4677 = vsel %vm4674, %v4676, %v4672
        %v4678 = vmul.f32 1.0, %v4677
        %v4679 = vrcp.pop %v4437
        %v4680 = vmul.f32 %v4437, %v4679
        %v4681 = vsub.f32 1.0, %v4680
        %v4682 = vmul.f32 %v4679, %v4681
        %v4683 = vadd.f32 %v4679, %v4682
        %vm4684 = vweird.f32 %v4437
        %vm4685 = vweird.f32 %v4679
        %vm4686 = vmor %vm4684, %vm4685
        %v4687 = vsel %vm4686, %v4679, %v4683
        %v4688 = vand.u32 2147483647, %v4437
        %vm4689 = vcmp.eq.f32.partialorder %v4688, 8.507059e+37
        %v4690 = vand.u32 %v4437, 2147483648
        %v4691 = vor.u32 1.1754944e-38, %v4690
        %v4692 = vsel %vm4689, %v4691, %v4687
        %v4693 = vmul.f32 1.0, %v4692
        %v4694 = vrcp.pop %v4438
        %v4695 = vmul.f32 %v4438, %v4694
        %v4696 = vsub.f32 1.0, %v4695
        %v4697 = vmul.f32 %v4694, %v4696
        %v4698 = vadd.f32 %v4694, %v4697
        %vm4699 = vweird.f32 %v4438
        %vm4700 = vweird.f32 %v4694
        %vm4701 = vmor %vm4699, %vm4700
        %v4702 = vsel %vm4701, %v4694, %v4698
        %v4703 = vand.u32 2147483647, %v4438
        %vm4704 = vcmp.eq.f32.partialorder %v4703, 8.507059e+37
        %v4705 = vand.u32 %v4438, 2147483648
        %v4706 = vor.u32 1.1754944e-38, %v4705
        %v4707 = vsel %vm4704, %v4706, %v4702
        %v4708 = vmul.f32 1.0, %v4707
        %v4709 = vrcp.pop %v4439
        %v4710 = vmul.f32 %v4439, %v4709
        %v4711 = vsub.f32 1.0, %v4710
        %v4712 = vmul.f32 %v4709, %v4711
        %v4713 = vadd.f32 %v4709, %v4712
        %vm4714 = vweird.f32 %v4439
        %vm4715 = vweird.f32 %v4709
        %vm4716 = vmor %vm4714, %vm4715
        %v4717 = vsel %vm4716, %v4709, %v4713
        %v4718 = vand.u32 2147483647, %v4439
        %vm4719 = vcmp.eq.f32.partialorder %v4718, 8.507059e+37
        %v4720 = vand.u32 %v4439, 2147483648
        %v4721 = vor.u32 1.1754944e-38, %v4720
        %v4722 = vsel %vm4719, %v4721, %v4717
        %v4723 = vmul.f32 1.0, %v4722
        %v4724 = vrcp.pop %v4440
        %v4725 = vmul.f32 %v4440, %v4724
        %v4726 = vsub.f32 1.0, %v4725
        %v4727 = vmul.f32 %v4724, %v4726
        %v4728 = vadd.f32 %v4724, %v4727
        %vm4729 = vweird.f32 %v4440
        %vm4730 = vweird.f32 %v4724
        %vm4731 = vmor %vm4729, %vm4730
        %v4732 = vsel %vm4731, %v4724, %v4728
        %v4733 = vand.u32 2147483647, %v4440
        %vm4734 = vcmp.eq.f32.partialorder %v4733, 8.507059e+37
        %v4735 = vand.u32 %v4440, 2147483648
        %v4736 = vor.u32 1.1754944e-38, %v4735
        %v4737 = vsel %vm4734, %v4736, %v4732
        %v4738 = vmul.f32 1.0, %v4737
        %v4739 = vrcp.pop %v4441
        %v4740 = vmul.f32 %v4441, %v4739
        %v4741 = vsub.f32 1.0, %v4740
        %v4742 = vmul.f32 %v4739, %v4741
        %v4743 = vadd.f32 %v4739, %v4742
        %vm4744 = vweird.f32 %v4441
        %vm4745 = vweird.f32 %v4739
        %vm4746 = vmor %vm4744, %vm4745
        %v4747 = vsel %vm4746, %v4739, %v4743
        %v4748 = vand.u32 2147483647, %v4441
        %vm4749 = vcmp.eq.f32.partialorder %v4748, 8.507059e+37
        %v4750 = vand.u32 %v4441, 2147483648
        %v4751 = vor.u32 1.1754944e-38, %v4750
        %v4752 = vsel %vm4749, %v4751, %v4747
        %v4753 = vmul.f32 1.0, %v4752
        %v4754 = vrcp.pop %v4442
        %v4755 = vmul.f32 %v4442, %v4754
        %v4756 = vsub.f32 1.0, %v4755
        %v4757 = vmul.f32 %v4754, %v4756
        %v4758 = vadd.f32 %v4754, %v4757
        %vm4759 = vweird.f32 %v4442
        %vm4760 = vweird.f32 %v4754
        %vm4761 = vmor %vm4759, %vm4760
        %v4762 = vsel %vm4761, %v4754, %v4758
        %v4763 = vand.u32 2147483647, %v4442
        %vm4764 = vcmp.eq.f32.partialorder %v4763, 8.507059e+37
        %v4765 = vand.u32 %v4442, 2147483648
        %v4766 = vor.u32 1.1754944e-38, %v4765
        %v4767 = vsel %vm4764, %v4766, %v4762
        %v4768 = vmul.f32 1.0, %v4767
        %v4769 = vrcp.pop %v4443
        %v4770 = vmul.f32 %v4443, %v4769
        %v4771 = vsub.f32 1.0, %v4770
        %v4772 = vmul.f32 %v4769, %v4771
        %v4773 = vadd.f32 %v4769, %v4772
        %vm4774 = vweird.f32 %v4443
        %vm4775 = vweird.f32 %v4769
        %vm4776 = vmor %vm4774, %vm4775
        %v4777 = vsel %vm4776, %v4769, %v4773
        %v4778 = vand.u32 2147483647, %v4443
        %vm4779 = vcmp.eq.f32.partialorder %v4778, 8.507059e+37
        %v4780 = vand.u32 %v4443, 2147483648
        %v4781 = vor.u32 1.1754944e-38, %v4780
        %v4782 = vsel %vm4779, %v4781, %v4777
        %v4783 = vmul.f32 1.0, %v4782
        %v4784 = vrcp.pop %v4444
        %v4785 = vmul.f32 %v4444, %v4784
        %v4786 = vsub.f32 1.0, %v4785
        %v4787 = vmul.f32 %v4784, %v4786
        %v4788 = vadd.f32 %v4784, %v4787
        %vm4789 = vweird.f32 %v4444
        %vm4790 = vweird.f32 %v4784
        %vm4791 = vmor %vm4789, %vm4790
        %v4792 = vsel %vm4791, %v4784, %v4788
        %v4793 = vand.u32 2147483647, %v4444
        %vm4794 = vcmp.eq.f32.partialorder %v4793, 8.507059e+37
        %v4795 = vand.u32 %v4444, 2147483648
        %v4796 = vor.u32 1.1754944e-38, %v4795
        %v4797 = vsel %vm4794, %v4796, %v4792
        %v4798 = vmul.f32 1.0, %v4797
        %v4799 = vrcp.pop %v4445
        %v4800 = vmul.f32 %v4445, %v4799
        %v4801 = vsub.f32 1.0, %v4800
        %v4802 = vmul.f32 %v4799, %v4801
        %v4803 = vadd.f32 %v4799, %v4802
        %vm4804 = vweird.f32 %v4445
        %vm4805 = vweird.f32 %v4799
        %vm4806 = vmor %vm4804, %vm4805
        %v4807 = vsel %vm4806, %v4799, %v4803
        %v4808 = vand.u32 2147483647, %v4445
        %vm4809 = vcmp.eq.f32.partialorder %v4808, 8.507059e+37
        %v4810 = vand.u32 %v4445, 2147483648
        %v4811 = vor.u32 1.1754944e-38, %v4810
        %v4812 = vsel %vm4809, %v4811, %v4807
        %v4813 = vmul.f32 1.0, %v4812
        %v4814 = vrcp.pop %v4446
        %v4815 = vmul.f32 %v4446, %v4814
        %v4816 = vsub.f32 1.0, %v4815
        %v4817 = vmul.f32 %v4814, %v4816
        %v4818 = vadd.f32 %v4814, %v4817
        %vm4819 = vweird.f32 %v4446
        %vm4820 = vweird.f32 %v4814
        %vm4821 = vmor %vm4819, %vm4820
        %v4822 = vsel %vm4821, %v4814, %v4818
        %v4823 = vand.u32 2147483647, %v4446
        %vm4824 = vcmp.eq.f32.partialorder %v4823, 8.507059e+37
        %v4825 = vand.u32 %v4446, 2147483648
        %v4826 = vor.u32 1.1754944e-38, %v4825
        %v4827 = vsel %vm4824, %v4826, %v4822
        %v4828 = vmul.f32 1.0, %v4827
        %v4829 = vrcp.pop %v4447
        %v4830 = vmul.f32 %v4447, %v4829
        %v4831 = vsub.f32 1.0, %v4830
        %v4832 = vmul.f32 %v4829, %v4831
        %v4833 = vadd.f32 %v4829, %v4832
        %vm4834 = vweird.f32 %v4447
        %vm4835 = vweird.f32 %v4829
        %vm4836 = vmor %vm4834, %vm4835
        %v4837 = vsel %vm4836, %v4829, %v4833
        %v4838 = vand.u32 2147483647, %v4447
        %vm4839 = vcmp.eq.f32.partialorder %v4838, 8.507059e+37
        %v4840 = vand.u32 %v4447, 2147483648
        %v4841 = vor.u32 1.1754944e-38, %v4840
        %v4842 = vsel %vm4839, %v4841, %v4837
        %v4843 = vmul.f32 1.0, %v4842
        %v4844 = vrcp.pop %v4448
        %v4845 = vmul.f32 %v4448, %v4844
        %v4846 = vsub.f32 1.0, %v4845
        %v4847 = vmul.f32 %v4844, %v4846
        %v4848 = vadd.f32 %v4844, %v4847
        %vm4849 = vweird.f32 %v4448
        %vm4850 = vweird.f32 %v4844
        %vm4851 = vmor %vm4849, %vm4850
        %v4852 = vsel %vm4851, %v4844, %v4848
        %v4853 = vand.u32 2147483647, %v4448
        %vm4854 = vcmp.eq.f32.partialorder %v4853, 8.507059e+37
        %v4855 = vand.u32 %v4448, 2147483648
        %v4856 = vor.u32 1.1754944e-38, %v4855
        %v4857 = vsel %vm4854, %v4856, %v4852
        %v4858 = vmul.f32 1.0, %v4857
        %v4859 = vrcp.pop %v4449
        %v4860 = vmul.f32 %v4449, %v4859
        %v4861 = vsub.f32 1.0, %v4860
        %v4862 = vmul.f32 %v4859, %v4861
        %v4863 = vadd.f32 %v4859, %v4862
        %vm4864 = vweird.f32 %v4449
        %vm4865 = vweird.f32 %v4859
        %vm4866 = vmor %vm4864, %vm4865
        %v4867 = vsel %vm4866, %v4859, %v4863
        %v4868 = vand.u32 2147483647, %v4449
        %vm4869 = vcmp.eq.f32.partialorder %v4868, 8.507059e+37
        %v4870 = vand.u32 %v4449, 2147483648
        %v4871 = vor.u32 1.1754944e-38, %v4870
        %v4872 = vsel %vm4869, %v4871, %v4867
        %v4873 = vmul.f32 1.0, %v4872
        %v4874 = vrcp.pop %v4450
        %v4875 = vmul.f32 %v4450, %v4874
        %v4876 = vsub.f32 1.0, %v4875
        %v4877 = vmul.f32 %v4874, %v4876
        %v4878 = vadd.f32 %v4874, %v4877
        %vm4879 = vweird.f32 %v4450
        %vm4880 = vweird.f32 %v4874
        %vm4881 = vmor %vm4879, %vm4880
        %v4882 = vsel %vm4881, %v4874, %v4878
        %v4883 = vand.u32 2147483647, %v4450
        %vm4884 = vcmp.eq.f32.partialorder %v4883, 8.507059e+37
        %v4885 = vand.u32 %v4450, 2147483648
        %v4886 = vor.u32 1.1754944e-38, %v4885
        %v4887 = vsel %vm4884, %v4886, %v4882
        %v4888 = vmul.f32 1.0, %v4887
        %v4889 = vrcp.pop %v4451
        %v4890 = vmul.f32 %v4451, %v4889
        %v4891 = vsub.f32 1.0, %v4890
        %v4892 = vmul.f32 %v4889, %v4891
        %v4893 = vadd.f32 %v4889, %v4892
        %vm4894 = vweird.f32 %v4451
        %vm4895 = vweird.f32 %v4889
        %vm4896 = vmor %vm4894, %vm4895
        %v4897 = vsel %vm4896, %v4889, %v4893
        %v4898 = vand.u32 2147483647, %v4451
        %vm4899 = vcmp.eq.f32.partialorder %v4898, 8.507059e+37
        %v4900 = vand.u32 %v4451, 2147483648
        %v4901 = vor.u32 1.1754944e-38, %v4900
        %v4902 = vsel %vm4899, %v4901, %v4897
        %v4903 = vmul.f32 1.0, %v4902
        %v4904 = vrcp.pop %v4452
        %v4905 = vmul.f32 %v4452, %v4904
        %v4906 = vsub.f32 1.0, %v4905
        %v4907 = vmul.f32 %v4904, %v4906
        %v4908 = vadd.f32 %v4904, %v4907
        %vm4909 = vweird.f32 %v4452
        %vm4910 = vweird.f32 %v4904
        %vm4911 = vmor %vm4909, %vm4910
        %v4912 = vsel %vm4911, %v4904, %v4908
        %v4913 = vand.u32 2147483647, %v4452
        %vm4914 = vcmp.eq.f32.partialorder %v4913, 8.507059e+37
        %v4915 = vand.u32 %v4452, 2147483648
        %v4916 = vor.u32 1.1754944e-38, %v4915
        %v4917 = vsel %vm4914, %v4916, %v4912
        %v4918 = vmul.f32 1.0, %v4917
        %v4919 = vrcp.pop %v4453
        %v4920 = vmul.f32 %v4453, %v4919
        %v4921 = vsub.f32 1.0, %v4920
        %v4922 = vmul.f32 %v4919, %v4921
        %v4923 = vadd.f32 %v4919, %v4922
        %vm4924 = vweird.f32 %v4453
        %vm4925 = vweird.f32 %v4919
        %vm4926 = vmor %vm4924, %vm4925
        %v4927 = vsel %vm4926, %v4919, %v4923
        %v4928 = vand.u32 2147483647, %v4453
        %vm4929 = vcmp.eq.f32.partialorder %v4928, 8.507059e+37
        %v4930 = vand.u32 %v4453, 2147483648
        %v4931 = vor.u32 1.1754944e-38, %v4930
        %v4932 = vsel %vm4929, %v4931, %v4927
        %v4933 = vmul.f32 1.0, %v4932
        %v4934 = vmul.f32 %v4294, %v4468
        %v4935 = vmul.f32 %v4295, %v4483
        %v4936 = vmul.f32 %v4296, %v4498
        %v4937 = vmul.f32 %v4297, %v4513
        %v4938 = vmul.f32 %v4298, %v4528
        %v4939 = vmul.f32 %v4299, %v4543
        %v4940 = vmul.f32 %v4300, %v4558
        %v4941 = vmul.f32 %v4301, %v4573
        %v4942 = vmul.f32 %v4302, %v4588
        %v4943 = vmul.f32 %v4303, %v4603
        %v4944 = vmul.f32 %v4304, %v4618
        %v4945 = vmul.f32 %v4305, %v4633
        %v4946 = vmul.f32 %v4306, %v4648
        %v4947 = vmul.f32 %v4307, %v4663
        %v4948 = vmul.f32 %v4308, %v4678
        %v4949 = vmul.f32 %v4309, %v4693
        %v4950 = vmul.f32 %v4310, %v4708
        %v4951 = vmul.f32 %v4311, %v4723
        %v4952 = vmul.f32 %v4312, %v4738
        %v4953 = vmul.f32 %v4313, %v4753
        %v4954 = vmul.f32 %v4314, %v4768
        %v4955 = vmul.f32 %v4315, %v4783
        %v4956 = vmul.f32 %v4316, %v4798
        %v4957 = vmul.f32 %v4317, %v4813
        %v4958 = vmul.f32 %v4318, %v4828
        %v4959 = vmul.f32 %v4319, %v4843
        %v4960 = vmul.f32 %v4320, %v4858
        %v4961 = vmul.f32 %v4321, %v4873
        %v4962 = vmul.f32 %v4322, %v4888
        %v4963 = vmul.f32 %v4323, %v4903
        %v4964 = vmul.f32 %v4324, %v4918
        %v4965 = vmul.f32 %v4325, %v4933
        %4966 = vst [vmem:[%s277] sm:$0xff] %v4934
        %4967 = vst [vmem:[%s277 + $0x8] sm:$0xff] %v4935
        %4968 = vst [vmem:[%s277 + $0x10] sm:$0xff] %v4936
        %4969 = vst [vmem:[%s277 + $0x18] sm:$0xff] %v4937
        %4970 = vst [vmem:[%s277 + $0x20] sm:$0xff] %v4938
        %4971 = vst [vmem:[%s277 + $0x28] sm:$0xff] %v4939
        %4972 = vst [vmem:[%s277 + $0x30] sm:$0xff] %v4940
        %4973 = vst [vmem:[%s277 + $0x38] sm:$0xff] %v4941
        %4974 = vst [vmem:[%s277 + $0x40] sm:$0xff] %v4942
        %4975 = vst [vmem:[%s277 + $0x48] sm:$0xff] %v4943
        %4976 = vst [vmem:[%s277 + $0x50] sm:$0xff] %v4944
        %4977 = vst [vmem:[%s277 + $0x58] sm:$0xff] %v4945
        %4978 = vst [vmem:[%s277 + $0x60] sm:$0xff] %v4946
        %4979 = vst [vmem:[%s277 + $0x68] sm:$0xff] %v4947
        %4980 = vst [vmem:[%s277 + $0x70] sm:$0xff] %v4948
        %4981 = vst [vmem:[%s277 + $0x78] sm:$0xff] %v4949
        %4982 = vst [vmem:[%s277 + $0x80] sm:$0xff] %v4950
        %4983 = vst [vmem:[%s277 + $0x88] sm:$0xff] %v4951
        %4984 = vst [vmem:[%s277 + $0x90] sm:$0xff] %v4952
        %4985 = vst [vmem:[%s277 + $0x98] sm:$0xff] %v4953
        %4986 = vst [vmem:[%s277 + $0xa0] sm:$0xff] %v4954
        %4987 = vst [vmem:[%s277 + $0xa8] sm:$0xff] %v4955
        %4988 = vst [vmem:[%s277 + $0xb0] sm:$0xff] %v4956
        %4989 = vst [vmem:[%s277 + $0xb8] sm:$0xff] %v4957
        %4990 = vst [vmem:[%s277 + $0xc0] sm:$0xff] %v4958
        %4991 = vst [vmem:[%s277 + $0xc8] sm:$0xff] %v4959
        %4992 = vst [vmem:[%s277 + $0xd0] sm:$0xff] %v4960
        %4993 = vst [vmem:[%s277 + $0xd8] sm:$0xff] %v4961
        %4994 = vst [vmem:[%s277 + $0xe0] sm:$0xff] %v4962
        %4995 = vst [vmem:[%s277 + $0xe8] sm:$0xff] %v4963
        %4996 = vst [vmem:[%s277 + $0xf0] sm:$0xff] %v4964
        %4997 = vst [vmem:[%s277 + $0xf8] sm:$0xff] %v4965
        %s4998 = sand.u32 %s141, 1
        %s4999 = scalar_lea.sflag [#allocation4], %s4998
        %s5000 = sand.u32 %s141, 1
        %s5001 = smul.addr %s5000, 256
        %s5002 = scalar_lea.vmem [#allocation8], %s5001
        // Predicated region
        $region53: #{tpu_custom_call.1} parent=39 // pred_check
          %p5003 = pneg %p151
        $region54: #{tpu_custom_call.1} parent=39 // pred_check_branch
          %5005 = sbr.rel (%p5003) target = $region56
        $region55: #{tpu_custom_call.1} parent=39 // pred_region
          %5007 = vsyncadd %s4999, 0
          %s5008 = smul.addr %s23, 32
          %s5009 = smul.addr %s5008, 8
          %s5010 = scalar_lea.hbm %s5, %s5009
          %s5011 = sshll.u32 %s5002, 4
          %s5012 = int_to_ptr.vmem [resolvable:$true] %s5011
          %s5013 = sshll.u32 %s5010, 4
          %s5014 = int_to_ptr.hbm [resolvable:$true] %s5013
          %5019 = dma.vmem_to_hbm [thread:$0]  %s5012, 4096, %s5014, %s4999, 128, 128, 8
        $region56: #{tpu_custom_call.1} parent=39 // pred_fallthru
          _
      $region40: #{tpu_custom_call.1} parent=5 // pred_fallthru
        _
      %p5020 = scmp.le.s32.totalorder 2, %s18
      // Predicated region
      $region57: #{tpu_custom_call.1} parent=5 // pred_check
        %p5021 = pneg %p5020
      $region58: #{tpu_custom_call.1} parent=5 // pred_check_branch
        %5023 = sbr.rel (%p5021) target = $region60
      $region59: #{tpu_custom_call.1} parent=5 // pred_region
        %s5024 = ssub.s32 %s18, 2
        // Predicated region
        $region61: #{tpu_custom_call.1} parent=59 // pred_check
          %p5025 = pneg %p157
        $region62: #{tpu_custom_call.1} parent=59 // pred_check_branch
          %5027 = sbr.rel (%p5025) target = $region64
        $region63: #{tpu_custom_call.1} parent=59 // pred_region
          %s5028 = sand.u32 %s142, 1
          %s5029 = scalar_lea.sflag [#allocation4], %s5028
          %s5030 = sand.u32 %s142, 1
          %s5031 = smul.addr %s5030, 256
          %s5032 = scalar_lea.vmem [#allocation8], %s5031
          %5034 = dma.done %s5029, 4096
        $region64: #{tpu_custom_call.1} parent=59 // pred_fallthru
          _
      $region60: #{tpu_custom_call.1} parent=5 // pred_fallthru
        _
    $region6: #{tpu_custom_call.1} parent=1 // loop_footer
      %s22 = sadd.s32 1, %s18
    $region7: #{tpu_custom_call.1} parent=1 // loop_footer_branch
      %17 = sbr.rel target = $region3
    $region8: #{tpu_custom_call.1} parent=1 // loop_exit
      _
    %5035 = vsyncpa [#allocation3], 1
    %s5036 = scalar_lea.sflag [#allocation3], 1
    %5037 = vsyncpa %s5036, 1
    %5038 = vsyncpa [#allocation6], 1
    %5039 = vsyncpa [#allocation4], 1
    %s5040 = scalar_lea.sflag [#allocation4], 1
    %5041 = vsyncpa %s5040, 1

</llo_original>
